<compile_context>
chip_gen: v7x
topology: tpu7x:2x2x1
jax: 0.10.0
libtpu: 0.0.40
codegen_flags: <defaults>
</compile_context>

<pallas_src>
import math
import functools

import jax
import jax.numpy as jnp
from jax import lax
from jax.experimental import pallas as pl
from jax.experimental.pallas import tpu as pltpu

LN_EPS = 1e-5
BN_EPS = 1e-5
OUT_DIM = 32          # self.fc = nn.Linear(model_dim, 32)
OUT_PAD = 128         # lane-dense store width (zero-padded, stripped outside)
FF_DIM = 2048         # PyTorch TransformerEncoderLayer default dim_feedforward
FF_CHUNK = 512        # lane-aligned chunk of the FFN hidden dimension


def _layer_norm(x, gamma, beta):
    mu = jnp.mean(x, axis=-1, keepdims=True)
    xc = x - mu
    var = jnp.mean(xc * xc, axis=-1, keepdims=True)
    return xc * lax.rsqrt(var + LN_EPS) * gamma + beta


# ---------------------------------------------------------------------------
# Fused kernel.  Grid = (batch blocks, encoder layers).
# One grid step = one encoder layer applied to Bt batch rows; the activation
# lives in a persistent VMEM scratch across the layer axis.
# ---------------------------------------------------------------------------
def fused_transformer_kernel(xcol_ref, cw_ref, cb_ref, pos_ref,
                             wqkv_ref, bqkv_ref, wo_ref, bo_ref,
                             g1_ref, be1_ref, w1_ref, b1_ref,
                             w2_ref, b2_ref, g2_ref, be2_ref,
                             ng_ref, nb_ref, fw_ref, fb_ref,
                             o_ref, h_ref, *, n_heads, ff_chunk):
    layer = pl.program_id(1)
    n_layers = pl.num_programs(1)
    Bt, L, KC = xcol_ref.shape
    D = cw_ref.shape[-1]
    F = w1_ref.shape[-1]
    N = Bt * L
    H = n_heads
    Dh = D // H
    inv_sqrt_dh = 1.0 / math.sqrt(Dh)
    cdt = cw_ref.dtype                      # matmul operand dtype (bf16)

    # ---- stage 1 (first layer step only): conv(im2col, BN folded) + pos ----
    @pl.when(layer == 0)
    def _conv():
        xc = xcol_ref[...].reshape(N, KC).astype(cdt)
        h0 = jnp.dot(xc, cw_ref[...],
                     preferred_element_type=jnp.float32) + cb_ref[...]
        h0 = h0.reshape(Bt, L, D) + pos_ref[...]        # learned pos encoding
        h_ref[...] = h0.reshape(N, D)

    h = h_ref[...]                                       # (N, D) f32

    # ---- self-attention: fused QKV projection + fused output projection ----
    qkv = jnp.dot(h.astype(cdt), wqkv_ref[...],
                  preferred_element_type=jnp.float32) + bqkv_ref[...]  # (N, 3D)
    ctx_heads = []
    for hd in range(H):           # small static unroll; per-head tmp is (Bt,L,L)
        q = qkv[:, hd * Dh:(hd + 1) * Dh].reshape(Bt, L, Dh) * inv_sqrt_dh
        k = qkv[:, D + hd * Dh:D + (hd + 1) * Dh].reshape(Bt, L, Dh)
        v = qkv[:, 2 * D + hd * Dh:2 * D + (hd + 1) * Dh].reshape(Bt, L, Dh)
        s = jnp.einsum('bld,bmd->blm', q.astype(cdt), k.astype(cdt),
                       preferred_element_type=jnp.float32)       # (Bt, L, L)
        s = s - jnp.max(s, axis=-1, keepdims=True)
        p = jnp.exp(s)
        p = p * pl.reciprocal(jnp.sum(p, axis=-1, keepdims=True), approx=True)
        ctx_heads.append(
            jnp.einsum('blm,bmd->bld', p.astype(cdt), v.astype(cdt),
                       preferred_element_type=jnp.float32))       # (Bt, L, Dh)
    ctx = jnp.concatenate(ctx_heads, axis=-1).reshape(N, D)
    attn = jnp.dot(ctx.astype(cdt), wo_ref[...],
                   preferred_element_type=jnp.float32) + bo_ref[...]
    # TODO(synk): attention/residual dropouts are identity (inference mode).
    h1 = _layer_norm(h + attn, g1_ref[...], be1_ref[...])

    # ---- feed-forward, chunked over FF_DIM with fori_loop (bounded live ranges)
    h1c = h1.astype(cdt)

    def ff_body(c, acc):
        c0 = pl.multiple_of(c * ff_chunk, ff_chunk)
        hid = jnp.maximum(
            jnp.dot(h1c, w1_ref[:, pl.ds(c0, ff_chunk)],
                    preferred_element_type=jnp.float32)
            + b1_ref[:, pl.ds(c0, ff_chunk)], 0.0)
        return acc + jnp.dot(hid.astype(cdt), w2_ref[pl.ds(c0, ff_chunk), :],
                             preferred_element_type=jnp.float32)

    ff = lax.fori_loop(0, F // ff_chunk, ff_body,
                       jnp.zeros((N, D), jnp.float32)) + b2_ref[...]
    h2 = _layer_norm(h1 + ff, g2_ref[...], be2_ref[...])
    h_ref[...] = h2

    # ---- stage 3 (last layer step only): final LayerNorm + fc (lane-padded) --
    @pl.when(layer == n_layers - 1)
    def _final():
        xn = _layer_norm(h2, ng_ref[...], nb_ref[...])
        # TODO(synk): self.dropout is identity in inference mode.
        out = jnp.dot(xn.astype(fw_ref.dtype), fw_ref[...],
                      preferred_element_type=jnp.float32) + fb_ref[...]
        o_ref[...] = out.reshape(Bt, L, fw_ref.shape[-1])


# ---------------------------------------------------------------------------
# Wrapper
# ---------------------------------------------------------------------------
def _pick_batch_block(B, L, min_rows=256, max_rows=2048):
    """Rows per grid step.  Single-core chips (v5e/v6e) want the largest
    N = Bt*L that fits VMEM; only split the batch for a second step (v7x
    megacore) when each step still keeps N >= min_rows on the 256-row MXU."""
    cap = max(1, max_rows // max(L, 1))
    bt = min(B, cap)
    if bt == B and B > 1:
        half = (B + 1) // 2
        if half * L >= min_rows and half <= cap:
            bt = half
    return max(1, bt)


def transformer_channel_forward(x, params, *, conv_kernel_size, n_heads,
                                ff_chunk=FF_CHUNK):
    B, L, Cin = x.shape
    K = conv_kernel_size
    pad = K // 2
    D = params["conv_w"].shape[-1]
    KCpad = params["conv_w"].shape[0]
    KC = K * Cin
    NL = params["wqkv"].shape[0]
    F = params["w1"].shape[-1]
    out_pad = params["fc_w"].shape[-1]

    if ff_chunk > F or F % ff_chunk != 0:
        ff_chunk = F

    # im2col: row t = [xpad[t+0], ..., xpad[t+K-1]] concat on channels; pad the
    # contraction dim to a multiple of 128 (matches the padded conv weight).
    xpad = jnp.pad(x, ((0, 0), (pad, pad), (0, 0)))
    xcol = jnp.concatenate([xpad[:, k:k + L, :] for k in range(K)], axis=-1)
    xcol = jnp.pad(xcol, ((0, 0), (0, 0), (0, KCpad - KC)))

    Bt = _pick_batch_block(B, L)
    n_bblocks = pl.cdiv(B, Bt)
    Bpad = n_bblocks * Bt
    if Bpad != B:                       # pad batch instead of degrading to Bt=1
        xcol = jnp.pad(xcol, ((0, Bpad - B), (0, 0), (0, 0)))

    def const_spec(a):                  # grid-invariant input (fetched once)
        nd = a.ndim
        return pl.BlockSpec(a.shape, lambda b, l, _n=nd: (0,) * _n)

    def layer_spec(a):                  # streamed per encoder layer
        return pl.BlockSpec((None,) + a.shape[1:], lambda b, l: (l, 0, 0))

    const_args = [params["conv_w"], params["conv_b"], params["pos"]]
    layer_args = [params["wqkv"], params["bqkv"], params["wo"], params["bo"],
                  params["g1"], params["be1"], params["w1"], params["b1"],
                  params["w2"], params["b2"], params["g2"], params["be2"]]
    tail_args = [params["norm_g"], params["norm_b"],
                 params["fc_w"], params["fc_b"]]

    out = pl.pallas_call(
        functools.partial(fused_transformer_kernel, n_heads=n_heads,
                          ff_chunk=ff_chunk),
        out_shape=jax.ShapeDtypeStruct((Bpad, L, out_pad), jnp.float32),
        grid_spec=pltpu.PrefetchScalarGridSpec(
            num_scalar_prefetch=0,
            grid=(Bpad // Bt, NL),
            in_specs=[pl.BlockSpec((Bt, L, KCpad), lambda b, l: (b, 0, 0))]
                     + [const_spec(a) for a in const_args]
                     + [layer_spec(a) for a in layer_args]
                     + [const_spec(a) for a in tail_args],
            out_specs=pl.BlockSpec((Bt, L, out_pad), lambda b, l: (b, 0, 0)),
            scratch_shapes=[pltpu.VMEM((Bt * L, D), jnp.float32)]),
        compiler_params=pltpu.CompilerParams(
            dimension_semantics=("parallel", "arbitrary"),
            # Above the v5e (16 MiB) / v6e (32 MiB) scoped defaults, below
            # v7x's 64 MiB physical VMEM.
            vmem_limit_bytes=48 * 1024 * 1024),
    )(xcol, *const_args, *layer_args, *tail_args)

    return out[:B, :, :OUT_DIM]          # strip batch + lane padding


# ---------------------------------------------------------------------------
# Deterministic parameter init (shapes match the PyTorch module __init__),
# stored in the layouts the fused kernel expects.
# ---------------------------------------------------------------------------
def init_params(key, *, input_dim, model_dim, n_heads, num_layers,
                conv_kernel_size, seq_len, ff_dim=FF_DIM, out_pad=OUT_PAD,
                matmul_dtype=jnp.bfloat16):
    D, K, F, H = model_dim, conv_kernel_size, ff_dim, n_heads
    KC = K * input_dim
    KCpad = ((KC + 127) // 128) * 128
    keys = iter(jax.random.split(key, 64))

    def nrm(shape, scale):
        return scale * jax.random.normal(next(keys), shape, jnp.float32)

    p = {}
    # Conv1d: torch weight (D, Cin, K), kaiming fan_out -> im2col layout
    # (K*Cin, D); fold BatchNorm1d (eval: running stats) into weight/bias and
    # zero-pad the contraction dim to a multiple of 128.
    conv_w = nrm((D, input_dim, K), math.sqrt(2.0 / (D * K)))
    w_im2col = jnp.transpose(conv_w, (2, 1, 0)).reshape(KC, D)
    conv_b = jnp.zeros((1, D), jnp.float32)              # init.constant_(bias, 0)
    gamma = 1.0 + nrm((1, D), 0.1)
    beta = nrm((1, D), 0.1)
    rmean = nrm((1, D), 0.1)
    rvar = 1.0 + jnp.abs(nrm((1, D), 0.1))
    bn_scale = gamma / jnp.sqrt(rvar + BN_EPS)
    bn_shift = beta - rmean * bn_scale
    p["conv_w"] = jnp.pad(w_im2col * bn_scale,
                          ((0, KCpad - KC), (0, 0))).astype(matmul_dtype)
    p["conv_b"] = conv_b * bn_scale + bn_shift           # f32 (1, D)

    # Learned positional encoding nn.Parameter(zeros(1, seq_len, D)); small
    # randoms so the add is exercised.
    p["pos"] = nrm((seq_len, D), 0.02)

    # Encoder layers: weights stacked on a leading layer axis.  QKV fused to
    # (D, 3D) (q|k|v on the last dim), out-proj fused to (D, D).
    s = 1.0 / math.sqrt(D)
    p["wqkv"] = nrm((num_layers, D, 3 * D), s).astype(matmul_dtype)
    p["bqkv"] = jnp.zeros((num_layers, 1, 3 * D), jnp.float32)
    p["wo"] = nrm((num_layers, D, D), s).astype(matmul_dtype)
    p["bo"] = jnp.zeros((num_layers, 1, D), jnp.float32)
    p["g1"] = jnp.ones((num_layers, 1, D), jnp.float32)
    p["be1"] = jnp.zeros((num_layers, 1, D), jnp.float32)
    p["w1"] = nrm((num_layers, D, F), s).astype(matmul_dtype)
    p["b1"] = jnp.zeros((num_layers, 1, F), jnp.float32)
    p["w2"] = nrm((num_layers, F, D), 1.0 / math.sqrt(F)).astype(matmul_dtype)
    p["b2"] = jnp.zeros((num_layers, 1, D), jnp.float32)
    p["g2"] = jnp.ones((num_layers, 1, D), jnp.float32)
    p["be2"] = jnp.zeros((num_layers, 1, D), jnp.float32)

    p["norm_g"] = jnp.ones((1, D), jnp.float32)
    p["norm_b"] = jnp.zeros((1, D), jnp.float32)
    fc_w = nrm((D, OUT_DIM), math.sqrt(2.0 / (D + OUT_DIM)))        # xavier
    # Zero-pad fc to 128 output lanes so the only HBM store is lane-dense.
    p["fc_w"] = jnp.pad(fc_w, ((0, 0), (0, out_pad - OUT_DIM))).astype(matmul_dtype)
    p["fc_b"] = jnp.pad(jnp.zeros((1, OUT_DIM), jnp.float32),
                        ((0, 0), (0, out_pad - OUT_DIM)))
    return p


if __name__ == "__main__":
    B, L, Cin = 2, 8, 14          # batch, seq_len, input_dim (script uses 14)
    D, H, NL, K = 32, 4, 2, 3     # model_dim, n_heads, encoder layers, conv kernel

    key = jax.random.PRNGKey(0)
    kx, kp = jax.random.split(key)
    x = jax.random.normal(kx, (B, L, Cin), jnp.float32)

    params = init_params(kp, input_dim=Cin, model_dim=D, n_heads=H,
                         num_layers=NL, conv_kernel_size=K, seq_len=L)

    out = transformer_channel_forward(x, params, conv_kernel_size=K, n_heads=H)
    out = jax.block_until_ready(out)

    assert out.shape == (B, L, OUT_DIM), out.shape
    assert bool(jnp.all(jnp.isfinite(out)))
    print("KERNEL_OK")
</pallas_src>

<mosaic_0001>
module attributes {stable_mosaic.version = 11 : i64} {
  func.func @fused_transformer_kernel(%arg0: i32, %arg1: i32, %arg2: memref<2x8x128xf32, #tpu.memory_space<vmem>>, %arg3: memref<128x32xbf16, #tpu.memory_space<vmem>>, %arg4: memref<1x32xf32, #tpu.memory_space<vmem>>, %arg5: memref<8x32xf32, #tpu.memory_space<vmem>>, %arg6: memref<1x32x96xbf16, #tpu.memory_space<vmem>>, %arg7: memref<1x1x96xf32, #tpu.memory_space<vmem>>, %arg8: memref<1x32x32xbf16, #tpu.memory_space<vmem>>, %arg9: memref<1x1x32xf32, #tpu.memory_space<vmem>>, %arg10: memref<1x1x32xf32, #tpu.memory_space<vmem>>, %arg11: memref<1x1x32xf32, #tpu.memory_space<vmem>>, %arg12: memref<1x32x2048xbf16, #tpu.memory_space<vmem>>, %arg13: memref<1x1x2048xf32, #tpu.memory_space<vmem>>, %arg14: memref<1x2048x32xbf16, #tpu.memory_space<vmem>>, %arg15: memref<1x1x32xf32, #tpu.memory_space<vmem>>, %arg16: memref<1x1x32xf32, #tpu.memory_space<vmem>>, %arg17: memref<1x1x32xf32, #tpu.memory_space<vmem>>, %arg18: memref<1x32xf32, #tpu.memory_space<vmem>>, %arg19: memref<1x32xf32, #tpu.memory_space<vmem>>, %arg20: memref<32x128xbf16, #tpu.memory_space<vmem>>, %arg21: memref<1x128xf32, #tpu.memory_space<vmem>>, %arg22: memref<2x8x128xf32, #tpu.memory_space<vmem>>, %arg23: memref<16x32xf32, #tpu.memory_space<vmem>>) attributes {dimension_semantics = [#tpu.dimension_semantics<parallel>, #tpu.dimension_semantics<arbitrary>], iteration_bounds = array<i64: 1, 2>, scalar_prefetch = 0 : i64, scratch_operands = 1 : i64, tpu.core_type = #tpu.core_type<tc>, window_params = [{transform_indices = @transform_0, window_bounds = array<i64: 2, 8, 128>}, {pipeline_mode = #tpu.pipeline_mode<synchronous>, transform_indices = @transform_1, window_bounds = array<i64: 128, 32>}, {pipeline_mode = #tpu.pipeline_mode<synchronous>, transform_indices = @transform_2, window_bounds = array<i64: 1, 32>}, {pipeline_mode = #tpu.pipeline_mode<synchronous>, transform_indices = @transform_3, window_bounds = array<i64: 8, 32>}, {transform_indices = @transform_4, window_bounds = array<i64: 1, 32, 96>}, {transform_indices = @transform_5, window_bounds = array<i64: 1, 1, 96>}, {transform_indices = @transform_6, window_bounds = array<i64: 1, 32, 32>}, {transform_indices = @transform_7, window_bounds = array<i64: 1, 1, 32>}, {transform_indices = @transform_8, window_bounds = array<i64: 1, 1, 32>}, {transform_indices = @transform_9, window_bounds = array<i64: 1, 1, 32>}, {transform_indices = @transform_10, window_bounds = array<i64: 1, 32, 2048>}, {transform_indices = @transform_11, window_bounds = array<i64: 1, 1, 2048>}, {transform_indices = @transform_12, window_bounds = array<i64: 1, 2048, 32>}, {transform_indices = @transform_13, window_bounds = array<i64: 1, 1, 32>}, {transform_indices = @transform_14, window_bounds = array<i64: 1, 1, 32>}, {transform_indices = @transform_15, window_bounds = array<i64: 1, 1, 32>}, {pipeline_mode = #tpu.pipeline_mode<synchronous>, transform_indices = @transform_16, window_bounds = array<i64: 1, 32>}, {pipeline_mode = #tpu.pipeline_mode<synchronous>, transform_indices = @transform_17, window_bounds = array<i64: 1, 32>}, {pipeline_mode = #tpu.pipeline_mode<synchronous>, transform_indices = @transform_18, window_bounds = array<i64: 32, 128>}, {pipeline_mode = #tpu.pipeline_mode<synchronous>, transform_indices = @transform_19, window_bounds = array<i64: 1, 128>}, {transform_indices = @transform_20, window_bounds = array<i64: 2, 8, 128>}]} {
    %c0_i32 = arith.constant 0 : i32
    %0 = arith.cmpi eq, %arg1, %c0_i32 : i32
    %1 = arith.extui %0 : i1 to i32
    %c0_i32_0 = arith.constant 0 : i32
    %2 = arith.cmpi ne, %1, %c0_i32_0 : i32
    scf.if %2 {
      %c0_67 = arith.constant 0 : index
      %c0_68 = arith.constant 0 : index
      %c0_69 = arith.constant 0 : index
      %180 = vector.load %arg2[%c0_67, %c0_68, %c0_69] : memref<2x8x128xf32, #tpu.memory_space<vmem>>, vector<2x8x128xf32>
      %181 = vector.shape_cast %180 : vector<2x8x128xf32> to vector<16x128xf32>
      %182 = arith.truncf %181 : vector<16x128xf32> to vector<16x128xbf16>
      %c0_70 = arith.constant 0 : index
      %c0_71 = arith.constant 0 : index
      %183 = vector.load %arg3[%c0_70, %c0_71] : memref<128x32xbf16, #tpu.memory_space<vmem>>, vector<128x32xbf16>
      %cst_72 = arith.constant dense<0.000000e+00> : vector<16x32xf32>
      %184 = tpu.matmul %182, %183, %cst_72 {dimension_numbers = #tpu.dot_dimension_numbers<[1], [0], [0], [1], [0, 0, 1, 1], [], []>} : vector<16x128xbf16>, vector<128x32xbf16>, vector<16x32xf32> -> vector<16x32xf32>
      %c0_73 = arith.constant 0 : index
      %c0_74 = arith.constant 0 : index
      %185 = vector.load %arg4[%c0_73, %c0_74] : memref<1x32xf32, #tpu.memory_space<vmem>>, vector<1x32xf32>
      %186 = vector.broadcast %185 : vector<1x32xf32> to vector<16x32xf32>
      %187 = arith.addf %184, %186 : vector<16x32xf32>
      %188 = vector.shape_cast %187 : vector<16x32xf32> to vector<2x8x32xf32>
      %c0_75 = arith.constant 0 : index
      %c0_76 = arith.constant 0 : index
      %189 = vector.load %arg5[%c0_75, %c0_76] : memref<8x32xf32, #tpu.memory_space<vmem>>, vector<8x32xf32>
      %190 = vector.shape_cast %189 : vector<8x32xf32> to vector<1x8x32xf32>
      %191 = vector.broadcast %190 : vector<1x8x32xf32> to vector<2x8x32xf32>
      %192 = arith.addf %188, %191 : vector<2x8x32xf32>
      %193 = vector.shape_cast %192 : vector<2x8x32xf32> to vector<16x32xf32>
      %c0_77 = arith.constant 0 : index
      %c0_78 = arith.constant 0 : index
      %194 = vector.load %arg23[%c0_77, %c0_78] : memref<16x32xf32, #tpu.memory_space<vmem>>, vector<16x32xf32>
      tpu.vector_store %arg23[%c0_77, %c0_78], %193 {strides = array<i32>} : memref<16x32xf32, #tpu.memory_space<vmem>>, vector<16x32xf32>,
    } else {
    }
    %c0 = arith.constant 0 : index
    %c0_1 = arith.constant 0 : index
    %3 = vector.load %arg23[%c0, %c0_1] : memref<16x32xf32, #tpu.memory_space<vmem>>, vector<16x32xf32>
    %4 = arith.truncf %3 : vector<16x32xf32> to vector<16x32xbf16>
    %c0_2 = arith.constant 0 : index
    %c0_3 = arith.constant 0 : index
    %c0_4 = arith.constant 0 : index
    %5 = vector.load %arg6[%c0_2, %c0_3, %c0_4] : memref<1x32x96xbf16, #tpu.memory_space<vmem>>, vector<1x32x96xbf16>
    %6 = vector.shape_cast %5 : vector<1x32x96xbf16> to vector<32x96xbf16>
    %cst = arith.constant dense<0.000000e+00> : vector<16x96xf32>
    %7 = tpu.matmul %4, %6, %cst {dimension_numbers = #tpu.dot_dimension_numbers<[1], [0], [0], [1], [0, 0, 1, 1], [], []>} : vector<16x32xbf16>, vector<32x96xbf16>, vector<16x96xf32> -> vector<16x96xf32>
    %c0_5 = arith.constant 0 : index
    %c0_6 = arith.constant 0 : index
    %c0_7 = arith.constant 0 : index
    %8 = vector.load %arg7[%c0_5, %c0_6, %c0_7] : memref<1x1x96xf32, #tpu.memory_space<vmem>>, vector<1x1x96xf32>
    %9 = vector.shape_cast %8 : vector<1x1x96xf32> to vector<1x96xf32>
    %10 = vector.broadcast %9 : vector<1x96xf32> to vector<16x96xf32>
    %11 = arith.addf %7, %10 : vector<16x96xf32>
    %12 = vector.extract_strided_slice %11 {offsets = [0, 0], sizes = [16, 8], strides = [1, 1]} : vector<16x96xf32> to vector<16x8xf32>
    %13 = vector.shape_cast %12 : vector<16x8xf32> to vector<2x8x8xf32>
    %cst_8 = arith.constant 0.353553385 : f32
    %14 = vector.broadcast %cst_8 : f32 to vector<2x8x8xf32>
    %15 = arith.mulf %13, %14 : vector<2x8x8xf32>
    %16 = vector.extract_strided_slice %11 {offsets = [0, 32], sizes = [16, 8], strides = [1, 1]} : vector<16x96xf32> to vector<16x8xf32>
    %17 = vector.shape_cast %16 : vector<16x8xf32> to vector<2x8x8xf32>
    %18 = vector.extract_strided_slice %11 {offsets = [0, 64], sizes = [16, 8], strides = [1, 1]} : vector<16x96xf32> to vector<16x8xf32>
    %19 = vector.shape_cast %18 : vector<16x8xf32> to vector<2x8x8xf32>
    %20 = arith.truncf %15 : vector<2x8x8xf32> to vector<2x8x8xbf16>
    %21 = arith.truncf %17 : vector<2x8x8xf32> to vector<2x8x8xbf16>
    "tpu.trace_start"() <{level = 10 : i32, message = "bld,bmd->blm"}> : () -> ()
    %cst_9 = arith.constant dense<0.000000e+00> : vector<2x8x8xf32>
    %22 = tpu.matmul %20, %21, %cst_9 {dimension_numbers = #tpu.dot_dimension_numbers<[2], [2], [1], [1], [0, 0, 0, 1, 1, 1], [0], [0]>} : vector<2x8x8xbf16>, vector<2x8x8xbf16>, vector<2x8x8xf32> -> vector<2x8x8xf32>
    "tpu.trace_stop"() : () -> ()
    %cst_10 = arith.constant dense<0xFF800000> : vector<2x8xf32>
    %23 = vector.multi_reduction <maximumf>, %22, %cst_10 [2] : vector<2x8x8xf32> to vector<2x8xf32>
    %24 = vector.shape_cast %23 : vector<2x8xf32> to vector<2x8x1xf32>
    %25 = vector.broadcast %24 : vector<2x8x1xf32> to vector<2x8x8xf32>
    %26 = arith.subf %22, %25 : vector<2x8x8xf32>
    %27 = math.exp %26 : vector<2x8x8xf32>
    %cst_11 = arith.constant dense<0.000000e+00> : vector<2x8xf32>
    %28 = vector.multi_reduction <add>, %27, %cst_11 [2] : vector<2x8x8xf32> to vector<2x8xf32>
    %29 = vector.shape_cast %28 : vector<2x8xf32> to vector<2x8x1xf32>
    %30 = tpu.reciprocal %29 {approx = true} : vector<2x8x1xf32> -> vector<2x8x1xf32>
    %31 = vector.broadcast %30 : vector<2x8x1xf32> to vector<2x8x8xf32>
    %32 = arith.mulf %27, %31 : vector<2x8x8xf32>
    %33 = arith.truncf %32 : vector<2x8x8xf32> to vector<2x8x8xbf16>
    %34 = arith.truncf %19 : vector<2x8x8xf32> to vector<2x8x8xbf16>
    "tpu.trace_start"() <{level = 10 : i32, message = "blm,bmd->bld"}> : () -> ()
    %cst_12 = arith.constant dense<0.000000e+00> : vector<2x8x8xf32>
    %35 = tpu.matmul %33, %34, %cst_12 {dimension_numbers = #tpu.dot_dimension_numbers<[2], [1], [1], [2], [0, 0, 0, 1, 1, 2], [0], [0]>} : vector<2x8x8xbf16>, vector<2x8x8xbf16>, vector<2x8x8xf32> -> vector<2x8x8xf32>
    "tpu.trace_stop"() : () -> ()
    %36 = vector.extract_strided_slice %11 {offsets = [0, 8], sizes = [16, 8], strides = [1, 1]} : vector<16x96xf32> to vector<16x8xf32>
    %37 = vector.shape_cast %36 : vector<16x8xf32> to vector<2x8x8xf32>
    %cst_13 = arith.constant 0.353553385 : f32
    %38 = vector.broadcast %cst_13 : f32 to vector<2x8x8xf32>
    %39 = arith.mulf %37, %38 : vector<2x8x8xf32>
    %40 = vector.extract_strided_slice %11 {offsets = [0, 40], sizes = [16, 8], strides = [1, 1]} : vector<16x96xf32> to vector<16x8xf32>
    %41 = vector.shape_cast %40 : vector<16x8xf32> to vector<2x8x8xf32>
    %42 = vector.extract_strided_slice %11 {offsets = [0, 72], sizes = [16, 8], strides = [1, 1]} : vector<16x96xf32> to vector<16x8xf32>
    %43 = vector.shape_cast %42 : vector<16x8xf32> to vector<2x8x8xf32>
    %44 = arith.truncf %39 : vector<2x8x8xf32> to vector<2x8x8xbf16>
    %45 = arith.truncf %41 : vector<2x8x8xf32> to vector<2x8x8xbf16>
    "tpu.trace_start"() <{level = 10 : i32, message = "bld,bmd->blm"}> : () -> ()
    %cst_14 = arith.constant dense<0.000000e+00> : vector<2x8x8xf32>
    %46 = tpu.matmul %44, %45, %cst_14 {dimension_numbers = #tpu.dot_dimension_numbers<[2], [2], [1], [1], [0, 0, 0, 1, 1, 1], [0], [0]>} : vector<2x8x8xbf16>, vector<2x8x8xbf16>, vector<2x8x8xf32> -> vector<2x8x8xf32>
    "tpu.trace_stop"() : () -> ()
    %cst_15 = arith.constant dense<0xFF800000> : vector<2x8xf32>
    %47 = vector.multi_reduction <maximumf>, %46, %cst_15 [2] : vector<2x8x8xf32> to vector<2x8xf32>
    %48 = vector.shape_cast %47 : vector<2x8xf32> to vector<2x8x1xf32>
    %49 = vector.broadcast %48 : vector<2x8x1xf32> to vector<2x8x8xf32>
    %50 = arith.subf %46, %49 : vector<2x8x8xf32>
    %51 = math.exp %50 : vector<2x8x8xf32>
    %cst_16 = arith.constant dense<0.000000e+00> : vector<2x8xf32>
    %52 = vector.multi_reduction <add>, %51, %cst_16 [2] : vector<2x8x8xf32> to vector<2x8xf32>
    %53 = vector.shape_cast %52 : vector<2x8xf32> to vector<2x8x1xf32>
    %54 = tpu.reciprocal %53 {approx = true} : vector<2x8x1xf32> -> vector<2x8x1xf32>
    %55 = vector.broadcast %54 : vector<2x8x1xf32> to vector<2x8x8xf32>
    %56 = arith.mulf %51, %55 : vector<2x8x8xf32>
    %57 = arith.truncf %56 : vector<2x8x8xf32> to vector<2x8x8xbf16>
    %58 = arith.truncf %43 : vector<2x8x8xf32> to vector<2x8x8xbf16>
    "tpu.trace_start"() <{level = 10 : i32, message = "blm,bmd->bld"}> : () -> ()
    %cst_17 = arith.constant dense<0.000000e+00> : vector<2x8x8xf32>
    %59 = tpu.matmul %57, %58, %cst_17 {dimension_numbers = #tpu.dot_dimension_numbers<[2], [1], [1], [2], [0, 0, 0, 1, 1, 2], [0], [0]>} : vector<2x8x8xbf16>, vector<2x8x8xbf16>, vector<2x8x8xf32> -> vector<2x8x8xf32>
    "tpu.trace_stop"() : () -> ()
    %60 = vector.extract_strided_slice %11 {offsets = [0, 16], sizes = [16, 8], strides = [1, 1]} : vector<16x96xf32> to vector<16x8xf32>
    %61 = vector.shape_cast %60 : vector<16x8xf32> to vector<2x8x8xf32>
    %cst_18 = arith.constant 0.353553385 : f32
    %62 = vector.broadcast %cst_18 : f32 to vector<2x8x8xf32>
    %63 = arith.mulf %61, %62 : vector<2x8x8xf32>
    %64 = vector.extract_strided_slice %11 {offsets = [0, 48], sizes = [16, 8], strides = [1, 1]} : vector<16x96xf32> to vector<16x8xf32>
    %65 = vector.shape_cast %64 : vector<16x8xf32> to vector<2x8x8xf32>
    %66 = vector.extract_strided_slice %11 {offsets = [0, 80], sizes = [16, 8], strides = [1, 1]} : vector<16x96xf32> to vector<16x8xf32>
    %67 = vector.shape_cast %66 : vector<16x8xf32> to vector<2x8x8xf32>
    %68 = arith.truncf %63 : vector<2x8x8xf32> to vector<2x8x8xbf16>
    %69 = arith.truncf %65 : vector<2x8x8xf32> to vector<2x8x8xbf16>
    "tpu.trace_start"() <{level = 10 : i32, message = "bld,bmd->blm"}> : () -> ()
    %cst_19 = arith.constant dense<0.000000e+00> : vector<2x8x8xf32>
    %70 = tpu.matmul %68, %69, %cst_19 {dimension_numbers = #tpu.dot_dimension_numbers<[2], [2], [1], [1], [0, 0, 0, 1, 1, 1], [0], [0]>} : vector<2x8x8xbf16>, vector<2x8x8xbf16>, vector<2x8x8xf32> -> vector<2x8x8xf32>
    "tpu.trace_stop"() : () -> ()
    %cst_20 = arith.constant dense<0xFF800000> : vector<2x8xf32>
    %71 = vector.multi_reduction <maximumf>, %70, %cst_20 [2] : vector<2x8x8xf32> to vector<2x8xf32>
    %72 = vector.shape_cast %71 : vector<2x8xf32> to vector<2x8x1xf32>
    %73 = vector.broadcast %72 : vector<2x8x1xf32> to vector<2x8x8xf32>
    %74 = arith.subf %70, %73 : vector<2x8x8xf32>
    %75 = math.exp %74 : vector<2x8x8xf32>
    %cst_21 = arith.constant dense<0.000000e+00> : vector<2x8xf32>
    %76 = vector.multi_reduction <add>, %75, %cst_21 [2] : vector<2x8x8xf32> to vector<2x8xf32>
    %77 = vector.shape_cast %76 : vector<2x8xf32> to vector<2x8x1xf32>
    %78 = tpu.reciprocal %77 {approx = true} : vector<2x8x1xf32> -> vector<2x8x1xf32>
    %79 = vector.broadcast %78 : vector<2x8x1xf32> to vector<2x8x8xf32>
    %80 = arith.mulf %75, %79 : vector<2x8x8xf32>
    %81 = arith.truncf %80 : vector<2x8x8xf32> to vector<2x8x8xbf16>
    %82 = arith.truncf %67 : vector<2x8x8xf32> to vector<2x8x8xbf16>
    "tpu.trace_start"() <{level = 10 : i32, message = "blm,bmd->bld"}> : () -> ()
    %cst_22 = arith.constant dense<0.000000e+00> : vector<2x8x8xf32>
    %83 = tpu.matmul %81, %82, %cst_22 {dimension_numbers = #tpu.dot_dimension_numbers<[2], [1], [1], [2], [0, 0, 0, 1, 1, 2], [0], [0]>} : vector<2x8x8xbf16>, vector<2x8x8xbf16>, vector<2x8x8xf32> -> vector<2x8x8xf32>
    "tpu.trace_stop"() : () -> ()
    %84 = vector.extract_strided_slice %11 {offsets = [0, 24], sizes = [16, 8], strides = [1, 1]} : vector<16x96xf32> to vector<16x8xf32>
    %85 = vector.shape_cast %84 : vector<16x8xf32> to vector<2x8x8xf32>
    %cst_23 = arith.constant 0.353553385 : f32
    %86 = vector.broadcast %cst_23 : f32 to vector<2x8x8xf32>
    %87 = arith.mulf %85, %86 : vector<2x8x8xf32>
    %88 = vector.extract_strided_slice %11 {offsets = [0, 56], sizes = [16, 8], strides = [1, 1]} : vector<16x96xf32> to vector<16x8xf32>
    %89 = vector.shape_cast %88 : vector<16x8xf32> to vector<2x8x8xf32>
    %90 = vector.extract_strided_slice %11 {offsets = [0, 88], sizes = [16, 8], strides = [1, 1]} : vector<16x96xf32> to vector<16x8xf32>
    %91 = vector.shape_cast %90 : vector<16x8xf32> to vector<2x8x8xf32>
    %92 = arith.truncf %87 : vector<2x8x8xf32> to vector<2x8x8xbf16>
    %93 = arith.truncf %89 : vector<2x8x8xf32> to vector<2x8x8xbf16>
    "tpu.trace_start"() <{level = 10 : i32, message = "bld,bmd->blm"}> : () -> ()
    %cst_24 = arith.constant dense<0.000000e+00> : vector<2x8x8xf32>
    %94 = tpu.matmul %92, %93, %cst_24 {dimension_numbers = #tpu.dot_dimension_numbers<[2], [2], [1], [1], [0, 0, 0, 1, 1, 1], [0], [0]>} : vector<2x8x8xbf16>, vector<2x8x8xbf16>, vector<2x8x8xf32> -> vector<2x8x8xf32>
    "tpu.trace_stop"() : () -> ()
    %cst_25 = arith.constant dense<0xFF800000> : vector<2x8xf32>
    %95 = vector.multi_reduction <maximumf>, %94, %cst_25 [2] : vector<2x8x8xf32> to vector<2x8xf32>
    %96 = vector.shape_cast %95 : vector<2x8xf32> to vector<2x8x1xf32>
    %97 = vector.broadcast %96 : vector<2x8x1xf32> to vector<2x8x8xf32>
    %98 = arith.subf %94, %97 : vector<2x8x8xf32>
    %99 = math.exp %98 : vector<2x8x8xf32>
    %cst_26 = arith.constant dense<0.000000e+00> : vector<2x8xf32>
    %100 = vector.multi_reduction <add>, %99, %cst_26 [2] : vector<2x8x8xf32> to vector<2x8xf32>
    %101 = vector.shape_cast %100 : vector<2x8xf32> to vector<2x8x1xf32>
    %102 = tpu.reciprocal %101 {approx = true} : vector<2x8x1xf32> -> vector<2x8x1xf32>
    %103 = vector.broadcast %102 : vector<2x8x1xf32> to vector<2x8x8xf32>
    %104 = arith.mulf %99, %103 : vector<2x8x8xf32>
    %105 = arith.truncf %104 : vector<2x8x8xf32> to vector<2x8x8xbf16>
    %106 = arith.truncf %91 : vector<2x8x8xf32> to vector<2x8x8xbf16>
    "tpu.trace_start"() <{level = 10 : i32, message = "blm,bmd->bld"}> : () -> ()
    %cst_27 = arith.constant dense<0.000000e+00> : vector<2x8x8xf32>
    %107 = tpu.matmul %105, %106, %cst_27 {dimension_numbers = #tpu.dot_dimension_numbers<[2], [1], [1], [2], [0, 0, 0, 1, 1, 2], [0], [0]>} : vector<2x8x8xbf16>, vector<2x8x8xbf16>, vector<2x8x8xf32> -> vector<2x8x8xf32>
    "tpu.trace_stop"() : () -> ()
    %108 = tpu.concatenate %35, %59, %83, %107 in 2 : vector<2x8x8xf32>, vector<2x8x8xf32>, vector<2x8x8xf32>, vector<2x8x8xf32> -> vector<2x8x32xf32>
    %109 = vector.shape_cast %108 : vector<2x8x32xf32> to vector<16x32xf32>
    %110 = arith.truncf %109 : vector<16x32xf32> to vector<16x32xbf16>
    %c0_28 = arith.constant 0 : index
    %c0_29 = arith.constant 0 : index
    %c0_30 = arith.constant 0 : index
    %111 = vector.load %arg8[%c0_28, %c0_29, %c0_30] : memref<1x32x32xbf16, #tpu.memory_space<vmem>>, vector<1x32x32xbf16>
    %112 = vector.shape_cast %111 : vector<1x32x32xbf16> to vector<32x32xbf16>
    %cst_31 = arith.constant dense<0.000000e+00> : vector<16x32xf32>
    %113 = tpu.matmul %110, %112, %cst_31 {dimension_numbers = #tpu.dot_dimension_numbers<[1], [0], [0], [1], [0, 0, 1, 1], [], []>} : vector<16x32xbf16>, vector<32x32xbf16>, vector<16x32xf32> -> vector<16x32xf32>
    %c0_32 = arith.constant 0 : index
    %c0_33 = arith.constant 0 : index
    %c0_34 = arith.constant 0 : index
    %114 = vector.load %arg9[%c0_32, %c0_33, %c0_34] : memref<1x1x32xf32, #tpu.memory_space<vmem>>, vector<1x1x32xf32>
    %115 = vector.shape_cast %114 : vector<1x1x32xf32> to vector<1x32xf32>
    %116 = vector.broadcast %115 : vector<1x32xf32> to vector<16x32xf32>
    %117 = arith.addf %113, %116 : vector<16x32xf32>
    %118 = arith.addf %3, %117 : vector<16x32xf32>
    %c0_35 = arith.constant 0 : index
    %c0_36 = arith.constant 0 : index
    %c0_37 = arith.constant 0 : index
    %119 = vector.load %arg10[%c0_35, %c0_36, %c0_37] : memref<1x1x32xf32, #tpu.memory_space<vmem>>, vector<1x1x32xf32>
    %120 = vector.shape_cast %119 : vector<1x1x32xf32> to vector<1x32xf32>
    %c0_38 = arith.constant 0 : index
    %c0_39 = arith.constant 0 : index
    %c0_40 = arith.constant 0 : index
    %121 = vector.load %arg11[%c0_38, %c0_39, %c0_40] : memref<1x1x32xf32, #tpu.memory_space<vmem>>, vector<1x1x32xf32>
    %122 = vector.shape_cast %121 : vector<1x1x32xf32> to vector<1x32xf32>
    %cst_41 = arith.constant dense<0.000000e+00> : vector<16xf32>
    %123 = vector.multi_reduction <add>, %118, %cst_41 [1] : vector<16x32xf32> to vector<16xf32>
    %124 = vector.shape_cast %123 : vector<16xf32> to vector<16x1xf32>
    %cst_42 = arith.constant 3.200000e+01 : f32
    %125 = vector.broadcast %cst_42 : f32 to vector<16x1xf32>
    %126 = arith.divf %124, %125 : vector<16x1xf32>
    %127 = vector.broadcast %126 : vector<16x1xf32> to vector<16x32xf32>
    %128 = arith.subf %118, %127 : vector<16x32xf32>
    %129 = arith.mulf %128, %128 : vector<16x32xf32>
    %cst_43 = arith.constant dense<0.000000e+00> : vector<16xf32>
    %130 = vector.multi_reduction <add>, %129, %cst_43 [1] : vector<16x32xf32> to vector<16xf32>
    %131 = vector.shape_cast %130 : vector<16xf32> to vector<16x1xf32>
    %cst_44 = arith.constant 3.200000e+01 : f32
    %132 = vector.broadcast %cst_44 : f32 to vector<16x1xf32>
    %133 = arith.divf %131, %132 : vector<16x1xf32>
    %cst_45 = arith.constant 9.99999974E-6 : f32
    %134 = vector.broadcast %cst_45 : f32 to vector<16x1xf32>
    %135 = arith.addf %133, %134 : vector<16x1xf32>
    %136 = math.rsqrt %135 : vector<16x1xf32>
    %137 = vector.broadcast %136 : vector<16x1xf32> to vector<16x32xf32>
    %138 = arith.mulf %128, %137 : vector<16x32xf32>
    %139 = vector.broadcast %120 : vector<1x32xf32> to vector<16x32xf32>
    %140 = arith.mulf %138, %139 : vector<16x32xf32>
    %141 = vector.broadcast %122 : vector<1x32xf32> to vector<16x32xf32>
    %142 = arith.addf %140, %141 : vector<16x32xf32>
    %143 = arith.truncf %142 : vector<16x32xf32> to vector<16x32xbf16>
    %cst_46 = arith.constant 0.000000e+00 : f32
    %144 = vector.broadcast %cst_46 : f32 to vector<16x32xf32>
    %c0_i32_47 = arith.constant 0 : i32
    %c4_i32 = arith.constant 4 : i32
    %145 = arith.addi %c0_i32_47, %c4_i32 : i32
    %c1_i32 = arith.constant 1 : i32
    %146 = scf.for %arg24 = %c0_i32_47 to %145 step %c1_i32 iter_args(%arg25 = %144) -> (vector<16x32xf32>)  : i32 {
      %c512_i32 = arith.constant 512 : i32
      %180 = arith.muli %arg24, %c512_i32 : i32
      %181 = tpu.assume_multiple %180, 512 : i32
      %c0_67 = arith.constant 0 : index
      %c0_68 = arith.constant 0 : index
      %182 = arith.index_cast %181 : i32 to index
      %183 = vector.load %arg12[%c0_67, %c0_68, %182] : memref<1x32x2048xbf16, #tpu.memory_space<vmem>>, vector<1x32x512xbf16>
      %184 = vector.shape_cast %183 : vector<1x32x512xbf16> to vector<32x512xbf16>
      %cst_69 = arith.constant dense<0.000000e+00> : vector<16x512xf32>
      %185 = tpu.matmul %143, %184, %cst_69 {dimension_numbers = #tpu.dot_dimension_numbers<[1], [0], [0], [1], [0, 0, 1, 1], [], []>} : vector<16x32xbf16>, vector<32x512xbf16>, vector<16x512xf32> -> vector<16x512xf32>
      %c0_70 = arith.constant 0 : index
      %c0_71 = arith.constant 0 : index
      %186 = arith.index_cast %181 : i32 to index
      %187 = vector.load %arg13[%c0_70, %c0_71, %186] : memref<1x1x2048xf32, #tpu.memory_space<vmem>>, vector<1x1x512xf32>
      %188 = vector.shape_cast %187 : vector<1x1x512xf32> to vector<1x512xf32>
      %189 = vector.broadcast %188 : vector<1x512xf32> to vector<16x512xf32>
      %190 = arith.addf %185, %189 : vector<16x512xf32>
      %cst_72 = arith.constant 0.000000e+00 : f32
      %191 = vector.broadcast %cst_72 : f32 to vector<16x512xf32>
      %192 = arith.maximumf %190, %191 : vector<16x512xf32>
      %193 = arith.truncf %192 : vector<16x512xf32> to vector<16x512xbf16>
      %c0_73 = arith.constant 0 : index
      %194 = arith.index_cast %181 : i32 to index
      %c0_74 = arith.constant 0 : index
      %195 = vector.load %arg14[%c0_73, %194, %c0_74] : memref<1x2048x32xbf16, #tpu.memory_space<vmem>>, vector<1x512x32xbf16>
      %196 = vector.shape_cast %195 : vector<1x512x32xbf16> to vector<512x32xbf16>
      %cst_75 = arith.constant dense<0.000000e+00> : vector<16x32xf32>
      %197 = tpu.matmul %193, %196, %cst_75 {dimension_numbers = #tpu.dot_dimension_numbers<[1], [0], [0], [1], [0, 0, 1, 1], [], []>} : vector<16x512xbf16>, vector<512x32xbf16>, vector<16x32xf32> -> vector<16x32xf32>
      %198 = arith.addf %arg25, %197 : vector<16x32xf32>
      scf.yield %198 : vector<16x32xf32>
    }
    %c4_i32_48 = arith.constant 4 : i32
    %c0_49 = arith.constant 0 : index
    %c0_50 = arith.constant 0 : index
    %c0_51 = arith.constant 0 : index
    %147 = vector.load %arg15[%c0_49, %c0_50, %c0_51] : memref<1x1x32xf32, #tpu.memory_space<vmem>>, vector<1x1x32xf32>
    %148 = vector.shape_cast %147 : vector<1x1x32xf32> to vector<1x32xf32>
    %149 = vector.broadcast %148 : vector<1x32xf32> to vector<16x32xf32>
    %150 = arith.addf %146, %149 : vector<16x32xf32>
    %151 = arith.addf %142, %150 : vector<16x32xf32>
    %c0_52 = arith.constant 0 : index
    %c0_53 = arith.constant 0 : index
    %c0_54 = arith.constant 0 : index
    %152 = vector.load %arg16[%c0_52, %c0_53, %c0_54] : memref<1x1x32xf32, #tpu.memory_space<vmem>>, vector<1x1x32xf32>
    %153 = vector.shape_cast %152 : vector<1x1x32xf32> to vector<1x32xf32>
    %c0_55 = arith.constant 0 : index
    %c0_56 = arith.constant 0 : index
    %c0_57 = arith.constant 0 : index
    %154 = vector.load %arg17[%c0_55, %c0_56, %c0_57] : memref<1x1x32xf32, #tpu.memory_space<vmem>>, vector<1x1x32xf32>
    %155 = vector.shape_cast %154 : vector<1x1x32xf32> to vector<1x32xf32>
    %cst_58 = arith.constant dense<0.000000e+00> : vector<16xf32>
    %156 = vector.multi_reduction <add>, %151, %cst_58 [1] : vector<16x32xf32> to vector<16xf32>
    %157 = vector.shape_cast %156 : vector<16xf32> to vector<16x1xf32>
    %cst_59 = arith.constant 3.200000e+01 : f32
    %158 = vector.broadcast %cst_59 : f32 to vector<16x1xf32>
    %159 = arith.divf %157, %158 : vector<16x1xf32>
    %160 = vector.broadcast %159 : vector<16x1xf32> to vector<16x32xf32>
    %161 = arith.subf %151, %160 : vector<16x32xf32>
    %162 = arith.mulf %161, %161 : vector<16x32xf32>
    %cst_60 = arith.constant dense<0.000000e+00> : vector<16xf32>
    %163 = vector.multi_reduction <add>, %162, %cst_60 [1] : vector<16x32xf32> to vector<16xf32>
    %164 = vector.shape_cast %163 : vector<16xf32> to vector<16x1xf32>
    %cst_61 = arith.constant 3.200000e+01 : f32
    %165 = vector.broadcast %cst_61 : f32 to vector<16x1xf32>
    %166 = arith.divf %164, %165 : vector<16x1xf32>
    %cst_62 = arith.constant 9.99999974E-6 : f32
    %167 = vector.broadcast %cst_62 : f32 to vector<16x1xf32>
    %168 = arith.addf %166, %167 : vector<16x1xf32>
    %169 = math.rsqrt %168 : vector<16x1xf32>
    %170 = vector.broadcast %169 : vector<16x1xf32> to vector<16x32xf32>
    %171 = arith.mulf %161, %170 : vector<16x32xf32>
    %172 = vector.broadcast %153 : vector<1x32xf32> to vector<16x32xf32>
    %173 = arith.mulf %171, %172 : vector<16x32xf32>
    %174 = vector.broadcast %155 : vector<1x32xf32> to vector<16x32xf32>
    %175 = arith.addf %173, %174 : vector<16x32xf32>
    %c0_63 = arith.constant 0 : index
    %c0_64 = arith.constant 0 : index
    %176 = vector.load %arg23[%c0_63, %c0_64] : memref<16x32xf32, #tpu.memory_space<vmem>>, vector<16x32xf32>
    tpu.vector_store %arg23[%c0_63, %c0_64], %175 {strides = array<i32>} : memref<16x32xf32, #tpu.memory_space<vmem>>, vector<16x32xf32>,
    %c1_i32_65 = arith.constant 1 : i32
    %177 = arith.cmpi eq, %arg1, %c1_i32_65 : i32
    %178 = arith.extui %177 : i1 to i32
    %c0_i32_66 = arith.constant 0 : i32
    %179 = arith.cmpi ne, %178, %c0_i32_66 : i32
    scf.if %179 {
      %c0_67 = arith.constant 0 : index
      %c0_68 = arith.constant 0 : index
      %180 = vector.load %arg18[%c0_67, %c0_68] : memref<1x32xf32, #tpu.memory_space<vmem>>, vector<1x32xf32>
      %c0_69 = arith.constant 0 : index
      %c0_70 = arith.constant 0 : index
      %181 = vector.load %arg19[%c0_69, %c0_70] : memref<1x32xf32, #tpu.memory_space<vmem>>, vector<1x32xf32>
      %cst_71 = arith.constant dense<0.000000e+00> : vector<16xf32>
      %182 = vector.multi_reduction <add>, %175, %cst_71 [1] : vector<16x32xf32> to vector<16xf32>
      %183 = vector.shape_cast %182 : vector<16xf32> to vector<16x1xf32>
      %cst_72 = arith.constant 3.200000e+01 : f32
      %184 = vector.broadcast %cst_72 : f32 to vector<16x1xf32>
      %185 = arith.divf %183, %184 : vector<16x1xf32>
      %186 = vector.broadcast %185 : vector<16x1xf32> to vector<16x32xf32>
      %187 = arith.subf %175, %186 : vector<16x32xf32>
      %188 = arith.mulf %187, %187 : vector<16x32xf32>
      %cst_73 = arith.constant dense<0.000000e+00> : vector<16xf32>
      %189 = vector.multi_reduction <add>, %188, %cst_73 [1] : vector<16x32xf32> to vector<16xf32>
      %190 = vector.shape_cast %189 : vector<16xf32> to vector<16x1xf32>
      %cst_74 = arith.constant 3.200000e+01 : f32
      %191 = vector.broadcast %cst_74 : f32 to vector<16x1xf32>
      %192 = arith.divf %190, %191 : vector<16x1xf32>
      %cst_75 = arith.constant 9.99999974E-6 : f32
      %193 = vector.broadcast %cst_75 : f32 to vector<16x1xf32>
      %194 = arith.addf %192, %193 : vector<16x1xf32>
      %195 = math.rsqrt %194 : vector<16x1xf32>
      %196 = vector.broadcast %195 : vector<16x1xf32> to vector<16x32xf32>
      %197 = arith.mulf %187, %196 : vector<16x32xf32>
      %198 = vector.broadcast %180 : vector<1x32xf32> to vector<16x32xf32>
      %199 = arith.mulf %197, %198 : vector<16x32xf32>
      %200 = vector.broadcast %181 : vector<1x32xf32> to vector<16x32xf32>
      %201 = arith.addf %199, %200 : vector<16x32xf32>
      %202 = arith.truncf %201 : vector<16x32xf32> to vector<16x32xbf16>
      %c0_76 = arith.constant 0 : index
      %c0_77 = arith.constant 0 : index
      %203 = vector.load %arg20[%c0_76, %c0_77] : memref<32x128xbf16, #tpu.memory_space<vmem>>, vector<32x128xbf16>
      %cst_78 = arith.constant dense<0.000000e+00> : vector<16x128xf32>
      %204 = tpu.matmul %202, %203, %cst_78 {dimension_numbers = #tpu.dot_dimension_numbers<[1], [0], [0], [1], [0, 0, 1, 1], [], []>} : vector<16x32xbf16>, vector<32x128xbf16>, vector<16x128xf32> -> vector<16x128xf32>
      %c0_79 = arith.constant 0 : index
      %c0_80 = arith.constant 0 : index
      %205 = vector.load %arg21[%c0_79, %c0_80] : memref<1x128xf32, #tpu.memory_space<vmem>>, vector<1x128xf32>
      %206 = vector.broadcast %205 : vector<1x128xf32> to vector<16x128xf32>
      %207 = arith.addf %204, %206 : vector<16x128xf32>
      %208 = vector.shape_cast %207 : vector<16x128xf32> to vector<2x8x128xf32>
      %c0_81 = arith.constant 0 : index
      %c0_82 = arith.constant 0 : index
      %c0_83 = arith.constant 0 : index
      %209 = vector.load %arg22[%c0_81, %c0_82, %c0_83] : memref<2x8x128xf32, #tpu.memory_space<vmem>>, vector<2x8x128xf32>
      tpu.vector_store %arg22[%c0_81, %c0_82, %c0_83], %208 {strides = array<i32>} : memref<2x8x128xf32, #tpu.memory_space<vmem>>, vector<2x8x128xf32>,
    } else {
    }
    return
  }
  func.func @transform_0(%arg0: i32, %arg1: i32) -> (i32, i32, i32) {
    %c0_i32 = arith.constant 0 : i32
    %c0_i32_0 = arith.constant 0 : i32
    %c0_i32_1 = arith.constant 0 : i32
    return %arg0, %c0_i32, %c0_i32_0 : i32, i32, i32
  }
  func.func @transform_1(%arg0: i32, %arg1: i32) -> (i32, i32) {
    %c0_i32 = arith.constant 0 : i32
    %c0_i32_0 = arith.constant 0 : i32
    %c0_i32_1 = arith.constant 0 : i32
    return %c0_i32, %c0_i32_0 : i32, i32
  }
  func.func @transform_2(%arg0: i32, %arg1: i32) -> (i32, i32) {
    %c0_i32 = arith.constant 0 : i32
    %c0_i32_0 = arith.constant 0 : i32
    %c0_i32_1 = arith.constant 0 : i32
    return %c0_i32, %c0_i32_0 : i32, i32
  }
  func.func @transform_3(%arg0: i32, %arg1: i32) -> (i32, i32) {
    %c0_i32 = arith.constant 0 : i32
    %c0_i32_0 = arith.constant 0 : i32
    %c0_i32_1 = arith.constant 0 : i32
    return %c0_i32, %c0_i32_0 : i32, i32
  }
  func.func @transform_4(%arg0: i32, %arg1: i32) -> (i32, i32, i32) {
    %c0_i32 = arith.constant 0 : i32
    %c0_i32_0 = arith.constant 0 : i32
    %c0_i32_1 = arith.constant 0 : i32
    return %arg1, %c0_i32, %c0_i32_0 : i32, i32, i32
  }
  func.func @transform_5(%arg0: i32, %arg1: i32) -> (i32, i32, i32) {
    %c0_i32 = arith.constant 0 : i32
    %c0_i32_0 = arith.constant 0 : i32
    %c0_i32_1 = arith.constant 0 : i32
    return %arg1, %c0_i32, %c0_i32_0 : i32, i32, i32
  }
  func.func @transform_6(%arg0: i32, %arg1: i32) -> (i32, i32, i32) {
    %c0_i32 = arith.constant 0 : i32
    %c0_i32_0 = arith.constant 0 : i32
    %c0_i32_1 = arith.constant 0 : i32
    return %arg1, %c0_i32, %c0_i32_0 : i32, i32, i32
  }
  func.func @transform_7(%arg0: i32, %arg1: i32) -> (i32, i32, i32) {
    %c0_i32 = arith.constant 0 : i32
    %c0_i32_0 = arith.constant 0 : i32
    %c0_i32_1 = arith.constant 0 : i32
    return %arg1, %c0_i32, %c0_i32_0 : i32, i32, i32
  }
  func.func @transform_8(%arg0: i32, %arg1: i32) -> (i32, i32, i32) {
    %c0_i32 = arith.constant 0 : i32
    %c0_i32_0 = arith.constant 0 : i32
    %c0_i32_1 = arith.constant 0 : i32
    return %arg1, %c0_i32, %c0_i32_0 : i32, i32, i32
  }
  func.func @transform_9(%arg0: i32, %arg1: i32) -> (i32, i32, i32) {
    %c0_i32 = arith.constant 0 : i32
    %c0_i32_0 = arith.constant 0 : i32
    %c0_i32_1 = arith.constant 0 : i32
    return %arg1, %c0_i32, %c0_i32_0 : i32, i32, i32
  }
  func.func @transform_10(%arg0: i32, %arg1: i32) -> (i32, i32, i32) {
    %c0_i32 = arith.constant 0 : i32
    %c0_i32_0 = arith.constant 0 : i32
    %c0_i32_1 = arith.constant 0 : i32
    return %arg1, %c0_i32, %c0_i32_0 : i32, i32, i32
  }
  func.func @transform_11(%arg0: i32, %arg1: i32) -> (i32, i32, i32) {
    %c0_i32 = arith.constant 0 : i32
    %c0_i32_0 = arith.constant 0 : i32
    %c0_i32_1 = arith.constant 0 : i32
    return %arg1, %c0_i32, %c0_i32_0 : i32, i32, i32
  }
  func.func @transform_12(%arg0: i32, %arg1: i32) -> (i32, i32, i32) {
    %c0_i32 = arith.constant 0 : i32
    %c0_i32_0 = arith.constant 0 : i32
    %c0_i32_1 = arith.constant 0 : i32
    return %arg1, %c0_i32, %c0_i32_0 : i32, i32, i32
  }
  func.func @transform_13(%arg0: i32, %arg1: i32) -> (i32, i32, i32) {
    %c0_i32 = arith.constant 0 : i32
    %c0_i32_0 = arith.constant 0 : i32
    %c0_i32_1 = arith.constant 0 : i32
    return %arg1, %c0_i32, %c0_i32_0 : i32, i32, i32
  }
  func.func @transform_14(%arg0: i32, %arg1: i32) -> (i32, i32, i32) {
    %c0_i32 = arith.constant 0 : i32
    %c0_i32_0 = arith.constant 0 : i32
    %c0_i32_1 = arith.constant 0 : i32
    return %arg1, %c0_i32, %c0_i32_0 : i32, i32, i32
  }
  func.func @transform_15(%arg0: i32, %arg1: i32) -> (i32, i32, i32) {
    %c0_i32 = arith.constant 0 : i32
    %c0_i32_0 = arith.constant 0 : i32
    %c0_i32_1 = arith.constant 0 : i32
    return %arg1, %c0_i32, %c0_i32_0 : i32, i32, i32
  }
  func.func @transform_16(%arg0: i32, %arg1: i32) -> (i32, i32) {
    %c0_i32 = arith.constant 0 : i32
    %c0_i32_0 = arith.constant 0 : i32
    %c0_i32_1 = arith.constant 0 : i32
    return %c0_i32, %c0_i32_0 : i32, i32
  }
  func.func @transform_17(%arg0: i32, %arg1: i32) -> (i32, i32) {
    %c0_i32 = arith.constant 0 : i32
    %c0_i32_0 = arith.constant 0 : i32
    %c0_i32_1 = arith.constant 0 : i32
    return %c0_i32, %c0_i32_0 : i32, i32
  }
  func.func @transform_18(%arg0: i32, %arg1: i32) -> (i32, i32) {
    %c0_i32 = arith.constant 0 : i32
    %c0_i32_0 = arith.constant 0 : i32
    %c0_i32_1 = arith.constant 0 : i32
    return %c0_i32, %c0_i32_0 : i32, i32
  }
  func.func @transform_19(%arg0: i32, %arg1: i32) -> (i32, i32) {
    %c0_i32 = arith.constant 0 : i32
    %c0_i32_0 = arith.constant 0 : i32
    %c0_i32_1 = arith.constant 0 : i32
    return %c0_i32, %c0_i32_0 : i32, i32
  }
  func.func @transform_20(%arg0: i32, %arg1: i32) -> (i32, i32, i32) {
    %c0_i32 = arith.constant 0 : i32
    %c0_i32_0 = arith.constant 0 : i32
    %c0_i32_1 = arith.constant 0 : i32
    return %arg0, %c0_i32, %c0_i32_0 : i32, i32, i32
  }
}

</mosaic_0001>

<llo_original>
// kernel: tpu_custom_call.1
$region0: #{tpu_custom_call.1}
  #allocation0 [shape = 'u32[]', space=smem, size = 0x4, offset = 0x4, fixed_abs, tag = 'smem constant byte address 0x4 - core index']
  #allocation1 [shape = 'u32[144,128]{1,0:T(1,128)}', space=vmem, size = 0x12000, scoped, tag = 'internal scratch']
  #allocation2 [shape = 'f32[16,32]{1,0:T(8,128)}', space=vmem, size = 0x2000, scoped, tag = 'scratch operand']
  %s0 = inlined_call_operand.vmem [shape: f32[2,8,128], index: 0, kind: input, shape index: {}]
  %s1 = inlined_call_operand.vmem [shape: bf16[128,32], index: 1, kind: input, shape index: {}]
  %s2 = inlined_call_operand.vmem [shape: f32[1,32], index: 2, kind: input, shape index: {}]
  %s3 = inlined_call_operand.vmem [shape: f32[8,32], index: 3, kind: input, shape index: {}]
  %s4 = inlined_call_operand.vmem [shape: bf16[2,32,96], index: 4, kind: input, shape index: {}]
  %s5 = inlined_call_operand.vmem [shape: f32[2,1,96], index: 5, kind: input, shape index: {}]
  %s6 = inlined_call_operand.vmem [shape: bf16[2,32,32], index: 6, kind: input, shape index: {}]
  %s7 = inlined_call_operand.vmem [shape: f32[2,1,32], index: 7, kind: input, shape index: {}]
  %s8 = inlined_call_operand.vmem [shape: f32[2,1,32], index: 8, kind: input, shape index: {}]
  %s9 = inlined_call_operand.vmem [shape: f32[2,1,32], index: 9, kind: input, shape index: {}]
  %s10 = inlined_call_operand.vmem [shape: bf16[2,32,2048], index: 10, kind: input, shape index: {}]
  %s11 = inlined_call_operand.vmem [shape: f32[2,1,2048], index: 11, kind: input, shape index: {}]
  %s12 = inlined_call_operand.vmem [shape: bf16[2,2048,32], index: 12, kind: input, shape index: {}]
  %s13 = inlined_call_operand.vmem [shape: f32[2,1,32], index: 13, kind: input, shape index: {}]
  %s14 = inlined_call_operand.vmem [shape: f32[2,1,32], index: 14, kind: input, shape index: {}]
  %s15 = inlined_call_operand.vmem [shape: f32[2,1,32], index: 15, kind: input, shape index: {}]
  %s16 = inlined_call_operand.vmem [shape: f32[1,32], index: 16, kind: input, shape index: {}]
  %s17 = inlined_call_operand.vmem [shape: f32[1,32], index: 17, kind: input, shape index: {}]
  %s18 = inlined_call_operand.vmem [shape: bf16[32,128], index: 18, kind: input, shape index: {}]
  %s19 = inlined_call_operand.vmem [shape: f32[1,128], index: 19, kind: input, shape index: {}]
  %s20 = inlined_call_operand.hbm [shape: f32[2,8,128], index: 20, kind: output, shape index: {}]
  %s21 = sld [smem:[#allocation0]]
  $region128: #{tpu_custom_call.1} parent=0
    _
  %s23 = ssub.s32 1, %s21
  %s24 = scalar_select 0, %s23, %s21
  $region1: #{tpu_custom_call.1} parent=0
    #allocation3 [shape = 'u8[8192]{0}', space=vmem, size = 0x2000, scoped, tag = 'output window, operand 0, single buffered']
    #allocation4 [shape = 's32[2]{0}', space=sflag, size = 0x8, scoped, tag = 'scoped memory for tpu_custom_call.1']
    %25 = vsyncpa [#allocation4], 0
    loop: start=0, step=1, limit=4
    $region2: #{tpu_custom_call.1} parent=1 // loop_pre_header
      _
    $region3: #{tpu_custom_call.1} parent=1 // loop_header
      %s27 = sphi 0, %s31
      %p28 = scmp.ge.s32.totalorder %s27, 4
      %s34 = sphi 0, %s46
      %s35 = sphi 0, %s42
      %s36 = sphi 0, %s34
      %s37 = sphi 0, %s35
      %s38 = sphi 0, %s36
      %s39 = sphi 0, %s37
      %s49 = sphi 0, %s51
      %s52 = sphi 0, %s49
      %s53 = sphi 0, %s52
      %s69 = sphi 0, %s53
      %s73 = sphi 0, %s73
      %s75 = sphi 0, %s73
      %s76 = sphi 0, %s75
      %s90 = sphi 0, %s76
      %s94 = sphi 0, %s94
      %s96 = sphi 0, %s94
      %s97 = sphi 0, %s96
      %s111 = sphi 0, %s97
      %s115 = sphi 0, %s115
      %s117 = sphi 0, %s115
      %s118 = sphi 0, %s117
      %s132 = sphi 0, %s118
      %s138 = sphi 0, %s140
      %s141 = sphi 0, %s138
      %s142 = sphi 0, %s141
      %s158 = sphi 0, %s142
      %s164 = sphi 0, %s166
      %s167 = sphi 0, %s164
      %s168 = sphi 0, %s167
      %s184 = sphi 0, %s168
      %s190 = sphi 0, %s192
      %s193 = sphi 0, %s190
      %s194 = sphi 0, %s193
      %s210 = sphi 0, %s194
      %s216 = sphi 0, %s218
      %s219 = sphi 0, %s216
      %s220 = sphi 0, %s219
      %s236 = sphi 0, %s220
      %s242 = sphi 0, %s244
      %s245 = sphi 0, %s242
      %s246 = sphi 0, %s245
      %s262 = sphi 0, %s246
      %s268 = sphi 0, %s270
      %s271 = sphi 0, %s268
      %s272 = sphi 0, %s271
      %s288 = sphi 0, %s272
      %s294 = sphi 0, %s296
      %s297 = sphi 0, %s294
      %s298 = sphi 0, %s297
      %s314 = sphi 0, %s298
      %s320 = sphi 0, %s322
      %s323 = sphi 0, %s320
      %s324 = sphi 0, %s323
      %s340 = sphi 0, %s324
      %s346 = sphi 0, %s348
      %s349 = sphi 0, %s346
      %s350 = sphi 0, %s349
      %s366 = sphi 0, %s350
      %s372 = sphi 0, %s374
      %s375 = sphi 0, %s372
      %s376 = sphi 0, %s375
      %s392 = sphi 0, %s376
      %s398 = sphi 0, %s400
      %s401 = sphi 0, %s398
      %s402 = sphi 0, %s401
      %s418 = sphi 0, %s402
      %s424 = sphi 0, %s426
      %s427 = sphi 0, %s424
      %s428 = sphi 0, %s427
      %s444 = sphi 0, %s428
      %s448 = sphi 0, %s448
      %s450 = sphi 0, %s448
      %s451 = sphi 0, %s450
      %s465 = sphi 0, %s451
      %s469 = sphi 0, %s469
      %s471 = sphi 0, %s469
      %s472 = sphi 0, %s471
      %s486 = sphi 0, %s472
      %s490 = sphi 0, %s490
      %s492 = sphi 0, %s490
      %s493 = sphi 0, %s492
      %s507 = sphi 0, %s493
      %s511 = sphi 0, %s511
      %s513 = sphi 0, %s511
      %s514 = sphi 0, %s513
      %s528 = sphi 0, %s514
      %s534 = sphi 0, %s536
      %s537 = sphi 0, %s534
      %s538 = sphi 0, %s537
      %s554 = sphi 0, %s538
    $region4: #{tpu_custom_call.1} parent=1 // loop_header_branch
      %30 = sbr.rel (%p28) target = $region8
    $region5: #{tpu_custom_call.1} parent=1 // loop_body
      %s32 = ssub.s32 %s27, 1
      %s33 = ssub.s32 %s27, 2
      %s40 = sadd.s32 1, %s35
      %p41 = scmp.ge.s32.totalorder %s40, 2
      %s42 = scalar_select %p41, 0, %s40
      %s43 = sadd.s32 1, %s34
      %s44 = scalar_select %p41, %s43, %s34
      %p45 = scmp.ge.s32.totalorder %s44, 1
      %s46 = scalar_select %p45, 0, %s44
      %s47 = ssub.s32 %s34, %s46
      %p48 = scmp.eq.s32.totalorder %s47, 0
      %s50 = sadd.s32 %s49, 1
      %s51 = scalar_select %p48, %s49, %s50
      %p54 = pneg %p48
      %p55 = scmp.eq.s32.totalorder %s27, 1
      %p56 = por %p54, %p55
      %p57 = scmp.ne.s32.totalorder %s49, %s52
      %p58 = scmp.eq.s32.totalorder %s27, 0
      %p59 = por %p57, %p58
      %p60 = scmp.ne.s32.totalorder %s49, %s52
      %p61 = scmp.eq.s32.totalorder %s32, 1
      %p62 = por %p60, %p61
      %p63 = scmp.ne.s32.totalorder %s52, %s53
      %p64 = scmp.eq.s32.totalorder %s32, 0
      %p65 = por %p63, %p64
      %p66 = scmp.ne.s32.totalorder %s52, %s53
      %p67 = scmp.eq.s32.totalorder %s33, 1
      %p68 = por %p66, %p67
      %p70 = scmp.ne.s32.totalorder %s53, %s69
      %p71 = scmp.eq.s32.totalorder %s33, 0
      %p72 = por %p70, %p71
      %s74 = sadd.s32 %s73, 1
      %p77 = scmp.eq.s32.totalorder %s27, 1
      %p78 = scmp.ne.s32.totalorder %s73, %s75
      %p79 = scmp.eq.s32.totalorder %s27, 0
      %p80 = por %p78, %p79
      %p81 = scmp.ne.s32.totalorder %s73, %s75
      %p82 = scmp.eq.s32.totalorder %s32, 1
      %p83 = por %p81, %p82
      %p84 = scmp.ne.s32.totalorder %s75, %s76
      %p85 = scmp.eq.s32.totalorder %s32, 0
      %p86 = por %p84, %p85
      %p87 = scmp.ne.s32.totalorder %s75, %s76
      %p88 = scmp.eq.s32.totalorder %s33, 1
      %p89 = por %p87, %p88
      %p91 = scmp.ne.s32.totalorder %s76, %s90
      %p92 = scmp.eq.s32.totalorder %s33, 0
      %p93 = por %p91, %p92
      %s95 = sadd.s32 %s94, 1
      %p98 = scmp.eq.s32.totalorder %s27, 1
      %p99 = scmp.ne.s32.totalorder %s94, %s96
      %p100 = scmp.eq.s32.totalorder %s27, 0
      %p101 = por %p99, %p100
      %p102 = scmp.ne.s32.totalorder %s94, %s96
      %p103 = scmp.eq.s32.totalorder %s32, 1
      %p104 = por %p102, %p103
      %p105 = scmp.ne.s32.totalorder %s96, %s97
      %p106 = scmp.eq.s32.totalorder %s32, 0
      %p107 = por %p105, %p106
      %p108 = scmp.ne.s32.totalorder %s96, %s97
      %p109 = scmp.eq.s32.totalorder %s33, 1
      %p110 = por %p108, %p109
      %p112 = scmp.ne.s32.totalorder %s97, %s111
      %p113 = scmp.eq.s32.totalorder %s33, 0
      %p114 = por %p112, %p113
      %s116 = sadd.s32 %s115, 1
      %p119 = scmp.eq.s32.totalorder %s27, 1
      %p120 = scmp.ne.s32.totalorder %s115, %s117
      %p121 = scmp.eq.s32.totalorder %s27, 0
      %p122 = por %p120, %p121
      %p123 = scmp.ne.s32.totalorder %s115, %s117
      %p124 = scmp.eq.s32.totalorder %s32, 1
      %p125 = por %p123, %p124
      %p126 = scmp.ne.s32.totalorder %s117, %s118
      %p127 = scmp.eq.s32.totalorder %s32, 0
      %p128 = por %p126, %p127
      %p129 = scmp.ne.s32.totalorder %s117, %s118
      %p130 = scmp.eq.s32.totalorder %s33, 1
      %p131 = por %p129, %p130
      %p133 = scmp.ne.s32.totalorder %s118, %s132
      %p134 = scmp.eq.s32.totalorder %s33, 0
      %p135 = por %p133, %p134
      %s136 = ssub.s32 %s35, %s42
      %p137 = scmp.eq.s32.totalorder %s136, 0
      %s139 = sadd.s32 %s138, 1
      %s140 = scalar_select %p137, %s138, %s139
      %p143 = pneg %p137
      %p144 = scmp.eq.s32.totalorder %s27, 1
      %p145 = por %p143, %p144
      %p146 = scmp.ne.s32.totalorder %s138, %s141
      %p147 = scmp.eq.s32.totalorder %s27, 0
      %p148 = por %p146, %p147
      %p149 = scmp.ne.s32.totalorder %s138, %s141
      %p150 = scmp.eq.s32.totalorder %s32, 1
      %p151 = por %p149, %p150
      %p152 = scmp.ne.s32.totalorder %s141, %s142
      %p153 = scmp.eq.s32.totalorder %s32, 0
      %p154 = por %p152, %p153
      %p155 = scmp.ne.s32.totalorder %s141, %s142
      %p156 = scmp.eq.s32.totalorder %s33, 1
      %p157 = por %p155, %p156
      %p159 = scmp.ne.s32.totalorder %s142, %s158
      %p160 = scmp.eq.s32.totalorder %s33, 0
      %p161 = por %p159, %p160
      %s162 = ssub.s32 %s35, %s42
      %p163 = scmp.eq.s32.totalorder %s162, 0
      %s165 = sadd.s32 %s164, 1
      %s166 = scalar_select %p163, %s164, %s165
      %p169 = pneg %p163
      %p170 = scmp.eq.s32.totalorder %s27, 1
      %p171 = por %p169, %p170
      %p172 = scmp.ne.s32.totalorder %s164, %s167
      %p173 = scmp.eq.s32.totalorder %s27, 0
      %p174 = por %p172, %p173
      %p175 = scmp.ne.s32.totalorder %s164, %s167
      %p176 = scmp.eq.s32.totalorder %s32, 1
      %p177 = por %p175, %p176
      %p178 = scmp.ne.s32.totalorder %s167, %s168
      %p179 = scmp.eq.s32.totalorder %s32, 0
      %p180 = por %p178, %p179
      %p181 = scmp.ne.s32.totalorder %s167, %s168
      %p182 = scmp.eq.s32.totalorder %s33, 1
      %p183 = por %p181, %p182
      %p185 = scmp.ne.s32.totalorder %s168, %s184
      %p186 = scmp.eq.s32.totalorder %s33, 0
      %p187 = por %p185, %p186
      %s188 = ssub.s32 %s35, %s42
      %p189 = scmp.eq.s32.totalorder %s188, 0
      %s191 = sadd.s32 %s190, 1
      %s192 = scalar_select %p189, %s190, %s191
      %p195 = pneg %p189
      %p196 = scmp.eq.s32.totalorder %s27, 1
      %p197 = por %p195, %p196
      %p198 = scmp.ne.s32.totalorder %s190, %s193
      %p199 = scmp.eq.s32.totalorder %s27, 0
      %p200 = por %p198, %p199
      %p201 = scmp.ne.s32.totalorder %s190, %s193
      %p202 = scmp.eq.s32.totalorder %s32, 1
      %p203 = por %p201, %p202
      %p204 = scmp.ne.s32.totalorder %s193, %s194
      %p205 = scmp.eq.s32.totalorder %s32, 0
      %p206 = por %p204, %p205
      %p207 = scmp.ne.s32.totalorder %s193, %s194
      %p208 = scmp.eq.s32.totalorder %s33, 1
      %p209 = por %p207, %p208
      %p211 = scmp.ne.s32.totalorder %s194, %s210
      %p212 = scmp.eq.s32.totalorder %s33, 0
      %p213 = por %p211, %p212
      %s214 = ssub.s32 %s35, %s42
      %p215 = scmp.eq.s32.totalorder %s214, 0
      %s217 = sadd.s32 %s216, 1
      %s218 = scalar_select %p215, %s216, %s217
      %p221 = pneg %p215
      %p222 = scmp.eq.s32.totalorder %s27, 1
      %p223 = por %p221, %p222
      %p224 = scmp.ne.s32.totalorder %s216, %s219
      %p225 = scmp.eq.s32.totalorder %s27, 0
      %p226 = por %p224, %p225
      %p227 = scmp.ne.s32.totalorder %s216, %s219
      %p228 = scmp.eq.s32.totalorder %s32, 1
      %p229 = por %p227, %p228
      %p230 = scmp.ne.s32.totalorder %s219, %s220
      %p231 = scmp.eq.s32.totalorder %s32, 0
      %p232 = por %p230, %p231
      %p233 = scmp.ne.s32.totalorder %s219, %s220
      %p234 = scmp.eq.s32.totalorder %s33, 1
      %p235 = por %p233, %p234
      %p237 = scmp.ne.s32.totalorder %s220, %s236
      %p238 = scmp.eq.s32.totalorder %s33, 0
      %p239 = por %p237, %p238
      %s240 = ssub.s32 %s35, %s42
      %p241 = scmp.eq.s32.totalorder %s240, 0
      %s243 = sadd.s32 %s242, 1
      %s244 = scalar_select %p241, %s242, %s243
      %p247 = pneg %p241
      %p248 = scmp.eq.s32.totalorder %s27, 1
      %p249 = por %p247, %p248
      %p250 = scmp.ne.s32.totalorder %s242, %s245
      %p251 = scmp.eq.s32.totalorder %s27, 0
      %p252 = por %p250, %p251
      %p253 = scmp.ne.s32.totalorder %s242, %s245
      %p254 = scmp.eq.s32.totalorder %s32, 1
      %p255 = por %p253, %p254
      %p256 = scmp.ne.s32.totalorder %s245, %s246
      %p257 = scmp.eq.s32.totalorder %s32, 0
      %p258 = por %p256, %p257
      %p259 = scmp.ne.s32.totalorder %s245, %s246
      %p260 = scmp.eq.s32.totalorder %s33, 1
      %p261 = por %p259, %p260
      %p263 = scmp.ne.s32.totalorder %s246, %s262
      %p264 = scmp.eq.s32.totalorder %s33, 0
      %p265 = por %p263, %p264
      %s266 = ssub.s32 %s35, %s42
      %p267 = scmp.eq.s32.totalorder %s266, 0
      %s269 = sadd.s32 %s268, 1
      %s270 = scalar_select %p267, %s268, %s269
      %p273 = pneg %p267
      %p274 = scmp.eq.s32.totalorder %s27, 1
      %p275 = por %p273, %p274
      %p276 = scmp.ne.s32.totalorder %s268, %s271
      %p277 = scmp.eq.s32.totalorder %s27, 0
      %p278 = por %p276, %p277
      %p279 = scmp.ne.s32.totalorder %s268, %s271
      %p280 = scmp.eq.s32.totalorder %s32, 1
      %p281 = por %p279, %p280
      %p282 = scmp.ne.s32.totalorder %s271, %s272
      %p283 = scmp.eq.s32.totalorder %s32, 0
      %p284 = por %p282, %p283
      %p285 = scmp.ne.s32.totalorder %s271, %s272
      %p286 = scmp.eq.s32.totalorder %s33, 1
      %p287 = por %p285, %p286
      %p289 = scmp.ne.s32.totalorder %s272, %s288
      %p290 = scmp.eq.s32.totalorder %s33, 0
      %p291 = por %p289, %p290
      %s292 = ssub.s32 %s35, %s42
      %p293 = scmp.eq.s32.totalorder %s292, 0
      %s295 = sadd.s32 %s294, 1
      %s296 = scalar_select %p293, %s294, %s295
      %p299 = pneg %p293
      %p300 = scmp.eq.s32.totalorder %s27, 1
      %p301 = por %p299, %p300
      %p302 = scmp.ne.s32.totalorder %s294, %s297
      %p303 = scmp.eq.s32.totalorder %s27, 0
      %p304 = por %p302, %p303
      %p305 = scmp.ne.s32.totalorder %s294, %s297
      %p306 = scmp.eq.s32.totalorder %s32, 1
      %p307 = por %p305, %p306
      %p308 = scmp.ne.s32.totalorder %s297, %s298
      %p309 = scmp.eq.s32.totalorder %s32, 0
      %p310 = por %p308, %p309
      %p311 = scmp.ne.s32.totalorder %s297, %s298
      %p312 = scmp.eq.s32.totalorder %s33, 1
      %p313 = por %p311, %p312
      %p315 = scmp.ne.s32.totalorder %s298, %s314
      %p316 = scmp.eq.s32.totalorder %s33, 0
      %p317 = por %p315, %p316
      %s318 = ssub.s32 %s35, %s42
      %p319 = scmp.eq.s32.totalorder %s318, 0
      %s321 = sadd.s32 %s320, 1
      %s322 = scalar_select %p319, %s320, %s321
      %p325 = pneg %p319
      %p326 = scmp.eq.s32.totalorder %s27, 1
      %p327 = por %p325, %p326
      %p328 = scmp.ne.s32.totalorder %s320, %s323
      %p329 = scmp.eq.s32.totalorder %s27, 0
      %p330 = por %p328, %p329
      %p331 = scmp.ne.s32.totalorder %s320, %s323
      %p332 = scmp.eq.s32.totalorder %s32, 1
      %p333 = por %p331, %p332
      %p334 = scmp.ne.s32.totalorder %s323, %s324
      %p335 = scmp.eq.s32.totalorder %s32, 0
      %p336 = por %p334, %p335
      %p337 = scmp.ne.s32.totalorder %s323, %s324
      %p338 = scmp.eq.s32.totalorder %s33, 1
      %p339 = por %p337, %p338
      %p341 = scmp.ne.s32.totalorder %s324, %s340
      %p342 = scmp.eq.s32.totalorder %s33, 0
      %p343 = por %p341, %p342
      %s344 = ssub.s32 %s35, %s42
      %p345 = scmp.eq.s32.totalorder %s344, 0
      %s347 = sadd.s32 %s346, 1
      %s348 = scalar_select %p345, %s346, %s347
      %p351 = pneg %p345
      %p352 = scmp.eq.s32.totalorder %s27, 1
      %p353 = por %p351, %p352
      %p354 = scmp.ne.s32.totalorder %s346, %s349
      %p355 = scmp.eq.s32.totalorder %s27, 0
      %p356 = por %p354, %p355
      %p357 = scmp.ne.s32.totalorder %s346, %s349
      %p358 = scmp.eq.s32.totalorder %s32, 1
      %p359 = por %p357, %p358
      %p360 = scmp.ne.s32.totalorder %s349, %s350
      %p361 = scmp.eq.s32.totalorder %s32, 0
      %p362 = por %p360, %p361
      %p363 = scmp.ne.s32.totalorder %s349, %s350
      %p364 = scmp.eq.s32.totalorder %s33, 1
      %p365 = por %p363, %p364
      %p367 = scmp.ne.s32.totalorder %s350, %s366
      %p368 = scmp.eq.s32.totalorder %s33, 0
      %p369 = por %p367, %p368
      %s370 = ssub.s32 %s35, %s42
      %p371 = scmp.eq.s32.totalorder %s370, 0
      %s373 = sadd.s32 %s372, 1
      %s374 = scalar_select %p371, %s372, %s373
      %p377 = pneg %p371
      %p378 = scmp.eq.s32.totalorder %s27, 1
      %p379 = por %p377, %p378
      %p380 = scmp.ne.s32.totalorder %s372, %s375
      %p381 = scmp.eq.s32.totalorder %s27, 0
      %p382 = por %p380, %p381
      %p383 = scmp.ne.s32.totalorder %s372, %s375
      %p384 = scmp.eq.s32.totalorder %s32, 1
      %p385 = por %p383, %p384
      %p386 = scmp.ne.s32.totalorder %s375, %s376
      %p387 = scmp.eq.s32.totalorder %s32, 0
      %p388 = por %p386, %p387
      %p389 = scmp.ne.s32.totalorder %s375, %s376
      %p390 = scmp.eq.s32.totalorder %s33, 1
      %p391 = por %p389, %p390
      %p393 = scmp.ne.s32.totalorder %s376, %s392
      %p394 = scmp.eq.s32.totalorder %s33, 0
      %p395 = por %p393, %p394
      %s396 = ssub.s32 %s35, %s42
      %p397 = scmp.eq.s32.totalorder %s396, 0
      %s399 = sadd.s32 %s398, 1
      %s400 = scalar_select %p397, %s398, %s399
      %p403 = pneg %p397
      %p404 = scmp.eq.s32.totalorder %s27, 1
      %p405 = por %p403, %p404
      %p406 = scmp.ne.s32.totalorder %s398, %s401
      %p407 = scmp.eq.s32.totalorder %s27, 0
      %p408 = por %p406, %p407
      %p409 = scmp.ne.s32.totalorder %s398, %s401
      %p410 = scmp.eq.s32.totalorder %s32, 1
      %p411 = por %p409, %p410
      %p412 = scmp.ne.s32.totalorder %s401, %s402
      %p413 = scmp.eq.s32.totalorder %s32, 0
      %p414 = por %p412, %p413
      %p415 = scmp.ne.s32.totalorder %s401, %s402
      %p416 = scmp.eq.s32.totalorder %s33, 1
      %p417 = por %p415, %p416
      %p419 = scmp.ne.s32.totalorder %s402, %s418
      %p420 = scmp.eq.s32.totalorder %s33, 0
      %p421 = por %p419, %p420
      %s422 = ssub.s32 %s35, %s42
      %p423 = scmp.eq.s32.totalorder %s422, 0
      %s425 = sadd.s32 %s424, 1
      %s426 = scalar_select %p423, %s424, %s425
      %p429 = pneg %p423
      %p430 = scmp.eq.s32.totalorder %s27, 1
      %p431 = por %p429, %p430
      %p432 = scmp.ne.s32.totalorder %s424, %s427
      %p433 = scmp.eq.s32.totalorder %s27, 0
      %p434 = por %p432, %p433
      %p435 = scmp.ne.s32.totalorder %s424, %s427
      %p436 = scmp.eq.s32.totalorder %s32, 1
      %p437 = por %p435, %p436
      %p438 = scmp.ne.s32.totalorder %s427, %s428
      %p439 = scmp.eq.s32.totalorder %s32, 0
      %p440 = por %p438, %p439
      %p441 = scmp.ne.s32.totalorder %s427, %s428
      %p442 = scmp.eq.s32.totalorder %s33, 1
      %p443 = por %p441, %p442
      %p445 = scmp.ne.s32.totalorder %s428, %s444
      %p446 = scmp.eq.s32.totalorder %s33, 0
      %p447 = por %p445, %p446
      %s449 = sadd.s32 %s448, 1
      %p452 = scmp.eq.s32.totalorder %s27, 1
      %p453 = scmp.ne.s32.totalorder %s448, %s450
      %p454 = scmp.eq.s32.totalorder %s27, 0
      %p455 = por %p453, %p454
      %p456 = scmp.ne.s32.totalorder %s448, %s450
      %p457 = scmp.eq.s32.totalorder %s32, 1
      %p458 = por %p456, %p457
      %p459 = scmp.ne.s32.totalorder %s450, %s451
      %p460 = scmp.eq.s32.totalorder %s32, 0
      %p461 = por %p459, %p460
      %p462 = scmp.ne.s32.totalorder %s450, %s451
      %p463 = scmp.eq.s32.totalorder %s33, 1
      %p464 = por %p462, %p463
      %p466 = scmp.ne.s32.totalorder %s451, %s465
      %p467 = scmp.eq.s32.totalorder %s33, 0
      %p468 = por %p466, %p467
      %s470 = sadd.s32 %s469, 1
      %p473 = scmp.eq.s32.totalorder %s27, 1
      %p474 = scmp.ne.s32.totalorder %s469, %s471
      %p475 = scmp.eq.s32.totalorder %s27, 0
      %p476 = por %p474, %p475
      %p477 = scmp.ne.s32.totalorder %s469, %s471
      %p478 = scmp.eq.s32.totalorder %s32, 1
      %p479 = por %p477, %p478
      %p480 = scmp.ne.s32.totalorder %s471, %s472
      %p481 = scmp.eq.s32.totalorder %s32, 0
      %p482 = por %p480, %p481
      %p483 = scmp.ne.s32.totalorder %s471, %s472
      %p484 = scmp.eq.s32.totalorder %s33, 1
      %p485 = por %p483, %p484
      %p487 = scmp.ne.s32.totalorder %s472, %s486
      %p488 = scmp.eq.s32.totalorder %s33, 0
      %p489 = por %p487, %p488
      %s491 = sadd.s32 %s490, 1
      %p494 = scmp.eq.s32.totalorder %s27, 1
      %p495 = scmp.ne.s32.totalorder %s490, %s492
      %p496 = scmp.eq.s32.totalorder %s27, 0
      %p497 = por %p495, %p496
      %p498 = scmp.ne.s32.totalorder %s490, %s492
      %p499 = scmp.eq.s32.totalorder %s32, 1
      %p500 = por %p498, %p499
      %p501 = scmp.ne.s32.totalorder %s492, %s493
      %p502 = scmp.eq.s32.totalorder %s32, 0
      %p503 = por %p501, %p502
      %p504 = scmp.ne.s32.totalorder %s492, %s493
      %p505 = scmp.eq.s32.totalorder %s33, 1
      %p506 = por %p504, %p505
      %p508 = scmp.ne.s32.totalorder %s493, %s507
      %p509 = scmp.eq.s32.totalorder %s33, 0
      %p510 = por %p508, %p509
      %s512 = sadd.s32 %s511, 1
      %p515 = scmp.eq.s32.totalorder %s27, 1
      %p516 = scmp.ne.s32.totalorder %s511, %s513
      %p517 = scmp.eq.s32.totalorder %s27, 0
      %p518 = por %p516, %p517
      %p519 = scmp.ne.s32.totalorder %s511, %s513
      %p520 = scmp.eq.s32.totalorder %s32, 1
      %p521 = por %p519, %p520
      %p522 = scmp.ne.s32.totalorder %s513, %s514
      %p523 = scmp.eq.s32.totalorder %s32, 0
      %p524 = por %p522, %p523
      %p525 = scmp.ne.s32.totalorder %s513, %s514
      %p526 = scmp.eq.s32.totalorder %s33, 1
      %p527 = por %p525, %p526
      %p529 = scmp.ne.s32.totalorder %s514, %s528
      %p530 = scmp.eq.s32.totalorder %s33, 0
      %p531 = por %p529, %p530
      %s532 = ssub.s32 %s34, %s46
      %p533 = scmp.eq.s32.totalorder %s532, 0
      %s535 = sadd.s32 %s534, 1
      %s536 = scalar_select %p533, %s534, %s535
      %p539 = pneg %p533
      %p540 = scmp.eq.s32.totalorder %s27, 1
      %p541 = por %p539, %p540
      %p542 = scmp.ne.s32.totalorder %s534, %s537
      %p543 = scmp.eq.s32.totalorder %s27, 0
      %p544 = por %p542, %p543
      %p545 = scmp.ne.s32.totalorder %s534, %s537
      %p546 = scmp.eq.s32.totalorder %s32, 1
      %p547 = por %p545, %p546
      %p548 = scmp.ne.s32.totalorder %s537, %s538
      %p549 = scmp.eq.s32.totalorder %s32, 0
      %p550 = por %p548, %p549
      %p551 = scmp.ne.s32.totalorder %s537, %s538
      %p552 = scmp.eq.s32.totalorder %s33, 1
      %p553 = por %p551, %p552
      %p555 = scmp.ne.s32.totalorder %s538, %s554
      %p556 = scmp.eq.s32.totalorder %s33, 0
      %p557 = por %p555, %p556
      %p558 = scmp.le.s32.totalorder 1, %s27
      %p559 = scmp.lt.s32.totalorder %s27, 3
      %p560 = pnand %p558, %p559
      %p561 = pneg %p560
      // Predicated region
      $region9: #{tpu_custom_call.1} parent=5 // pred_check
        _
      $region10: #{tpu_custom_call.1} parent=5 // pred_check_branch
        %563 = sbr.rel (%p560) target = $region12
      $region11: #{tpu_custom_call.1} parent=5 // pred_region
        %s564 = ssub.s32 %s27, 1
        // Predicated region
        $region13: #{tpu_custom_call.1} parent=11 // pred_check
          %p565 = pneg %p65
        $region14: #{tpu_custom_call.1} parent=11 // pred_check_branch
          %567 = sbr.rel (%p565) target = $region16
        $region15: #{tpu_custom_call.1} parent=11 // pred_region
          %s568 = smul.u32 2, %s36
          %p569 = scmp.lt.s32.totalorder %s568, 1
          %s570 = scalar_select %p569, %s568, 1
          %s571 = smul.addr %s570, 8
          %s572 = scalar_lea.vmem %s0, %s571
          %s573 = smul.u32 2, %s36
        $region16: #{tpu_custom_call.1} parent=11 // pred_fallthru
          _
        // Predicated region
        $region17: #{tpu_custom_call.1} parent=11 // pred_check
          %p574 = pneg %p86
        $region18: #{tpu_custom_call.1} parent=11 // pred_check_branch
          %576 = sbr.rel (%p574) target = $region20
        $region19: #{tpu_custom_call.1} parent=11 // pred_region
          _
        $region20: #{tpu_custom_call.1} parent=11 // pred_fallthru
          _
        // Predicated region
        $region21: #{tpu_custom_call.1} parent=11 // pred_check
          %p577 = pneg %p107
        $region22: #{tpu_custom_call.1} parent=11 // pred_check_branch
          %579 = sbr.rel (%p577) target = $region24
        $region23: #{tpu_custom_call.1} parent=11 // pred_region
          _
        $region24: #{tpu_custom_call.1} parent=11 // pred_fallthru
          _
        // Predicated region
        $region25: #{tpu_custom_call.1} parent=11 // pred_check
          %p580 = pneg %p128
        $region26: #{tpu_custom_call.1} parent=11 // pred_check_branch
          %582 = sbr.rel (%p580) target = $region28
        $region27: #{tpu_custom_call.1} parent=11 // pred_region
          _
        $region28: #{tpu_custom_call.1} parent=11 // pred_fallthru
          _
        // Predicated region
        $region29: #{tpu_custom_call.1} parent=11 // pred_check
          %p583 = pneg %p461
        $region30: #{tpu_custom_call.1} parent=11 // pred_check_branch
          %585 = sbr.rel (%p583) target = $region32
        $region31: #{tpu_custom_call.1} parent=11 // pred_region
          _
        $region32: #{tpu_custom_call.1} parent=11 // pred_fallthru
          _
        // Predicated region
        $region33: #{tpu_custom_call.1} parent=11 // pred_check
          %p586 = pneg %p482
        $region34: #{tpu_custom_call.1} parent=11 // pred_check_branch
          %588 = sbr.rel (%p586) target = $region36
        $region35: #{tpu_custom_call.1} parent=11 // pred_region
          _
        $region36: #{tpu_custom_call.1} parent=11 // pred_fallthru
          _
        // Predicated region
        $region37: #{tpu_custom_call.1} parent=11 // pred_check
          %p589 = pneg %p503
        $region38: #{tpu_custom_call.1} parent=11 // pred_check_branch
          %591 = sbr.rel (%p589) target = $region40
        $region39: #{tpu_custom_call.1} parent=11 // pred_region
          _
        $region40: #{tpu_custom_call.1} parent=11 // pred_fallthru
          _
        // Predicated region
        $region41: #{tpu_custom_call.1} parent=11 // pred_check
          %p592 = pneg %p524
        $region42: #{tpu_custom_call.1} parent=11 // pred_check_branch
          %594 = sbr.rel (%p592) target = $region44
        $region43: #{tpu_custom_call.1} parent=11 // pred_region
          _
        $region44: #{tpu_custom_call.1} parent=11 // pred_fallthru
          _
      $region12: #{tpu_custom_call.1} parent=5 // pred_fallthru
        _
      %p595 = scmp.lt.s32.totalorder %s27, 2
      // Predicated region
      $region45: #{tpu_custom_call.1} parent=5 // pred_check
        %p596 = pneg %p595
      $region46: #{tpu_custom_call.1} parent=5 // pred_check_branch
        %598 = sbr.rel (%p596) target = $region48
      $region47: #{tpu_custom_call.1} parent=5 // pred_region
        // Predicated region
        $region49: #{tpu_custom_call.1} parent=47 // pred_check
          %p599 = pneg %p148
        $region50: #{tpu_custom_call.1} parent=47 // pred_check_branch
          %601 = sbr.rel (%p599) target = $region52
        $region51: #{tpu_custom_call.1} parent=47 // pred_region
          %p602 = scmp.lt.s32.totalorder %s35, 1
          %s603 = scalar_select %p602, %s35, 1
          %s604 = smul.addr %s603, 4
          %s605 = smul.addr %s604, 4
          %s606 = scalar_lea.vmem %s4, %s605
        $region52: #{tpu_custom_call.1} parent=47 // pred_fallthru
          _
        // Predicated region
        $region53: #{tpu_custom_call.1} parent=47 // pred_check
          %p607 = pneg %p174
        $region54: #{tpu_custom_call.1} parent=47 // pred_check_branch
          %609 = sbr.rel (%p607) target = $region56
        $region55: #{tpu_custom_call.1} parent=47 // pred_region
          %p610 = scmp.lt.s32.totalorder %s35, 1
          %s611 = scalar_select %p610, %s35, 1
          %s612 = scalar_lea.vmem %s5, %s611
        $region56: #{tpu_custom_call.1} parent=47 // pred_fallthru
          _
        // Predicated region
        $region57: #{tpu_custom_call.1} parent=47 // pred_check
          %p613 = pneg %p200
        $region58: #{tpu_custom_call.1} parent=47 // pred_check_branch
          %615 = sbr.rel (%p613) target = $region60
        $region59: #{tpu_custom_call.1} parent=47 // pred_region
          %p616 = scmp.lt.s32.totalorder %s35, 1
          %s617 = scalar_select %p616, %s35, 1
          %s618 = smul.addr %s617, 4
          %s619 = smul.addr %s618, 4
          %s620 = scalar_lea.vmem %s6, %s619
        $region60: #{tpu_custom_call.1} parent=47 // pred_fallthru
          _
        // Predicated region
        $region61: #{tpu_custom_call.1} parent=47 // pred_check
          %p621 = pneg %p226
        $region62: #{tpu_custom_call.1} parent=47 // pred_check_branch
          %623 = sbr.rel (%p621) target = $region64
        $region63: #{tpu_custom_call.1} parent=47 // pred_region
          %p624 = scmp.lt.s32.totalorder %s35, 1
          %s625 = scalar_select %p624, %s35, 1
          %s626 = scalar_lea.vmem %s7, %s625
        $region64: #{tpu_custom_call.1} parent=47 // pred_fallthru
          _
        // Predicated region
        $region65: #{tpu_custom_call.1} parent=47 // pred_check
          %p627 = pneg %p252
        $region66: #{tpu_custom_call.1} parent=47 // pred_check_branch
          %629 = sbr.rel (%p627) target = $region68
        $region67: #{tpu_custom_call.1} parent=47 // pred_region
          %p630 = scmp.lt.s32.totalorder %s35, 1
          %s631 = scalar_select %p630, %s35, 1
          %s632 = scalar_lea.vmem %s8, %s631
        $region68: #{tpu_custom_call.1} parent=47 // pred_fallthru
          _
        // Predicated region
        $region69: #{tpu_custom_call.1} parent=47 // pred_check
          %p633 = pneg %p278
        $region70: #{tpu_custom_call.1} parent=47 // pred_check_branch
          %635 = sbr.rel (%p633) target = $region72
        $region71: #{tpu_custom_call.1} parent=47 // pred_region
          %p636 = scmp.lt.s32.totalorder %s35, 1
          %s637 = scalar_select %p636, %s35, 1
          %s638 = scalar_lea.vmem %s9, %s637
        $region72: #{tpu_custom_call.1} parent=47 // pred_fallthru
          _
        // Predicated region
        $region73: #{tpu_custom_call.1} parent=47 // pred_check
          %p639 = pneg %p304
        $region74: #{tpu_custom_call.1} parent=47 // pred_check_branch
          %641 = sbr.rel (%p639) target = $region76
        $region75: #{tpu_custom_call.1} parent=47 // pred_region
          %p642 = scmp.lt.s32.totalorder %s35, 1
          %s643 = scalar_select %p642, %s35, 1
          %s644 = smul.addr %s643, 64
          %s645 = smul.addr %s644, 4
          %s646 = scalar_lea.vmem %s10, %s645
        $region76: #{tpu_custom_call.1} parent=47 // pred_fallthru
          _
        // Predicated region
        $region77: #{tpu_custom_call.1} parent=47 // pred_check
          %p647 = pneg %p330
        $region78: #{tpu_custom_call.1} parent=47 // pred_check_branch
          %649 = sbr.rel (%p647) target = $region80
        $region79: #{tpu_custom_call.1} parent=47 // pred_region
          %p650 = scmp.lt.s32.totalorder %s35, 1
          %s651 = scalar_select %p650, %s35, 1
          %s652 = smul.addr %s651, 16
          %s653 = scalar_lea.vmem %s11, %s652
        $region80: #{tpu_custom_call.1} parent=47 // pred_fallthru
          _
        // Predicated region
        $region81: #{tpu_custom_call.1} parent=47 // pred_check
          %p654 = pneg %p356
        $region82: #{tpu_custom_call.1} parent=47 // pred_check_branch
          %656 = sbr.rel (%p654) target = $region84
        $region83: #{tpu_custom_call.1} parent=47 // pred_region
          %p657 = scmp.lt.s32.totalorder %s35, 1
          %s658 = scalar_select %p657, %s35, 1
          %s659 = smul.addr %s658, 256
          %s660 = smul.addr %s659, 4
          %s661 = scalar_lea.vmem %s12, %s660
        $region84: #{tpu_custom_call.1} parent=47 // pred_fallthru
          _
        // Predicated region
        $region85: #{tpu_custom_call.1} parent=47 // pred_check
          %p662 = pneg %p382
        $region86: #{tpu_custom_call.1} parent=47 // pred_check_branch
          %664 = sbr.rel (%p662) target = $region88
        $region87: #{tpu_custom_call.1} parent=47 // pred_region
          %p665 = scmp.lt.s32.totalorder %s35, 1
          %s666 = scalar_select %p665, %s35, 1
          %s667 = scalar_lea.vmem %s13, %s666
        $region88: #{tpu_custom_call.1} parent=47 // pred_fallthru
          _
        // Predicated region
        $region89: #{tpu_custom_call.1} parent=47 // pred_check
          %p668 = pneg %p408
        $region90: #{tpu_custom_call.1} parent=47 // pred_check_branch
          %670 = sbr.rel (%p668) target = $region92
        $region91: #{tpu_custom_call.1} parent=47 // pred_region
          %p671 = scmp.lt.s32.totalorder %s35, 1
          %s672 = scalar_select %p671, %s35, 1
          %s673 = scalar_lea.vmem %s14, %s672
        $region92: #{tpu_custom_call.1} parent=47 // pred_fallthru
          _
        // Predicated region
        $region93: #{tpu_custom_call.1} parent=47 // pred_check
          %p674 = pneg %p434
        $region94: #{tpu_custom_call.1} parent=47 // pred_check_branch
          %676 = sbr.rel (%p674) target = $region96
        $region95: #{tpu_custom_call.1} parent=47 // pred_region
          %p677 = scmp.lt.s32.totalorder %s35, 1
          %s678 = scalar_select %p677, %s35, 1
          %s679 = scalar_lea.vmem %s15, %s678
        $region96: #{tpu_custom_call.1} parent=47 // pred_fallthru
          _
      $region48: #{tpu_custom_call.1} parent=5 // pred_fallthru
        _
      %p680 = scmp.le.s32.totalorder 1, %s27
      %p681 = scmp.lt.s32.totalorder %s27, 3
      %p682 = pnand %p680, %p681
      %p683 = pneg %p682
      // Predicated region
      $region97: #{tpu_custom_call.1} parent=5 // pred_check
        _
      $region98: #{tpu_custom_call.1} parent=5 // pred_check_branch
        %685 = sbr.rel (%p682) target = $region100
      $region99: #{tpu_custom_call.1} parent=5 // pred_region
        %s686 = ssub.s32 %s27, 1
        %s687 = smul.u32 2, %s36
        %p688 = scmp.lt.s32.totalorder %s687, 1
        %s689 = scalar_select %p688, %s687, 1
        %s690 = smul.addr %s689, 8
        %s691 = scalar_lea.vmem %s0, %s690
        %p692 = pneg %p65
        %p693 = pneg %p62
        %p694 = pneg %p86
        %p695 = pneg %p83
        %p696 = pneg %p107
        %p697 = pneg %p104
        %p698 = pneg %p128
        %p699 = pneg %p125
        %p700 = scmp.lt.s32.totalorder %s37, 1
        %s701 = scalar_select %p700, %s37, 1
        %s702 = smul.addr %s701, 4
        %s703 = smul.addr %s702, 4
        %s704 = scalar_lea.vmem %s4, %s703
        %p705 = pneg %p154
        %p706 = pneg %p151
        %p707 = scmp.lt.s32.totalorder %s37, 1
        %s708 = scalar_select %p707, %s37, 1
        %s709 = scalar_lea.vmem %s5, %s708
        %p710 = pneg %p180
        %p711 = pneg %p177
        %p712 = scmp.lt.s32.totalorder %s37, 1
        %s713 = scalar_select %p712, %s37, 1
        %s714 = smul.addr %s713, 4
        %s715 = smul.addr %s714, 4
        %s716 = scalar_lea.vmem %s6, %s715
        %p717 = pneg %p206
        %p718 = pneg %p203
        %p719 = scmp.lt.s32.totalorder %s37, 1
        %s720 = scalar_select %p719, %s37, 1
        %s721 = scalar_lea.vmem %s7, %s720
        %p722 = pneg %p232
        %p723 = pneg %p229
        %p724 = scmp.lt.s32.totalorder %s37, 1
        %s725 = scalar_select %p724, %s37, 1
        %s726 = scalar_lea.vmem %s8, %s725
        %p727 = pneg %p258
        %p728 = pneg %p255
        %p729 = scmp.lt.s32.totalorder %s37, 1
        %s730 = scalar_select %p729, %s37, 1
        %s731 = scalar_lea.vmem %s9, %s730
        %p732 = pneg %p284
        %p733 = pneg %p281
        %p734 = scmp.lt.s32.totalorder %s37, 1
        %s735 = scalar_select %p734, %s37, 1
        %s736 = smul.addr %s735, 64
        %s737 = smul.addr %s736, 4
        %s738 = scalar_lea.vmem %s10, %s737
        %p739 = pneg %p310
        %p740 = pneg %p307
        %p741 = scmp.lt.s32.totalorder %s37, 1
        %s742 = scalar_select %p741, %s37, 1
        %s743 = smul.addr %s742, 16
        %s744 = scalar_lea.vmem %s11, %s743
        %p745 = pneg %p336
        %p746 = pneg %p333
        %p747 = scmp.lt.s32.totalorder %s37, 1
        %s748 = scalar_select %p747, %s37, 1
        %s749 = smul.addr %s748, 256
        %s750 = smul.addr %s749, 4
        %s751 = scalar_lea.vmem %s12, %s750
        %p752 = pneg %p362
        %p753 = pneg %p359
        %p754 = scmp.lt.s32.totalorder %s37, 1
        %s755 = scalar_select %p754, %s37, 1
        %s756 = scalar_lea.vmem %s13, %s755
        %p757 = pneg %p388
        %p758 = pneg %p385
        %p759 = scmp.lt.s32.totalorder %s37, 1
        %s760 = scalar_select %p759, %s37, 1
        %s761 = scalar_lea.vmem %s14, %s760
        %p762 = pneg %p414
        %p763 = pneg %p411
        %p764 = scmp.lt.s32.totalorder %s37, 1
        %s765 = scalar_select %p764, %s37, 1
        %s766 = scalar_lea.vmem %s15, %s765
        %p767 = pneg %p440
        %p768 = pneg %p437
        %p769 = pneg %p461
        %p770 = pneg %p458
        %p771 = pneg %p482
        %p772 = pneg %p479
        %p773 = pneg %p503
        %p774 = pneg %p500
        %p775 = pneg %p524
        %p776 = pneg %p521
        %p777 = pneg %p550
        %p778 = pneg %p547
        %s779 = smul.u32 2, %s36
        %p780 = scmp.lt.s32.totalorder %s779, 1
        %s781 = scalar_select %p780, %s779, 1
        %s782 = smul.addr %s781, 8
        %s783 = scalar_lea.vmem %s0, %s782
        %s784 = smul.u32 2, %s36
        %p785 = scmp.lt.s32.totalorder %s37, 1
        %s786 = scalar_select %p785, %s37, 1
        %s787 = smul.addr %s786, 4
        %s788 = smul.addr %s787, 4
        %s789 = scalar_lea.vmem %s4, %s788
        %p790 = scmp.lt.s32.totalorder %s37, 1
        %s791 = scalar_select %p790, %s37, 1
        %s792 = scalar_lea.vmem %s5, %s791
        %p793 = scmp.lt.s32.totalorder %s37, 1
        %s794 = scalar_select %p793, %s37, 1
        %s795 = smul.addr %s794, 4
        %s796 = smul.addr %s795, 4
        %s797 = scalar_lea.vmem %s6, %s796
        %p798 = scmp.lt.s32.totalorder %s37, 1
        %s799 = scalar_select %p798, %s37, 1
        %s800 = scalar_lea.vmem %s7, %s799
        %p801 = scmp.lt.s32.totalorder %s37, 1
        %s802 = scalar_select %p801, %s37, 1
        %s803 = scalar_lea.vmem %s8, %s802
        %p804 = scmp.lt.s32.totalorder %s37, 1
        %s805 = scalar_select %p804, %s37, 1
        %s806 = scalar_lea.vmem %s9, %s805
        %p807 = scmp.lt.s32.totalorder %s37, 1
        %s808 = scalar_select %p807, %s37, 1
        %s809 = smul.addr %s808, 64
        %s810 = smul.addr %s809, 4
        %s811 = scalar_lea.vmem %s10, %s810
        %p812 = scmp.lt.s32.totalorder %s37, 1
        %s813 = scalar_select %p812, %s37, 1
        %s814 = smul.addr %s813, 16
        %s815 = scalar_lea.vmem %s11, %s814
        %p816 = scmp.lt.s32.totalorder %s37, 1
        %s817 = scalar_select %p816, %s37, 1
        %s818 = smul.addr %s817, 256
        %s819 = smul.addr %s818, 4
        %s820 = scalar_lea.vmem %s12, %s819
        %p821 = scmp.lt.s32.totalorder %s37, 1
        %s822 = scalar_select %p821, %s37, 1
        %s823 = scalar_lea.vmem %s13, %s822
        %p824 = scmp.lt.s32.totalorder %s37, 1
        %s825 = scalar_select %p824, %s37, 1
        %s826 = scalar_lea.vmem %s14, %s825
        %p827 = scmp.lt.s32.totalorder %s37, 1
        %s828 = scalar_select %p827, %s37, 1
        %s829 = scalar_lea.vmem %s15, %s828
        %s830 = smul.u32 2, %s36
        %p832 = scmp.eq.s32.totalorder %s37, 0
        // Predicated region
        $region101: #{tpu_custom_call.1} parent=99 // pred_check
          %p833 = pneg %p832
        $region102: #{tpu_custom_call.1} parent=99 // pred_check_branch
          %835 = sbr.rel (%p833) target = $region104
        $region103: #{tpu_custom_call.1} parent=99 // pred_region
          %v836 = vld [vmem:[%s783] sm:$0xff]
          %v837 = vld [vmem:[%s783 + $0x8] sm:$0xff]
          %v838 = vpack.c.bf16 %v837, %v836
          %v839 = vld [vmem:[%s1] sm:$0xf]
          %v840 = vld [vmem:[%s1 + $0x4] sm:$0xf]
          %v841 = vld [vmem:[%s1 + $0x8] sm:$0xf]
          %v842 = vld [vmem:[%s1 + $0xc] sm:$0xf]
          %v843 = vld [vmem:[%s1 + $0x10] sm:$0xf]
          %v844 = vld [vmem:[%s1 + $0x14] sm:$0xf]
          %v845 = vld [vmem:[%s1 + $0x18] sm:$0xf]
          %v846 = vld [vmem:[%s1 + $0x1c] sm:$0xf]
          %v847 = vld [vmem:[%s1 + $0x20] sm:$0xf]
          %v848 = vld [vmem:[%s1 + $0x24] sm:$0xf]
          %v849 = vld [vmem:[%s1 + $0x28] sm:$0xf]
          %v850 = vld [vmem:[%s1 + $0x2c] sm:$0xf]
          %v851 = vld [vmem:[%s1 + $0x30] sm:$0xf]
          %v852 = vld [vmem:[%s1 + $0x34] sm:$0xf]
          %v853 = vld [vmem:[%s1 + $0x38] sm:$0xf]
          %v854 = vld [vmem:[%s1 + $0x3c] sm:$0xf]
          %v855 = vld [vmem:[%s2] sm:$0x1]
          %v857 = vlaneseq
          %v858 = vshrl.u32 %v857, 7
          %v859 = vsub.s32 0, %v858
          %v860 = vrot.slane %v855, %v859
          %v878 = vunpack.c.l.b16 %v839
          %v879 = vunpack.c.l.b16 %v840
          %v880 = vunpack.c.l.b16 %v841
          %v881 = vunpack.c.l.b16 %v842
          %v882 = vunpack.c.l.b16 %v843
          %v883 = vunpack.c.l.b16 %v844
          %v884 = vunpack.c.l.b16 %v845
          %v885 = vunpack.c.l.b16 %v846
          %v886 = vunpack.c.l.b16 %v847
          %v887 = vunpack.c.l.b16 %v848
          %v888 = vunpack.c.l.b16 %v849
          %v889 = vunpack.c.l.b16 %v850
          %v890 = vunpack.c.l.b16 %v851
          %v891 = vunpack.c.l.b16 %v852
          %v892 = vunpack.c.l.b16 %v853
          %v893 = vunpack.c.l.b16 %v854
          %v894 = vpack.c.b16 %v879, %v878
          %v895 = vpack.c.b16 %v881, %v880
          %v896 = vpack.c.b16 %v883, %v882
          %v897 = vpack.c.b16 %v885, %v884
          %v898 = vpack.c.b16 %v887, %v886
          %v899 = vpack.c.b16 %v889, %v888
          %v900 = vpack.c.b16 %v891, %v890
          %v901 = vpack.c.b16 %v893, %v892
          %910 = vmatprep.subr.bf16.mxu0 0
          %911 = vmatpush1.bf16.msra.mxu0 %v894
          %912 = vmatprep.subr.bf16.mxu0 0
          %913 = vmatpush1.bf16.msra.mxu0 %v895
          %914 = vmatprep.subr.bf16.mxu0 0
          %915 = vmatpush1.bf16.msra.mxu0 %v896
          %916 = vmatprep.subr.bf16.mxu0 0
          %917 = vmatpush1.bf16.msra.mxu0 %v897
          %918 = vmatprep.subr.bf16.mxu0 0
          %919 = vmatpush1.bf16.msra.mxu0 %v898
          %920 = vmatprep.subr.bf16.mxu0 0
          %921 = vmatpush1.bf16.msra.mxu0 %v899
          %922 = vmatprep.subr.bf16.mxu0 0
          %923 = vmatpush1.bf16.msra.mxu0 %v900
          %924 = vmatprep.subr.bf16.mxu0 0
          %925 = vmatpush1.bf16.msra.mxu0 %v901
          %926 = vmatprep.subr.bf16.mxu0 0
          %927 = vmatpush1.bf16.msra.mxu0 0
          %928 = vmatprep.subr.bf16.mxu0 0
          %929 = vmatpush1.bf16.msra.mxu0 0
          %930 = vmatprep.subr.bf16.mxu0 0
          %931 = vmatpush1.bf16.msra.mxu0 0
          %932 = vmatprep.subr.bf16.mxu0 0
          %933 = vmatpush1.bf16.msra.mxu0 0
          %934 = vmatprep.subr.bf16.mxu0 0
          %935 = vmatpush1.bf16.msra.mxu0 0
          %936 = vmatprep.subr.bf16.mxu0 0
          %937 = vmatpush1.bf16.msra.mxu0 0
          %938 = vmatprep.subr.bf16.mxu0 0
          %939 = vmatpush1.bf16.msra.mxu0 0
          %940 = vmatprep.subr.bf16.mxu0 0
          %941 = vmatpush1.bf16.msra.mxu0 0
          %942 = vmatprep.mubr.bf16.mxu0 0
          %943 = vmatmul.mubr.bf16.gmra.mrb[0].mxu0 %v838
          %v944 = vpop.f32.mrb[0].mxu0
          %v945 = vadd.f32 %v860, %v944
          %v946 = vpop.f32.mrb[0].mxu0
          %v947 = vpop.f32.mrb[0].mxu0
          %v948 = vadd.f32 %v860, %v947
          %v949 = vpop.f32.mrb[0].mxu0
          %950 = vdwg.mxu0
          %v951 = vld [vmem:[%s3] sm:$0xff]
          %v952 = vadd.f32 %v945, %v951
          %v953 = vadd.f32 %v948, %v951
          %vm954 = vcmask 261120
          %955 = vst.msk [vmem:[#allocation2] sm:$0xff] %vm954, %v952
          %956 = vst.msk [vmem:[#allocation2 + $0x8] sm:$0xff] %vm954, %v953
        $region104: #{tpu_custom_call.1} parent=99 // pred_fallthru
          _
        %v957 = vld [vmem:[#allocation2] sm:$0xff]
        %v958 = vld [vmem:[#allocation2 + $0x8] sm:$0xff]
        %v959 = vpack.c.bf16 %v958, %v957
        %v960 = vld [vmem:[%s789] sm:$0xf]
        %v961 = vld [vmem:[%s789 + $0x4] sm:$0xf]
        %v962 = vld [vmem:[%s789 + $0x8] sm:$0xf]
        %v963 = vld [vmem:[%s789 + $0xc] sm:$0xf]
        %v964 = vld [vmem:[%s792] sm:$0x1]
        %v966 = vlaneseq
        %v967 = vshrl.u32 %v966, 7
        %v968 = vsub.s32 0, %v967
        %v969 = vrot.slane %v964, %v968
        %v975 = vunpack.c.l.b16 %v960
        %v976 = vunpack.c.l.b16 %v961
        %v977 = vunpack.c.l.b16 %v962
        %v978 = vunpack.c.l.b16 %v963
        %v979 = vpack.c.b16 %v976, %v975
        %v980 = vpack.c.b16 %v978, %v977
        %vm983 = vcmask 261120
        %v985 = vsel %vm983, %v959, 0
        %987 = vmatprep.subr.bf16.mxu0 0
        %988 = vmatpush1.bf16.msra.mxu0 %v979
        %989 = vmatprep.subr.bf16.mxu0 0
        %990 = vmatpush1.bf16.msra.mxu0 %v980
        %991 = vmatprep.subr.bf16.mxu0 0
        %992 = vmatpush1.bf16.msra.mxu0 0
        %993 = vmatprep.subr.bf16.mxu0 0
        %994 = vmatpush1.bf16.msra.mxu0 0
        %995 = vmatprep.subr.bf16.mxu0 0
        %996 = vmatpush1.bf16.msra.mxu0 0
        %997 = vmatprep.subr.bf16.mxu0 0
        %998 = vmatpush1.bf16.msra.mxu0 0
        %999 = vmatprep.subr.bf16.mxu0 0
        %1000 = vmatpush1.bf16.msra.mxu0 0
        %1001 = vmatprep.subr.bf16.mxu0 0
        %1002 = vmatpush1.bf16.msra.mxu0 0
        %1003 = vmatprep.subr.bf16.mxu0 0
        %1004 = vmatpush1.bf16.msra.mxu0 0
        %1005 = vmatprep.subr.bf16.mxu0 0
        %1006 = vmatpush1.bf16.msra.mxu0 0
        %1007 = vmatprep.subr.bf16.mxu0 0
        %1008 = vmatpush1.bf16.msra.mxu0 0
        %1009 = vmatprep.subr.bf16.mxu0 0
        %1010 = vmatpush1.bf16.msra.mxu0 0
        %1011 = vmatprep.subr.bf16.mxu0 0
        %1012 = vmatpush1.bf16.msra.mxu0 0
        %1013 = vmatprep.subr.bf16.mxu0 0
        %1014 = vmatpush1.bf16.msra.mxu0 0
        %1015 = vmatprep.subr.bf16.mxu0 0
        %1016 = vmatpush1.bf16.msra.mxu0 0
        %1017 = vmatprep.subr.bf16.mxu0 0
        %1018 = vmatpush1.bf16.msra.mxu0 0
        %1019 = vmatprep.mubr.bf16.mxu0 0
        %1020 = vmatmul.mubr.bf16.gmra.mrb[0].mxu0 %v985
        %v1021 = vpop.f32.mrb[0].mxu0
        %v1022 = vadd.f32 %v969, %v1021
        %v1023 = vpop.f32.mrb[0].mxu0
        %v1024 = vpop.f32.mrb[0].mxu0
        %v1025 = vadd.f32 %v969, %v1024
        %v1026 = vpop.f32.mrb[0].mxu0
        %1027 = vdwg.mxu0
        %v1028 = vmul.f32 %v1022, 0.35355338
        %v1029 = vmul.f32 %v1025, 0.35355338
        %v1030 = vpack.c.bf16 %v1028, %v1028
        %v1031 = vpack.c.bf16 %v1029, %v1029
        %v1032 = vpack.c.bf16 %v1022, %v1022
        %v1033 = vpack.c.bf16 %v1025, %v1025
        %1035 = vrot.lane.b32.xlu0 %v1032, 96
        %v1036 = vpop.permute.xlu0 %1035
        %vm1037 = vcmask 64512
        %v1039 = vsel %vm1037, %v1030, 0
        %v1042 = vsel %vm1037, %v1036, 0
        %1044 = vmatprep.subr.bf16.mxu0 0
        %1045 = vmatpush1.bf16.xpose.msra.mxu0 %v1042
        %1046 = vmatprep.subr.bf16.mxu0 0
        %1047 = vmatpush1.bf16.xpose.msra.mxu0 0
        %1048 = vmatprep.subr.bf16.mxu0 0
        %1049 = vmatpush1.bf16.xpose.msra.mxu0 0
        %1050 = vmatprep.subr.bf16.mxu0 0
        %1051 = vmatpush1.bf16.xpose.msra.mxu0 0
        %1052 = vmatprep.subr.bf16.mxu0 0
        %1053 = vmatpush1.bf16.xpose.msra.mxu0 0
        %1054 = vmatprep.subr.bf16.mxu0 0
        %1055 = vmatpush1.bf16.xpose.msra.mxu0 0
        %1056 = vmatprep.subr.bf16.mxu0 0
        %1057 = vmatpush1.bf16.xpose.msra.mxu0 0
        %1058 = vmatprep.subr.bf16.mxu0 0
        %1059 = vmatpush1.bf16.xpose.msra.mxu0 0
        %1060 = vmatprep.subr.bf16.mxu0 0
        %1061 = vmatpush1.bf16.xpose.msra.mxu0 0
        %1062 = vmatprep.subr.bf16.mxu0 0
        %1063 = vmatpush1.bf16.xpose.msra.mxu0 0
        %1064 = vmatprep.subr.bf16.mxu0 0
        %1065 = vmatpush1.bf16.xpose.msra.mxu0 0
        %1066 = vmatprep.subr.bf16.mxu0 0
        %1067 = vmatpush1.bf16.xpose.msra.mxu0 0
        %1068 = vmatprep.subr.bf16.mxu0 0
        %1069 = vmatpush1.bf16.xpose.msra.mxu0 0
        %1070 = vmatprep.subr.bf16.mxu0 0
        %1071 = vmatpush1.bf16.xpose.msra.mxu0 0
        %1072 = vmatprep.subr.bf16.mxu0 0
        %1073 = vmatpush1.bf16.xpose.msra.mxu0 0
        %1074 = vmatprep.subr.bf16.mxu0 0
        %1075 = vmatpush1.bf16.xpose.msra.mxu0 0
        %1076 = vmatprep.mubr.bf16.mxu0 0
        %1077 = vmatmul.mubr.bf16.gmra.mrb[0].mxu0 %v1039
        %v1078 = vpop.f32.mrb[0].mxu0
        %v1079 = vadd.f32 0.0, %v1078
        %v1080 = vpop.f32.mrb[0].mxu0
        %v1081 = vpop.f32.mrb[0].mxu0
        %v1082 = vpop.f32.mrb[0].mxu0
        %1083 = vdwg.mxu0
        %1085 = vrot.lane.b32.xlu0 %v1033, 96
        %v1086 = vpop.permute.xlu0 %1085
        %v1088 = vsel %vm1037, %v1031, 0
        %v1091 = vsel %vm1037, %v1086, 0
        %1093 = vmatprep.subr.bf16.mxu0 0
        %1094 = vmatpush1.bf16.xpose.msra.mxu0 %v1091
        %1095 = vmatprep.subr.bf16.mxu0 0
        %1096 = vmatpush1.bf16.xpose.msra.mxu0 0
        %1097 = vmatprep.subr.bf16.mxu0 0
        %1098 = vmatpush1.bf16.xpose.msra.mxu0 0
        %1099 = vmatprep.subr.bf16.mxu0 0
        %1100 = vmatpush1.bf16.xpose.msra.mxu0 0
        %1101 = vmatprep.subr.bf16.mxu0 0
        %1102 = vmatpush1.bf16.xpose.msra.mxu0 0
        %1103 = vmatprep.subr.bf16.mxu0 0
        %1104 = vmatpush1.bf16.xpose.msra.mxu0 0
        %1105 = vmatprep.subr.bf16.mxu0 0
        %1106 = vmatpush1.bf16.xpose.msra.mxu0 0
        %1107 = vmatprep.subr.bf16.mxu0 0
        %1108 = vmatpush1.bf16.xpose.msra.mxu0 0
        %1109 = vmatprep.subr.bf16.mxu0 0
        %1110 = vmatpush1.bf16.xpose.msra.mxu0 0
        %1111 = vmatprep.subr.bf16.mxu0 0
        %1112 = vmatpush1.bf16.xpose.msra.mxu0 0
        %1113 = vmatprep.subr.bf16.mxu0 0
        %1114 = vmatpush1.bf16.xpose.msra.mxu0 0
        %1115 = vmatprep.subr.bf16.mxu0 0
        %1116 = vmatpush1.bf16.xpose.msra.mxu0 0
        %1117 = vmatprep.subr.bf16.mxu0 0
        %1118 = vmatpush1.bf16.xpose.msra.mxu0 0
        %1119 = vmatprep.subr.bf16.mxu0 0
        %1120 = vmatpush1.bf16.xpose.msra.mxu0 0
        %1121 = vmatprep.subr.bf16.mxu0 0
        %1122 = vmatpush1.bf16.xpose.msra.mxu0 0
        %1123 = vmatprep.subr.bf16.mxu0 0
        %1124 = vmatpush1.bf16.xpose.msra.mxu0 0
        %1125 = vmatprep.mubr.bf16.mxu0 0
        %1126 = vmatmul.mubr.bf16.gmra.mrb[0].mxu0 %v1088
        %v1127 = vpop.f32.mrb[0].mxu0
        %v1128 = vadd.f32 0.0, %v1127
        %v1129 = vpop.f32.mrb[0].mxu0
        %v1130 = vpop.f32.mrb[0].mxu0
        %v1131 = vpop.f32.mrb[0].mxu0
        %1132 = vdwg.mxu0
        %v1133 = vsel %vm1037, %v1079, -inf
        %1134 = vmax.xlane.f32.xlu0 %v1133
        %v1135 = vpop.xlane.xlu0 %1134
        %v1136 = vsel %vm1037, %v1128, -inf
        %1137 = vmax.xlane.f32.xlu0 %v1136
        %v1138 = vpop.xlane.xlu0 %1137
        %v1139 = vsub.f32 %v1079, %v1135
        %v1140 = vsub.f32 %v1128, %v1138
        %v1141 = vmul.f32 %v1139, 1.442695
        %v1142 = vpow.pop %v1141
        %v1143 = vmul.f32 %v1140, 1.442695
        %v1144 = vpow.pop %v1143
        %v1145 = vsel %vm1037, %v1142, 0.0
        %1146 = vadd.xlane.f32.xlu0 %v1145
        %v1147 = vpop.xlane.xlu0 %1146
        %v1148 = vsel %vm1037, %v1144, 0.0
        %1149 = vadd.xlane.f32.xlu0 %v1148
        %v1150 = vpop.xlane.xlu0 %1149
        %v1151 = vrcp.pop %v1147
        %v1152 = vrcp.pop %v1150
        %v1153 = vmul.f32 %v1142, %v1151
        %v1154 = vmul.f32 %v1144, %v1152
        %v1155 = vpack.c.bf16 %v1153, %v1153
        %v1156 = vpack.c.bf16 %v1154, %v1154
        %1157 = vrot.lane.b32.xlu0 %v1032, 64
        %v1158 = vpop.permute.xlu0 %1157
        %v1160 = vsel %vm1037, %v1155, 0
        %vm1162 = vcmask 1043456
        %v1164 = vsel %vm1162, %v1158, 0
        %1166 = vmatprep.subr.bf16.mxu0 0
        %1167 = vmatpush1.bf16.msra.mxu0 %v1164
        %1168 = vmatprep.subr.bf16.mxu0 0
        %1169 = vmatpush1.bf16.msra.mxu0 0
        %1170 = vmatprep.subr.bf16.mxu0 0
        %1171 = vmatpush1.bf16.msra.mxu0 0
        %1172 = vmatprep.subr.bf16.mxu0 0
        %1173 = vmatpush1.bf16.msra.mxu0 0
        %1174 = vmatprep.subr.bf16.mxu0 0
        %1175 = vmatpush1.bf16.msra.mxu0 0
        %1176 = vmatprep.subr.bf16.mxu0 0
        %1177 = vmatpush1.bf16.msra.mxu0 0
        %1178 = vmatprep.subr.bf16.mxu0 0
        %1179 = vmatpush1.bf16.msra.mxu0 0
        %1180 = vmatprep.subr.bf16.mxu0 0
        %1181 = vmatpush1.bf16.msra.mxu0 0
        %1182 = vmatprep.subr.bf16.mxu0 0
        %1183 = vmatpush1.bf16.msra.mxu0 0
        %1184 = vmatprep.subr.bf16.mxu0 0
        %1185 = vmatpush1.bf16.msra.mxu0 0
        %1186 = vmatprep.subr.bf16.mxu0 0
        %1187 = vmatpush1.bf16.msra.mxu0 0
        %1188 = vmatprep.subr.bf16.mxu0 0
        %1189 = vmatpush1.bf16.msra.mxu0 0
        %1190 = vmatprep.subr.bf16.mxu0 0
        %1191 = vmatpush1.bf16.msra.mxu0 0
        %1192 = vmatprep.subr.bf16.mxu0 0
        %1193 = vmatpush1.bf16.msra.mxu0 0
        %1194 = vmatprep.subr.bf16.mxu0 0
        %1195 = vmatpush1.bf16.msra.mxu0 0
        %1196 = vmatprep.subr.bf16.mxu0 0
        %1197 = vmatpush1.bf16.msra.mxu0 0
        %1198 = vmatprep.mubr.bf16.mxu0 0
        %1199 = vmatmul.mubr.bf16.gmra.mrb[0].mxu0 %v1160
        %v1200 = vpop.f32.mrb[0].mxu0
        %v1201 = vadd.f32 0.0, %v1200
        %v1202 = vpop.f32.mrb[0].mxu0
        %v1203 = vpop.f32.mrb[0].mxu0
        %v1204 = vpop.f32.mrb[0].mxu0
        %1205 = vdwg.mxu0
        %1206 = vrot.lane.b32.xlu0 %v1033, 64
        %v1207 = vpop.permute.xlu0 %1206
        %v1209 = vsel %vm1037, %v1156, 0
        %v1212 = vsel %vm1162, %v1207, 0
        %1214 = vmatprep.subr.bf16.mxu0 0
        %1215 = vmatpush1.bf16.msra.mxu0 %v1212
        %1216 = vmatprep.subr.bf16.mxu0 0
        %1217 = vmatpush1.bf16.msra.mxu0 0
        %1218 = vmatprep.subr.bf16.mxu0 0
        %1219 = vmatpush1.bf16.msra.mxu0 0
        %1220 = vmatprep.subr.bf16.mxu0 0
        %1221 = vmatpush1.bf16.msra.mxu0 0
        %1222 = vmatprep.subr.bf16.mxu0 0
        %1223 = vmatpush1.bf16.msra.mxu0 0
        %1224 = vmatprep.subr.bf16.mxu0 0
        %1225 = vmatpush1.bf16.msra.mxu0 0
        %1226 = vmatprep.subr.bf16.mxu0 0
        %1227 = vmatpush1.bf16.msra.mxu0 0
        %1228 = vmatprep.subr.bf16.mxu0 0
        %1229 = vmatpush1.bf16.msra.mxu0 0
        %1230 = vmatprep.subr.bf16.mxu0 0
        %1231 = vmatpush1.bf16.msra.mxu0 0
        %1232 = vmatprep.subr.bf16.mxu0 0
        %1233 = vmatpush1.bf16.msra.mxu0 0
        %1234 = vmatprep.subr.bf16.mxu0 0
        %1235 = vmatpush1.bf16.msra.mxu0 0
        %1236 = vmatprep.subr.bf16.mxu0 0
        %1237 = vmatpush1.bf16.msra.mxu0 0
        %1238 = vmatprep.subr.bf16.mxu0 0
        %1239 = vmatpush1.bf16.msra.mxu0 0
        %1240 = vmatprep.subr.bf16.mxu0 0
        %1241 = vmatpush1.bf16.msra.mxu0 0
        %1242 = vmatprep.subr.bf16.mxu0 0
        %1243 = vmatpush1.bf16.msra.mxu0 0
        %1244 = vmatprep.subr.bf16.mxu0 0
        %1245 = vmatpush1.bf16.msra.mxu0 0
        %1246 = vmatprep.mubr.bf16.mxu0 0
        %1247 = vmatmul.mubr.bf16.gmra.mrb[0].mxu0 %v1209
        %v1248 = vpop.f32.mrb[0].mxu0
        %v1249 = vadd.f32 0.0, %v1248
        %v1250 = vpop.f32.mrb[0].mxu0
        %v1251 = vpop.f32.mrb[0].mxu0
        %v1252 = vpop.f32.mrb[0].mxu0
        %1253 = vdwg.mxu0
        %1255 = vrot.lane.b32.xlu0 %v1030, 120
        %v1256 = vpop.permute.xlu0 %1255
        %1257 = vrot.lane.b32.xlu0 %v1032, 88
        %v1258 = vpop.permute.xlu0 %1257
        %v1260 = vsel %vm1037, %v1256, 0
        %v1263 = vsel %vm1037, %v1258, 0
        %1265 = vmatprep.subr.bf16.mxu0 0
        %1266 = vmatpush1.bf16.xpose.msra.mxu0 %v1263
        %1267 = vmatprep.subr.bf16.mxu0 0
        %1268 = vmatpush1.bf16.xpose.msra.mxu0 0
        %1269 = vmatprep.subr.bf16.mxu0 0
        %1270 = vmatpush1.bf16.xpose.msra.mxu0 0
        %1271 = vmatprep.subr.bf16.mxu0 0
        %1272 = vmatpush1.bf16.xpose.msra.mxu0 0
        %1273 = vmatprep.subr.bf16.mxu0 0
        %1274 = vmatpush1.bf16.xpose.msra.mxu0 0
        %1275 = vmatprep.subr.bf16.mxu0 0
        %1276 = vmatpush1.bf16.xpose.msra.mxu0 0
        %1277 = vmatprep.subr.bf16.mxu0 0
        %1278 = vmatpush1.bf16.xpose.msra.mxu0 0
        %1279 = vmatprep.subr.bf16.mxu0 0
        %1280 = vmatpush1.bf16.xpose.msra.mxu0 0
        %1281 = vmatprep.subr.bf16.mxu0 0
        %1282 = vmatpush1.bf16.xpose.msra.mxu0 0
        %1283 = vmatprep.subr.bf16.mxu0 0
        %1284 = vmatpush1.bf16.xpose.msra.mxu0 0
        %1285 = vmatprep.subr.bf16.mxu0 0
        %1286 = vmatpush1.bf16.xpose.msra.mxu0 0
        %1287 = vmatprep.subr.bf16.mxu0 0
        %1288 = vmatpush1.bf16.xpose.msra.mxu0 0
        %1289 = vmatprep.subr.bf16.mxu0 0
        %1290 = vmatpush1.bf16.xpose.msra.mxu0 0
        %1291 = vmatprep.subr.bf16.mxu0 0
        %1292 = vmatpush1.bf16.xpose.msra.mxu0 0
        %1293 = vmatprep.subr.bf16.mxu0 0
        %1294 = vmatpush1.bf16.xpose.msra.mxu0 0
        %1295 = vmatprep.subr.bf16.mxu0 0
        %1296 = vmatpush1.bf16.xpose.msra.mxu0 0
        %1297 = vmatprep.mubr.bf16.mxu0 0
        %1298 = vmatmul.mubr.bf16.gmra.mrb[0].mxu0 %v1260
        %v1299 = vpop.f32.mrb[0].mxu0
        %v1300 = vadd.f32 0.0, %v1299
        %v1301 = vpop.f32.mrb[0].mxu0
        %v1302 = vpop.f32.mrb[0].mxu0
        %v1303 = vpop.f32.mrb[0].mxu0
        %1304 = vdwg.mxu0
        %1306 = vrot.lane.b32.xlu0 %v1031, 120
        %v1307 = vpop.permute.xlu0 %1306
        %1308 = vrot.lane.b32.xlu0 %v1033, 88
        %v1309 = vpop.permute.xlu0 %1308
        %v1311 = vsel %vm1037, %v1307, 0
        %v1314 = vsel %vm1037, %v1309, 0
        %1316 = vmatprep.subr.bf16.mxu0 0
        %1317 = vmatpush1.bf16.xpose.msra.mxu0 %v1314
        %1318 = vmatprep.subr.bf16.mxu0 0
        %1319 = vmatpush1.bf16.xpose.msra.mxu0 0
        %1320 = vmatprep.subr.bf16.mxu0 0
        %1321 = vmatpush1.bf16.xpose.msra.mxu0 0
        %1322 = vmatprep.subr.bf16.mxu0 0
        %1323 = vmatpush1.bf16.xpose.msra.mxu0 0
        %1324 = vmatprep.subr.bf16.mxu0 0
        %1325 = vmatpush1.bf16.xpose.msra.mxu0 0
        %1326 = vmatprep.subr.bf16.mxu0 0
        %1327 = vmatpush1.bf16.xpose.msra.mxu0 0
        %1328 = vmatprep.subr.bf16.mxu0 0
        %1329 = vmatpush1.bf16.xpose.msra.mxu0 0
        %1330 = vmatprep.subr.bf16.mxu0 0
        %1331 = vmatpush1.bf16.xpose.msra.mxu0 0
        %1332 = vmatprep.subr.bf16.mxu0 0
        %1333 = vmatpush1.bf16.xpose.msra.mxu0 0
        %1334 = vmatprep.subr.bf16.mxu0 0
        %1335 = vmatpush1.bf16.xpose.msra.mxu0 0
        %1336 = vmatprep.subr.bf16.mxu0 0
        %1337 = vmatpush1.bf16.xpose.msra.mxu0 0
        %1338 = vmatprep.subr.bf16.mxu0 0
        %1339 = vmatpush1.bf16.xpose.msra.mxu0 0
        %1340 = vmatprep.subr.bf16.mxu0 0
        %1341 = vmatpush1.bf16.xpose.msra.mxu0 0
        %1342 = vmatprep.subr.bf16.mxu0 0
        %1343 = vmatpush1.bf16.xpose.msra.mxu0 0
        %1344 = vmatprep.subr.bf16.mxu0 0
        %1345 = vmatpush1.bf16.xpose.msra.mxu0 0
        %1346 = vmatprep.subr.bf16.mxu0 0
        %1347 = vmatpush1.bf16.xpose.msra.mxu0 0
        %1348 = vmatprep.mubr.bf16.mxu0 0
        %1349 = vmatmul.mubr.bf16.gmra.mrb[0].mxu0 %v1311
        %v1350 = vpop.f32.mrb[0].mxu0
        %v1351 = vadd.f32 0.0, %v1350
        %v1352 = vpop.f32.mrb[0].mxu0
        %v1353 = vpop.f32.mrb[0].mxu0
        %v1354 = vpop.f32.mrb[0].mxu0
        %1355 = vdwg.mxu0
        %v1356 = vsel %vm1037, %v1300, -inf
        %1357 = vmax.xlane.f32.xlu0 %v1356
        %v1358 = vpop.xlane.xlu0 %1357
        %v1359 = vsel %vm1037, %v1351, -inf
        %1360 = vmax.xlane.f32.xlu0 %v1359
        %v1361 = vpop.xlane.xlu0 %1360
        %v1362 = vsub.f32 %v1300, %v1358
        %v1363 = vsub.f32 %v1351, %v1361
        %v1364 = vmul.f32 %v1362, 1.442695
        %v1365 = vpow.pop %v1364
        %v1366 = vmul.f32 %v1363, 1.442695
        %v1367 = vpow.pop %v1366
        %v1368 = vsel %vm1037, %v1365, 0.0
        %1369 = vadd.xlane.f32.xlu0 %v1368
        %v1370 = vpop.xlane.xlu0 %1369
        %v1371 = vsel %vm1037, %v1367, 0.0
        %1372 = vadd.xlane.f32.xlu0 %v1371
        %v1373 = vpop.xlane.xlu0 %1372
        %v1374 = vrcp.pop %v1370
        %v1375 = vrcp.pop %v1373
        %v1376 = vmul.f32 %v1365, %v1374
        %v1377 = vmul.f32 %v1367, %v1375
        %v1378 = vpack.c.bf16 %v1376, %v1376
        %v1379 = vpack.c.bf16 %v1377, %v1377
        %1380 = vrot.lane.b32.xlu0 %v1032, 56
        %v1381 = vpop.permute.xlu0 %1380
        %v1383 = vsel %vm1037, %v1378, 0
        %v1386 = vsel %vm1162, %v1381, 0
        %1388 = vmatprep.subr.bf16.mxu0 0
        %1389 = vmatpush1.bf16.msra.mxu0 %v1386
        %1390 = vmatprep.subr.bf16.mxu0 0
        %1391 = vmatpush1.bf16.msra.mxu0 0
        %1392 = vmatprep.subr.bf16.mxu0 0
        %1393 = vmatpush1.bf16.msra.mxu0 0
        %1394 = vmatprep.subr.bf16.mxu0 0
        %1395 = vmatpush1.bf16.msra.mxu0 0
        %1396 = vmatprep.subr.bf16.mxu0 0
        %1397 = vmatpush1.bf16.msra.mxu0 0
        %1398 = vmatprep.subr.bf16.mxu0 0
        %1399 = vmatpush1.bf16.msra.mxu0 0
        %1400 = vmatprep.subr.bf16.mxu0 0
        %1401 = vmatpush1.bf16.msra.mxu0 0
        %1402 = vmatprep.subr.bf16.mxu0 0
        %1403 = vmatpush1.bf16.msra.mxu0 0
        %1404 = vmatprep.subr.bf16.mxu0 0
        %1405 = vmatpush1.bf16.msra.mxu0 0
        %1406 = vmatprep.subr.bf16.mxu0 0
        %1407 = vmatpush1.bf16.msra.mxu0 0
        %1408 = vmatprep.subr.bf16.mxu0 0
        %1409 = vmatpush1.bf16.msra.mxu0 0
        %1410 = vmatprep.subr.bf16.mxu0 0
        %1411 = vmatpush1.bf16.msra.mxu0 0
        %1412 = vmatprep.subr.bf16.mxu0 0
        %1413 = vmatpush1.bf16.msra.mxu0 0
        %1414 = vmatprep.subr.bf16.mxu0 0
        %1415 = vmatpush1.bf16.msra.mxu0 0
        %1416 = vmatprep.subr.bf16.mxu0 0
        %1417 = vmatpush1.bf16.msra.mxu0 0
        %1418 = vmatprep.subr.bf16.mxu0 0
        %1419 = vmatpush1.bf16.msra.mxu0 0
        %1420 = vmatprep.mubr.bf16.mxu0 0
        %1421 = vmatmul.mubr.bf16.gmra.mrb[0].mxu0 %v1383
        %v1422 = vpop.f32.mrb[0].mxu0
        %v1423 = vadd.f32 0.0, %v1422
        %v1424 = vpop.f32.mrb[0].mxu0
        %v1425 = vpop.f32.mrb[0].mxu0
        %v1426 = vpop.f32.mrb[0].mxu0
        %1427 = vdwg.mxu0
        %1428 = vrot.lane.b32.xlu0 %v1033, 56
        %v1429 = vpop.permute.xlu0 %1428
        %v1431 = vsel %vm1037, %v1379, 0
        %v1434 = vsel %vm1162, %v1429, 0
        %1436 = vmatprep.subr.bf16.mxu0 0
        %1437 = vmatpush1.bf16.msra.mxu0 %v1434
        %1438 = vmatprep.subr.bf16.mxu0 0
        %1439 = vmatpush1.bf16.msra.mxu0 0
        %1440 = vmatprep.subr.bf16.mxu0 0
        %1441 = vmatpush1.bf16.msra.mxu0 0
        %1442 = vmatprep.subr.bf16.mxu0 0
        %1443 = vmatpush1.bf16.msra.mxu0 0
        %1444 = vmatprep.subr.bf16.mxu0 0
        %1445 = vmatpush1.bf16.msra.mxu0 0
        %1446 = vmatprep.subr.bf16.mxu0 0
        %1447 = vmatpush1.bf16.msra.mxu0 0
        %1448 = vmatprep.subr.bf16.mxu0 0
        %1449 = vmatpush1.bf16.msra.mxu0 0
        %1450 = vmatprep.subr.bf16.mxu0 0
        %1451 = vmatpush1.bf16.msra.mxu0 0
        %1452 = vmatprep.subr.bf16.mxu0 0
        %1453 = vmatpush1.bf16.msra.mxu0 0
        %1454 = vmatprep.subr.bf16.mxu0 0
        %1455 = vmatpush1.bf16.msra.mxu0 0
        %1456 = vmatprep.subr.bf16.mxu0 0
        %1457 = vmatpush1.bf16.msra.mxu0 0
        %1458 = vmatprep.subr.bf16.mxu0 0
        %1459 = vmatpush1.bf16.msra.mxu0 0
        %1460 = vmatprep.subr.bf16.mxu0 0
        %1461 = vmatpush1.bf16.msra.mxu0 0
        %1462 = vmatprep.subr.bf16.mxu0 0
        %1463 = vmatpush1.bf16.msra.mxu0 0
        %1464 = vmatprep.subr.bf16.mxu0 0
        %1465 = vmatpush1.bf16.msra.mxu0 0
        %1466 = vmatprep.subr.bf16.mxu0 0
        %1467 = vmatpush1.bf16.msra.mxu0 0
        %1468 = vmatprep.mubr.bf16.mxu0 0
        %1469 = vmatmul.mubr.bf16.gmra.mrb[0].mxu0 %v1431
        %v1470 = vpop.f32.mrb[0].mxu0
        %v1471 = vadd.f32 0.0, %v1470
        %v1472 = vpop.f32.mrb[0].mxu0
        %v1473 = vpop.f32.mrb[0].mxu0
        %v1474 = vpop.f32.mrb[0].mxu0
        %1475 = vdwg.mxu0
        %1476 = vrot.lane.b32.xlu0 %v1030, 112
        %v1477 = vpop.permute.xlu0 %1476
        %1478 = vrot.lane.b32.xlu0 %v1032, 80
        %v1479 = vpop.permute.xlu0 %1478
        %v1481 = vsel %vm1037, %v1477, 0
        %v1484 = vsel %vm1037, %v1479, 0
        %1486 = vmatprep.subr.bf16.mxu0 0
        %1487 = vmatpush1.bf16.xpose.msra.mxu0 %v1484
        %1488 = vmatprep.subr.bf16.mxu0 0
        %1489 = vmatpush1.bf16.xpose.msra.mxu0 0
        %1490 = vmatprep.subr.bf16.mxu0 0
        %1491 = vmatpush1.bf16.xpose.msra.mxu0 0
        %1492 = vmatprep.subr.bf16.mxu0 0
        %1493 = vmatpush1.bf16.xpose.msra.mxu0 0
        %1494 = vmatprep.subr.bf16.mxu0 0
        %1495 = vmatpush1.bf16.xpose.msra.mxu0 0
        %1496 = vmatprep.subr.bf16.mxu0 0
        %1497 = vmatpush1.bf16.xpose.msra.mxu0 0
        %1498 = vmatprep.subr.bf16.mxu0 0
        %1499 = vmatpush1.bf16.xpose.msra.mxu0 0
        %1500 = vmatprep.subr.bf16.mxu0 0
        %1501 = vmatpush1.bf16.xpose.msra.mxu0 0
        %1502 = vmatprep.subr.bf16.mxu0 0
        %1503 = vmatpush1.bf16.xpose.msra.mxu0 0
        %1504 = vmatprep.subr.bf16.mxu0 0
        %1505 = vmatpush1.bf16.xpose.msra.mxu0 0
        %1506 = vmatprep.subr.bf16.mxu0 0
        %1507 = vmatpush1.bf16.xpose.msra.mxu0 0
        %1508 = vmatprep.subr.bf16.mxu0 0
        %1509 = vmatpush1.bf16.xpose.msra.mxu0 0
        %1510 = vmatprep.subr.bf16.mxu0 0
        %1511 = vmatpush1.bf16.xpose.msra.mxu0 0
        %1512 = vmatprep.subr.bf16.mxu0 0
        %1513 = vmatpush1.bf16.xpose.msra.mxu0 0
        %1514 = vmatprep.subr.bf16.mxu0 0
        %1515 = vmatpush1.bf16.xpose.msra.mxu0 0
        %1516 = vmatprep.subr.bf16.mxu0 0
        %1517 = vmatpush1.bf16.xpose.msra.mxu0 0
        %1518 = vmatprep.mubr.bf16.mxu0 0
        %1519 = vmatmul.mubr.bf16.gmra.mrb[0].mxu0 %v1481
        %v1520 = vpop.f32.mrb[0].mxu0
        %v1521 = vadd.f32 0.0, %v1520
        %v1522 = vpop.f32.mrb[0].mxu0
        %v1523 = vpop.f32.mrb[0].mxu0
        %v1524 = vpop.f32.mrb[0].mxu0
        %1525 = vdwg.mxu0
        %1526 = vrot.lane.b32.xlu0 %v1031, 112
        %v1527 = vpop.permute.xlu0 %1526
        %1528 = vrot.lane.b32.xlu0 %v1033, 80
        %v1529 = vpop.permute.xlu0 %1528
        %v1531 = vsel %vm1037, %v1527, 0
        %v1534 = vsel %vm1037, %v1529, 0
        %1536 = vmatprep.subr.bf16.mxu0 0
        %1537 = vmatpush1.bf16.xpose.msra.mxu0 %v1534
        %1538 = vmatprep.subr.bf16.mxu0 0
        %1539 = vmatpush1.bf16.xpose.msra.mxu0 0
        %1540 = vmatprep.subr.bf16.mxu0 0
        %1541 = vmatpush1.bf16.xpose.msra.mxu0 0
        %1542 = vmatprep.subr.bf16.mxu0 0
        %1543 = vmatpush1.bf16.xpose.msra.mxu0 0
        %1544 = vmatprep.subr.bf16.mxu0 0
        %1545 = vmatpush1.bf16.xpose.msra.mxu0 0
        %1546 = vmatprep.subr.bf16.mxu0 0
        %1547 = vmatpush1.bf16.xpose.msra.mxu0 0
        %1548 = vmatprep.subr.bf16.mxu0 0
        %1549 = vmatpush1.bf16.xpose.msra.mxu0 0
        %1550 = vmatprep.subr.bf16.mxu0 0
        %1551 = vmatpush1.bf16.xpose.msra.mxu0 0
        %1552 = vmatprep.subr.bf16.mxu0 0
        %1553 = vmatpush1.bf16.xpose.msra.mxu0 0
        %1554 = vmatprep.subr.bf16.mxu0 0
        %1555 = vmatpush1.bf16.xpose.msra.mxu0 0
        %1556 = vmatprep.subr.bf16.mxu0 0
        %1557 = vmatpush1.bf16.xpose.msra.mxu0 0
        %1558 = vmatprep.subr.bf16.mxu0 0
        %1559 = vmatpush1.bf16.xpose.msra.mxu0 0
        %1560 = vmatprep.subr.bf16.mxu0 0
        %1561 = vmatpush1.bf16.xpose.msra.mxu0 0
        %1562 = vmatprep.subr.bf16.mxu0 0
        %1563 = vmatpush1.bf16.xpose.msra.mxu0 0
        %1564 = vmatprep.subr.bf16.mxu0 0
        %1565 = vmatpush1.bf16.xpose.msra.mxu0 0
        %1566 = vmatprep.subr.bf16.mxu0 0
        %1567 = vmatpush1.bf16.xpose.msra.mxu0 0
        %1568 = vmatprep.mubr.bf16.mxu0 0
        %1569 = vmatmul.mubr.bf16.gmra.mrb[0].mxu0 %v1531
        %v1570 = vpop.f32.mrb[0].mxu0
        %v1571 = vadd.f32 0.0, %v1570
        %v1572 = vpop.f32.mrb[0].mxu0
        %v1573 = vpop.f32.mrb[0].mxu0
        %v1574 = vpop.f32.mrb[0].mxu0
        %1575 = vdwg.mxu0
        %v1576 = vsel %vm1037, %v1521, -inf
        %1577 = vmax.xlane.f32.xlu0 %v1576
        %v1578 = vpop.xlane.xlu0 %1577
        %v1579 = vsel %vm1037, %v1571, -inf
        %1580 = vmax.xlane.f32.xlu0 %v1579
        %v1581 = vpop.xlane.xlu0 %1580
        %v1582 = vsub.f32 %v1521, %v1578
        %v1583 = vsub.f32 %v1571, %v1581
        %v1584 = vmul.f32 %v1582, 1.442695
        %v1585 = vpow.pop %v1584
        %v1586 = vmul.f32 %v1583, 1.442695
        %v1587 = vpow.pop %v1586
        %v1588 = vsel %vm1037, %v1585, 0.0
        %1589 = vadd.xlane.f32.xlu0 %v1588
        %v1590 = vpop.xlane.xlu0 %1589
        %v1591 = vsel %vm1037, %v1587, 0.0
        %1592 = vadd.xlane.f32.xlu0 %v1591
        %v1593 = vpop.xlane.xlu0 %1592
        %v1594 = vrcp.pop %v1590
        %v1595 = vrcp.pop %v1593
        %v1596 = vmul.f32 %v1585, %v1594
        %v1597 = vmul.f32 %v1587, %v1595
        %v1598 = vpack.c.bf16 %v1596, %v1596
        %v1599 = vpack.c.bf16 %v1597, %v1597
        %1600 = vrot.lane.b32.xlu0 %v1032, 48
        %v1601 = vpop.permute.xlu0 %1600
        %v1603 = vsel %vm1037, %v1598, 0
        %v1606 = vsel %vm1162, %v1601, 0
        %1608 = vmatprep.subr.bf16.mxu0 0
        %1609 = vmatpush1.bf16.msra.mxu0 %v1606
        %1610 = vmatprep.subr.bf16.mxu0 0
        %1611 = vmatpush1.bf16.msra.mxu0 0
        %1612 = vmatprep.subr.bf16.mxu0 0
        %1613 = vmatpush1.bf16.msra.mxu0 0
        %1614 = vmatprep.subr.bf16.mxu0 0
        %1615 = vmatpush1.bf16.msra.mxu0 0
        %1616 = vmatprep.subr.bf16.mxu0 0
        %1617 = vmatpush1.bf16.msra.mxu0 0
        %1618 = vmatprep.subr.bf16.mxu0 0
        %1619 = vmatpush1.bf16.msra.mxu0 0
        %1620 = vmatprep.subr.bf16.mxu0 0
        %1621 = vmatpush1.bf16.msra.mxu0 0
        %1622 = vmatprep.subr.bf16.mxu0 0
        %1623 = vmatpush1.bf16.msra.mxu0 0
        %1624 = vmatprep.subr.bf16.mxu0 0
        %1625 = vmatpush1.bf16.msra.mxu0 0
        %1626 = vmatprep.subr.bf16.mxu0 0
        %1627 = vmatpush1.bf16.msra.mxu0 0
        %1628 = vmatprep.subr.bf16.mxu0 0
        %1629 = vmatpush1.bf16.msra.mxu0 0
        %1630 = vmatprep.subr.bf16.mxu0 0
        %1631 = vmatpush1.bf16.msra.mxu0 0
        %1632 = vmatprep.subr.bf16.mxu0 0
        %1633 = vmatpush1.bf16.msra.mxu0 0
        %1634 = vmatprep.subr.bf16.mxu0 0
        %1635 = vmatpush1.bf16.msra.mxu0 0
        %1636 = vmatprep.subr.bf16.mxu0 0
        %1637 = vmatpush1.bf16.msra.mxu0 0
        %1638 = vmatprep.subr.bf16.mxu0 0
        %1639 = vmatpush1.bf16.msra.mxu0 0
        %1640 = vmatprep.mubr.bf16.mxu0 0
        %1641 = vmatmul.mubr.bf16.gmra.mrb[0].mxu0 %v1603
        %v1642 = vpop.f32.mrb[0].mxu0
        %v1643 = vadd.f32 0.0, %v1642
        %v1644 = vpop.f32.mrb[0].mxu0
        %v1645 = vpop.f32.mrb[0].mxu0
        %v1646 = vpop.f32.mrb[0].mxu0
        %1647 = vdwg.mxu0
        %1648 = vrot.lane.b32.xlu0 %v1033, 48
        %v1649 = vpop.permute.xlu0 %1648
        %v1651 = vsel %vm1037, %v1599, 0
        %v1654 = vsel %vm1162, %v1649, 0
        %1656 = vmatprep.subr.bf16.mxu0 0
        %1657 = vmatpush1.bf16.msra.mxu0 %v1654
        %1658 = vmatprep.subr.bf16.mxu0 0
        %1659 = vmatpush1.bf16.msra.mxu0 0
        %1660 = vmatprep.subr.bf16.mxu0 0
        %1661 = vmatpush1.bf16.msra.mxu0 0
        %1662 = vmatprep.subr.bf16.mxu0 0
        %1663 = vmatpush1.bf16.msra.mxu0 0
        %1664 = vmatprep.subr.bf16.mxu0 0
        %1665 = vmatpush1.bf16.msra.mxu0 0
        %1666 = vmatprep.subr.bf16.mxu0 0
        %1667 = vmatpush1.bf16.msra.mxu0 0
        %1668 = vmatprep.subr.bf16.mxu0 0
        %1669 = vmatpush1.bf16.msra.mxu0 0
        %1670 = vmatprep.subr.bf16.mxu0 0
        %1671 = vmatpush1.bf16.msra.mxu0 0
        %1672 = vmatprep.subr.bf16.mxu0 0
        %1673 = vmatpush1.bf16.msra.mxu0 0
        %1674 = vmatprep.subr.bf16.mxu0 0
        %1675 = vmatpush1.bf16.msra.mxu0 0
        %1676 = vmatprep.subr.bf16.mxu0 0
        %1677 = vmatpush1.bf16.msra.mxu0 0
        %1678 = vmatprep.subr.bf16.mxu0 0
        %1679 = vmatpush1.bf16.msra.mxu0 0
        %1680 = vmatprep.subr.bf16.mxu0 0
        %1681 = vmatpush1.bf16.msra.mxu0 0
        %1682 = vmatprep.subr.bf16.mxu0 0
        %1683 = vmatpush1.bf16.msra.mxu0 0
        %1684 = vmatprep.subr.bf16.mxu0 0
        %1685 = vmatpush1.bf16.msra.mxu0 0
        %1686 = vmatprep.subr.bf16.mxu0 0
        %1687 = vmatpush1.bf16.msra.mxu0 0
        %1688 = vmatprep.mubr.bf16.mxu0 0
        %1689 = vmatmul.mubr.bf16.gmra.mrb[0].mxu0 %v1651
        %v1690 = vpop.f32.mrb[0].mxu0
        %v1691 = vadd.f32 0.0, %v1690
        %v1692 = vpop.f32.mrb[0].mxu0
        %v1693 = vpop.f32.mrb[0].mxu0
        %v1694 = vpop.f32.mrb[0].mxu0
        %1695 = vdwg.mxu0
        %1696 = vrot.lane.b32.xlu0 %v1030, 104
        %v1697 = vpop.permute.xlu0 %1696
        %1698 = vrot.lane.b32.xlu0 %v1032, 72
        %v1699 = vpop.permute.xlu0 %1698
        %v1701 = vsel %vm1037, %v1697, 0
        %v1704 = vsel %vm1037, %v1699, 0
        %1706 = vmatprep.subr.bf16.mxu0 0
        %1707 = vmatpush1.bf16.xpose.msra.mxu0 %v1704
        %1708 = vmatprep.subr.bf16.mxu0 0
        %1709 = vmatpush1.bf16.xpose.msra.mxu0 0
        %1710 = vmatprep.subr.bf16.mxu0 0
        %1711 = vmatpush1.bf16.xpose.msra.mxu0 0
        %1712 = vmatprep.subr.bf16.mxu0 0
        %1713 = vmatpush1.bf16.xpose.msra.mxu0 0
        %1714 = vmatprep.subr.bf16.mxu0 0
        %1715 = vmatpush1.bf16.xpose.msra.mxu0 0
        %1716 = vmatprep.subr.bf16.mxu0 0
        %1717 = vmatpush1.bf16.xpose.msra.mxu0 0
        %1718 = vmatprep.subr.bf16.mxu0 0
        %1719 = vmatpush1.bf16.xpose.msra.mxu0 0
        %1720 = vmatprep.subr.bf16.mxu0 0
        %1721 = vmatpush1.bf16.xpose.msra.mxu0 0
        %1722 = vmatprep.subr.bf16.mxu0 0
        %1723 = vmatpush1.bf16.xpose.msra.mxu0 0
        %1724 = vmatprep.subr.bf16.mxu0 0
        %1725 = vmatpush1.bf16.xpose.msra.mxu0 0
        %1726 = vmatprep.subr.bf16.mxu0 0
        %1727 = vmatpush1.bf16.xpose.msra.mxu0 0
        %1728 = vmatprep.subr.bf16.mxu0 0
        %1729 = vmatpush1.bf16.xpose.msra.mxu0 0
        %1730 = vmatprep.subr.bf16.mxu0 0
        %1731 = vmatpush1.bf16.xpose.msra.mxu0 0
        %1732 = vmatprep.subr.bf16.mxu0 0
        %1733 = vmatpush1.bf16.xpose.msra.mxu0 0
        %1734 = vmatprep.subr.bf16.mxu0 0
        %1735 = vmatpush1.bf16.xpose.msra.mxu0 0
        %1736 = vmatprep.subr.bf16.mxu0 0
        %1737 = vmatpush1.bf16.xpose.msra.mxu0 0
        %1738 = vmatprep.mubr.bf16.mxu0 0
        %1739 = vmatmul.mubr.bf16.gmra.mrb[0].mxu0 %v1701
        %v1740 = vpop.f32.mrb[0].mxu0
        %v1741 = vadd.f32 0.0, %v1740
        %v1742 = vpop.f32.mrb[0].mxu0
        %v1743 = vpop.f32.mrb[0].mxu0
        %v1744 = vpop.f32.mrb[0].mxu0
        %1745 = vdwg.mxu0
        %1746 = vrot.lane.b32.xlu0 %v1031, 104
        %v1747 = vpop.permute.xlu0 %1746
        %1748 = vrot.lane.b32.xlu0 %v1033, 72
        %v1749 = vpop.permute.xlu0 %1748
        %v1751 = vsel %vm1037, %v1747, 0
        %v1754 = vsel %vm1037, %v1749, 0
        %1756 = vmatprep.subr.bf16.mxu0 0
        %1757 = vmatpush1.bf16.xpose.msra.mxu0 %v1754
        %1758 = vmatprep.subr.bf16.mxu0 0
        %1759 = vmatpush1.bf16.xpose.msra.mxu0 0
        %1760 = vmatprep.subr.bf16.mxu0 0
        %1761 = vmatpush1.bf16.xpose.msra.mxu0 0
        %1762 = vmatprep.subr.bf16.mxu0 0
        %1763 = vmatpush1.bf16.xpose.msra.mxu0 0
        %1764 = vmatprep.subr.bf16.mxu0 0
        %1765 = vmatpush1.bf16.xpose.msra.mxu0 0
        %1766 = vmatprep.subr.bf16.mxu0 0
        %1767 = vmatpush1.bf16.xpose.msra.mxu0 0
        %1768 = vmatprep.subr.bf16.mxu0 0
        %1769 = vmatpush1.bf16.xpose.msra.mxu0 0
        %1770 = vmatprep.subr.bf16.mxu0 0
        %1771 = vmatpush1.bf16.xpose.msra.mxu0 0
        %1772 = vmatprep.subr.bf16.mxu0 0
        %1773 = vmatpush1.bf16.xpose.msra.mxu0 0
        %1774 = vmatprep.subr.bf16.mxu0 0
        %1775 = vmatpush1.bf16.xpose.msra.mxu0 0
        %1776 = vmatprep.subr.bf16.mxu0 0
        %1777 = vmatpush1.bf16.xpose.msra.mxu0 0
        %1778 = vmatprep.subr.bf16.mxu0 0
        %1779 = vmatpush1.bf16.xpose.msra.mxu0 0
        %1780 = vmatprep.subr.bf16.mxu0 0
        %1781 = vmatpush1.bf16.xpose.msra.mxu0 0
        %1782 = vmatprep.subr.bf16.mxu0 0
        %1783 = vmatpush1.bf16.xpose.msra.mxu0 0
        %1784 = vmatprep.subr.bf16.mxu0 0
        %1785 = vmatpush1.bf16.xpose.msra.mxu0 0
        %1786 = vmatprep.subr.bf16.mxu0 0
        %1787 = vmatpush1.bf16.xpose.msra.mxu0 0
        %1788 = vmatprep.mubr.bf16.mxu0 0
        %1789 = vmatmul.mubr.bf16.gmra.mrb[0].mxu0 %v1751
        %v1790 = vpop.f32.mrb[0].mxu0
        %v1791 = vadd.f32 0.0, %v1790
        %v1792 = vpop.f32.mrb[0].mxu0
        %v1793 = vpop.f32.mrb[0].mxu0
        %v1794 = vpop.f32.mrb[0].mxu0
        %1795 = vdwg.mxu0
        %v1796 = vsel %vm1037, %v1741, -inf
        %1797 = vmax.xlane.f32.xlu0 %v1796
        %v1798 = vpop.xlane.xlu0 %1797
        %v1799 = vsel %vm1037, %v1791, -inf
        %1800 = vmax.xlane.f32.xlu0 %v1799
        %v1801 = vpop.xlane.xlu0 %1800
        %v1802 = vsub.f32 %v1741, %v1798
        %v1803 = vsub.f32 %v1791, %v1801
        %v1804 = vmul.f32 %v1802, 1.442695
        %v1805 = vpow.pop %v1804
        %v1806 = vmul.f32 %v1803, 1.442695
        %v1807 = vpow.pop %v1806
        %v1808 = vsel %vm1037, %v1805, 0.0
        %1809 = vadd.xlane.f32.xlu0 %v1808
        %v1810 = vpop.xlane.xlu0 %1809
        %v1811 = vsel %vm1037, %v1807, 0.0
        %1812 = vadd.xlane.f32.xlu0 %v1811
        %v1813 = vpop.xlane.xlu0 %1812
        %v1814 = vrcp.pop %v1810
        %v1815 = vrcp.pop %v1813
        %v1816 = vmul.f32 %v1805, %v1814
        %v1817 = vmul.f32 %v1807, %v1815
        %v1818 = vpack.c.bf16 %v1816, %v1816
        %v1819 = vpack.c.bf16 %v1817, %v1817
        %1820 = vrot.lane.b32.xlu0 %v1032, 40
        %v1821 = vpop.permute.xlu0 %1820
        %v1823 = vsel %vm1037, %v1818, 0
        %v1826 = vsel %vm1162, %v1821, 0
        %1828 = vmatprep.subr.bf16.mxu0 0
        %1829 = vmatpush1.bf16.msra.mxu0 %v1826
        %1830 = vmatprep.subr.bf16.mxu0 0
        %1831 = vmatpush1.bf16.msra.mxu0 0
        %1832 = vmatprep.subr.bf16.mxu0 0
        %1833 = vmatpush1.bf16.msra.mxu0 0
        %1834 = vmatprep.subr.bf16.mxu0 0
        %1835 = vmatpush1.bf16.msra.mxu0 0
        %1836 = vmatprep.subr.bf16.mxu0 0
        %1837 = vmatpush1.bf16.msra.mxu0 0
        %1838 = vmatprep.subr.bf16.mxu0 0
        %1839 = vmatpush1.bf16.msra.mxu0 0
        %1840 = vmatprep.subr.bf16.mxu0 0
        %1841 = vmatpush1.bf16.msra.mxu0 0
        %1842 = vmatprep.subr.bf16.mxu0 0
        %1843 = vmatpush1.bf16.msra.mxu0 0
        %1844 = vmatprep.subr.bf16.mxu0 0
        %1845 = vmatpush1.bf16.msra.mxu0 0
        %1846 = vmatprep.subr.bf16.mxu0 0
        %1847 = vmatpush1.bf16.msra.mxu0 0
        %1848 = vmatprep.subr.bf16.mxu0 0
        %1849 = vmatpush1.bf16.msra.mxu0 0
        %1850 = vmatprep.subr.bf16.mxu0 0
        %1851 = vmatpush1.bf16.msra.mxu0 0
        %1852 = vmatprep.subr.bf16.mxu0 0
        %1853 = vmatpush1.bf16.msra.mxu0 0
        %1854 = vmatprep.subr.bf16.mxu0 0
        %1855 = vmatpush1.bf16.msra.mxu0 0
        %1856 = vmatprep.subr.bf16.mxu0 0
        %1857 = vmatpush1.bf16.msra.mxu0 0
        %1858 = vmatprep.subr.bf16.mxu0 0
        %1859 = vmatpush1.bf16.msra.mxu0 0
        %1860 = vmatprep.mubr.bf16.mxu0 0
        %1861 = vmatmul.mubr.bf16.gmra.mrb[0].mxu0 %v1823
        %v1862 = vpop.f32.mrb[0].mxu0
        %v1863 = vadd.f32 0.0, %v1862
        %v1864 = vpop.f32.mrb[0].mxu0
        %v1865 = vpop.f32.mrb[0].mxu0
        %v1866 = vpop.f32.mrb[0].mxu0
        %1867 = vdwg.mxu0
        %1868 = vrot.lane.b32.xlu0 %v1033, 40
        %v1869 = vpop.permute.xlu0 %1868
        %v1871 = vsel %vm1037, %v1819, 0
        %v1874 = vsel %vm1162, %v1869, 0
        %1876 = vmatprep.subr.bf16.mxu0 0
        %1877 = vmatpush1.bf16.msra.mxu0 %v1874
        %1878 = vmatprep.subr.bf16.mxu0 0
        %1879 = vmatpush1.bf16.msra.mxu0 0
        %1880 = vmatprep.subr.bf16.mxu0 0
        %1881 = vmatpush1.bf16.msra.mxu0 0
        %1882 = vmatprep.subr.bf16.mxu0 0
        %1883 = vmatpush1.bf16.msra.mxu0 0
        %1884 = vmatprep.subr.bf16.mxu0 0
        %1885 = vmatpush1.bf16.msra.mxu0 0
        %1886 = vmatprep.subr.bf16.mxu0 0
        %1887 = vmatpush1.bf16.msra.mxu0 0
        %1888 = vmatprep.subr.bf16.mxu0 0
        %1889 = vmatpush1.bf16.msra.mxu0 0
        %1890 = vmatprep.subr.bf16.mxu0 0
        %1891 = vmatpush1.bf16.msra.mxu0 0
        %1892 = vmatprep.subr.bf16.mxu0 0
        %1893 = vmatpush1.bf16.msra.mxu0 0
        %1894 = vmatprep.subr.bf16.mxu0 0
        %1895 = vmatpush1.bf16.msra.mxu0 0
        %1896 = vmatprep.subr.bf16.mxu0 0
        %1897 = vmatpush1.bf16.msra.mxu0 0
        %1898 = vmatprep.subr.bf16.mxu0 0
        %1899 = vmatpush1.bf16.msra.mxu0 0
        %1900 = vmatprep.subr.bf16.mxu0 0
        %1901 = vmatpush1.bf16.msra.mxu0 0
        %1902 = vmatprep.subr.bf16.mxu0 0
        %1903 = vmatpush1.bf16.msra.mxu0 0
        %1904 = vmatprep.subr.bf16.mxu0 0
        %1905 = vmatpush1.bf16.msra.mxu0 0
        %1906 = vmatprep.subr.bf16.mxu0 0
        %1907 = vmatpush1.bf16.msra.mxu0 0
        %1908 = vmatprep.mubr.bf16.mxu0 0
        %1909 = vmatmul.mubr.bf16.gmra.mrb[0].mxu0 %v1871
        %v1910 = vpop.f32.mrb[0].mxu0
        %v1911 = vadd.f32 0.0, %v1910
        %v1912 = vpop.f32.mrb[0].mxu0
        %v1913 = vpop.f32.mrb[0].mxu0
        %v1914 = vpop.f32.mrb[0].mxu0
        %1915 = vdwg.mxu0
        %1918 = vrot.lane.b32.xlu0 %v1423, 8
        %v1919 = vpop.permute.xlu0 %1918
        %1920 = vrot.lane.b32.xlu0 %v1471, 8
        %v1921 = vpop.permute.xlu0 %1920
        %1926 = vrot.lane.b32.xlu0 %v1643, 16
        %v1927 = vpop.permute.xlu0 %1926
        %1928 = vrot.lane.b32.xlu0 %v1691, 16
        %v1929 = vpop.permute.xlu0 %1928
        %1934 = vrot.lane.b32.xlu0 %v1863, 24
        %v1935 = vpop.permute.xlu0 %1934
        %1936 = vrot.lane.b32.xlu0 %v1911, 24
        %v1937 = vpop.permute.xlu0 %1936
        %v1940 = vsel %vm1037, %v1201, %v1919
        %v1941 = vsel %vm1037, %v1249, %v1921
        %vm1942 = vcmask 130048
        %v1943 = vsel %vm1942, %v1940, %v1927
        %v1944 = vsel %vm1942, %v1941, %v1929
        %vm1945 = vcmask 195584
        %v1946 = vsel %vm1945, %v1943, %v1935
        %v1947 = vsel %vm1945, %v1944, %v1937
        %v1948 = vpack.c.bf16 %v1947, %v1946
        %v1949 = vld [vmem:[%s797] sm:$0xf]
        %v1950 = vld [vmem:[%s797 + $0x4] sm:$0xf]
        %v1951 = vld [vmem:[%s797 + $0x8] sm:$0xf]
        %v1952 = vld [vmem:[%s797 + $0xc] sm:$0xf]
        %v1953 = vld [vmem:[%s800] sm:$0x1]
        %v1955 = vlaneseq
        %v1956 = vshrl.u32 %v1955, 7
        %v1957 = vsub.s32 0, %v1956
        %v1958 = vrot.slane %v1953, %v1957
        %v1964 = vunpack.c.l.b16 %v1949
        %v1965 = vunpack.c.l.b16 %v1950
        %v1966 = vunpack.c.l.b16 %v1951
        %v1967 = vunpack.c.l.b16 %v1952
        %v1968 = vpack.c.b16 %v1965, %v1964
        %v1969 = vpack.c.b16 %v1967, %v1966
        %v1973 = vsel %vm983, %v1948, 0
        %1975 = vmatprep.subr.bf16.mxu0 0
        %1976 = vmatpush1.bf16.msra.mxu0 %v1968
        %1977 = vmatprep.subr.bf16.mxu0 0
        %1978 = vmatpush1.bf16.msra.mxu0 %v1969
        %1979 = vmatprep.subr.bf16.mxu0 0
        %1980 = vmatpush1.bf16.msra.mxu0 0
        %1981 = vmatprep.subr.bf16.mxu0 0
        %1982 = vmatpush1.bf16.msra.mxu0 0
        %1983 = vmatprep.subr.bf16.mxu0 0
        %1984 = vmatpush1.bf16.msra.mxu0 0
        %1985 = vmatprep.subr.bf16.mxu0 0
        %1986 = vmatpush1.bf16.msra.mxu0 0
        %1987 = vmatprep.subr.bf16.mxu0 0
        %1988 = vmatpush1.bf16.msra.mxu0 0
        %1989 = vmatprep.subr.bf16.mxu0 0
        %1990 = vmatpush1.bf16.msra.mxu0 0
        %1991 = vmatprep.subr.bf16.mxu0 0
        %1992 = vmatpush1.bf16.msra.mxu0 0
        %1993 = vmatprep.subr.bf16.mxu0 0
        %1994 = vmatpush1.bf16.msra.mxu0 0
        %1995 = vmatprep.subr.bf16.mxu0 0
        %1996 = vmatpush1.bf16.msra.mxu0 0
        %1997 = vmatprep.subr.bf16.mxu0 0
        %1998 = vmatpush1.bf16.msra.mxu0 0
        %1999 = vmatprep.subr.bf16.mxu0 0
        %2000 = vmatpush1.bf16.msra.mxu0 0
        %2001 = vmatprep.subr.bf16.mxu0 0
        %2002 = vmatpush1.bf16.msra.mxu0 0
        %2003 = vmatprep.subr.bf16.mxu0 0
        %2004 = vmatpush1.bf16.msra.mxu0 0
        %2005 = vmatprep.subr.bf16.mxu0 0
        %2006 = vmatpush1.bf16.msra.mxu0 0
        %2007 = vmatprep.mubr.bf16.mxu0 0
        %2008 = vmatmul.mubr.bf16.gmra.mrb[0].mxu0 %v1973
        %v2009 = vpop.f32.mrb[0].mxu0
        %v2010 = vadd.f32 %v1958, %v2009
        %v2011 = vpop.f32.mrb[0].mxu0
        %v2012 = vpop.f32.mrb[0].mxu0
        %v2013 = vadd.f32 %v1958, %v2012
        %v2014 = vpop.f32.mrb[0].mxu0
        %2015 = vdwg.mxu0
        %v2016 = vadd.f32 %v957, %v2010
        %v2017 = vadd.f32 %v958, %v2013
        %v2018 = vld [vmem:[%s803] sm:$0x1]
        %v2019 = vld [vmem:[%s806] sm:$0x1]
        %v2020 = vsel %vm983, %v2016, 0.0
        %2021 = vadd.xlane.f32.xlu0 %v2020
        %v2022 = vpop.xlane.xlu0 %2021
        %v2023 = vsel %vm983, %v2017, 0.0
        %2024 = vadd.xlane.f32.xlu0 %v2023
        %v2025 = vpop.xlane.xlu0 %2024
        %v2026 = vrcp.pop 32.0
        %v2027 = vmul.f32 %v2022, %v2026
        %v2028 = vmul.f32 %v2025, %v2026
        %v2029 = vsub.f32 %v2016, %v2027
        %v2030 = vsub.f32 %v2017, %v2028
        %v2031 = vmul.f32 %v2029, %v2029
        %v2032 = vmul.f32 %v2030, %v2030
        %v2033 = vsel %vm983, %v2031, 0.0
        %2034 = vadd.xlane.f32.xlu0 %v2033
        %v2035 = vpop.xlane.xlu0 %2034
        %v2036 = vsel %vm983, %v2032, 0.0
        %2037 = vadd.xlane.f32.xlu0 %v2036
        %v2038 = vpop.xlane.xlu0 %2037
        %v2039 = vmul.f32 %v2035, %v2026
        %v2040 = vmul.f32 %v2038, %v2026
        %v2041 = vadd.f32 %v2039, 1e-05
        %v2042 = vadd.f32 %v2040, 1e-05
        %v2043 = vrsqrt.pop %v2041
        %v2044 = vrsqrt.pop %v2042
        %v2045 = vmul.f32 %v2029, %v2043
        %v2046 = vmul.f32 %v2030, %v2044
        %v2048 = vlaneseq
        %v2049 = vshrl.u32 %v2048, 7
        %v2050 = vsub.s32 0, %v2049
        %v2051 = vrot.slane %v2018, %v2050
        %v2053 = vmul.f32 %v2045, %v2051
        %v2054 = vmul.f32 %v2046, %v2051
        %v2056 = vlaneseq
        %v2057 = vshrl.u32 %v2056, 7
        %v2058 = vsub.s32 0, %v2057
        %v2059 = vrot.slane %v2019, %v2058
        %v2061 = vadd.f32 %v2053, %v2059
        %v2062 = vadd.f32 %v2054, %v2059
        %v2063 = vpack.c.bf16 %v2062, %v2061
        loop: start=0, step=1, limit=4
        $region105: #{tpu_custom_call.1} parent=99 // loop_pre_header
          _
        $region106: #{tpu_custom_call.1} parent=99 // loop_header
          %s2065 = sphi 0, %s2069
          %p2066 = scmp.ge.s32.totalorder %s2065, 4
          %v2070 = vphi 0.0, %v2591
          %v2071 = vphi 0.0, %v2592
        $region107: #{tpu_custom_call.1} parent=99 // loop_header_branch
          %2068 = sbr.rel (%p2066) target = $region111
        $region108: #{tpu_custom_call.1} parent=99 // loop_body
          %s2072 = smul.u32 %s2065, 512
          %s2073 = sshra.s32 %s2072, 7
          %s2074 = sand.u32 %s2072, 127
          %s2075 = smul.addr %s2073, 4
          %s2076 = scalar_lea.vmem %s811, %s2075
          %v2077 = vld [vmem:[%s2076] sm:$0xff]
          %v2078 = vld [vmem:[%s2076 + $0x8] sm:$0xff]
          %v2079 = vld [vmem:[%s2076 + $0x40] sm:$0xff]
          %v2080 = vld [vmem:[%s2076 + $0x48] sm:$0xff]
          %v2081 = vld [vmem:[%s2076 + $0x80] sm:$0xff]
          %v2082 = vld [vmem:[%s2076 + $0x88] sm:$0xff]
          %v2083 = vld [vmem:[%s2076 + $0xc0] sm:$0xff]
          %v2084 = vld [vmem:[%s2076 + $0xc8] sm:$0xff]
          %s2085 = scalar_lea.vmem %s815, %s2073
          %v2086 = vld [vmem:[%s2085] sm:$0xf]
          %v2088 = vlaneseq
          %v2089 = vshrl.u32 %v2088, 7
          %v2090 = vsub.s32 0, %v2089
          %v2091 = vrot.slane %v2086, %v2090
          %v2092 = vlaneseq
          %v2093 = vshrl.u32 %v2092, 7
          %v2094 = vsub.s32 1, %v2093
          %v2095 = vrot.slane %v2086, %v2094
          %v2096 = vlaneseq
          %v2097 = vshrl.u32 %v2096, 7
          %v2098 = vsub.s32 2, %v2097
          %v2099 = vrot.slane %v2086, %v2098
          %v2100 = vlaneseq
          %v2101 = vshrl.u32 %v2100, 7
          %v2102 = vsub.s32 3, %v2101
          %v2103 = vrot.slane %v2086, %v2102
          %v2116 = vunpack.c.l.b16 %v2077
          %v2117 = vunpack.c.h.b16 %v2077
          %v2118 = vunpack.c.l.b16 %v2078
          %v2119 = vunpack.c.h.b16 %v2078
          %v2120 = vunpack.c.l.b16 %v2079
          %v2121 = vunpack.c.h.b16 %v2079
          %v2122 = vunpack.c.l.b16 %v2080
          %v2123 = vunpack.c.h.b16 %v2080
          %v2124 = vunpack.c.l.b16 %v2081
          %v2125 = vunpack.c.h.b16 %v2081
          %v2126 = vunpack.c.l.b16 %v2082
          %v2127 = vunpack.c.h.b16 %v2082
          %v2128 = vunpack.c.l.b16 %v2083
          %v2129 = vunpack.c.h.b16 %v2083
          %v2130 = vunpack.c.l.b16 %v2084
          %v2131 = vunpack.c.h.b16 %v2084
          %v2132 = vpack.c.b16 %v2120, %v2116
          %v2133 = vpack.c.b16 %v2121, %v2117
          %v2134 = vpack.c.b16 %v2122, %v2118
          %v2135 = vpack.c.b16 %v2123, %v2119
          %v2136 = vpack.c.b16 %v2128, %v2124
          %v2137 = vpack.c.b16 %v2129, %v2125
          %v2138 = vpack.c.b16 %v2130, %v2126
          %v2139 = vpack.c.b16 %v2131, %v2127
          %v2149 = vsel %vm983, %v2063, 0
          %2151 = vmatprep.subr.bf16.mxu0 %v2133
          %2152 = vmatpush1.bf16.msra.mxu0 %v2132
          %2153 = vmatprep.subr.bf16.mxu0 %v2137
          %2154 = vmatpush1.bf16.msra.mxu0 %v2136
          %2155 = vmatprep.subr.bf16.mxu0 0
          %2156 = vmatpush1.bf16.msra.mxu0 0
          %2157 = vmatprep.subr.bf16.mxu0 0
          %2158 = vmatpush1.bf16.msra.mxu0 0
          %2159 = vmatprep.subr.bf16.mxu0 0
          %2160 = vmatpush1.bf16.msra.mxu0 0
          %2161 = vmatprep.subr.bf16.mxu0 0
          %2162 = vmatpush1.bf16.msra.mxu0 0
          %2163 = vmatprep.subr.bf16.mxu0 0
          %2164 = vmatpush1.bf16.msra.mxu0 0
          %2165 = vmatprep.subr.bf16.mxu0 0
          %2166 = vmatpush1.bf16.msra.mxu0 0
          %2167 = vmatprep.subr.bf16.mxu0 0
          %2168 = vmatpush1.bf16.msra.mxu0 0
          %2169 = vmatprep.subr.bf16.mxu0 0
          %2170 = vmatpush1.bf16.msra.mxu0 0
          %2171 = vmatprep.subr.bf16.mxu0 0
          %2172 = vmatpush1.bf16.msra.mxu0 0
          %2173 = vmatprep.subr.bf16.mxu0 0
          %2174 = vmatpush1.bf16.msra.mxu0 0
          %2175 = vmatprep.subr.bf16.mxu0 0
          %2176 = vmatpush1.bf16.msra.mxu0 0
          %2177 = vmatprep.subr.bf16.mxu0 0
          %2178 = vmatpush1.bf16.msra.mxu0 0
          %2179 = vmatprep.subr.bf16.mxu0 0
          %2180 = vmatpush1.bf16.msra.mxu0 0
          %2181 = vmatprep.subr.bf16.mxu0 0
          %2182 = vmatpush1.bf16.msra.mxu0 0
          %2183 = vmatprep.mubr.bf16.mxu0 0
          %2184 = vmatmul.mubr.bf16.gmra.mrb[0].mxu0 %v2149
          %v2185 = vpop.f32.mrb[0].mxu0
          %v2186 = vadd.f32 %v2091, %v2185
          %v2187 = vpop.f32.mrb[0].mxu0
          %v2188 = vadd.f32 %v2095, %v2187
          %v2189 = vpop.f32.mrb[0].mxu0
          %v2190 = vadd.f32 %v2091, %v2189
          %v2191 = vpop.f32.mrb[0].mxu0
          %v2192 = vadd.f32 %v2095, %v2191
          %2193 = vdwg.mxu0
          %2194 = vmatprep.subr.bf16.mxu0 %v2135
          %2195 = vmatpush1.bf16.msra.mxu0 %v2134
          %2196 = vmatprep.subr.bf16.mxu0 %v2139
          %2197 = vmatpush1.bf16.msra.mxu0 %v2138
          %2198 = vmatprep.subr.bf16.mxu0 0
          %2199 = vmatpush1.bf16.msra.mxu0 0
          %2200 = vmatprep.subr.bf16.mxu0 0
          %2201 = vmatpush1.bf16.msra.mxu0 0
          %2202 = vmatprep.subr.bf16.mxu0 0
          %2203 = vmatpush1.bf16.msra.mxu0 0
          %2204 = vmatprep.subr.bf16.mxu0 0
          %2205 = vmatpush1.bf16.msra.mxu0 0
          %2206 = vmatprep.subr.bf16.mxu0 0
          %2207 = vmatpush1.bf16.msra.mxu0 0
          %2208 = vmatprep.subr.bf16.mxu0 0
          %2209 = vmatpush1.bf16.msra.mxu0 0
          %2210 = vmatprep.subr.bf16.mxu0 0
          %2211 = vmatpush1.bf16.msra.mxu0 0
          %2212 = vmatprep.subr.bf16.mxu0 0
          %2213 = vmatpush1.bf16.msra.mxu0 0
          %2214 = vmatprep.subr.bf16.mxu0 0
          %2215 = vmatpush1.bf16.msra.mxu0 0
          %2216 = vmatprep.subr.bf16.mxu0 0
          %2217 = vmatpush1.bf16.msra.mxu0 0
          %2218 = vmatprep.subr.bf16.mxu0 0
          %2219 = vmatpush1.bf16.msra.mxu0 0
          %2220 = vmatprep.subr.bf16.mxu0 0
          %2221 = vmatpush1.bf16.msra.mxu0 0
          %2222 = vmatprep.subr.bf16.mxu0 0
          %2223 = vmatpush1.bf16.msra.mxu0 0
          %2224 = vmatprep.subr.bf16.mxu0 0
          %2225 = vmatpush1.bf16.msra.mxu0 0
          %2226 = vmatprep.mubr.bf16.mxu0 0
          %2227 = vmatmul.mubr.bf16.gmra.mrb[0].mxu0 %v2149
          %v2228 = vpop.f32.mrb[0].mxu0
          %v2229 = vadd.f32 %v2099, %v2228
          %v2230 = vpop.f32.mrb[0].mxu0
          %v2231 = vadd.f32 %v2103, %v2230
          %v2232 = vpop.f32.mrb[0].mxu0
          %v2233 = vadd.f32 %v2099, %v2232
          %v2234 = vpop.f32.mrb[0].mxu0
          %v2235 = vadd.f32 %v2103, %v2234
          %2236 = vdwg.mxu0
          %v2237 = vmax.f32 %v2186, 0.0
          %v2238 = vmax.f32 %v2188, 0.0
          %v2239 = vmax.f32 %v2229, 0.0
          %v2240 = vmax.f32 %v2231, 0.0
          %v2241 = vmax.f32 %v2190, 0.0
          %v2242 = vmax.f32 %v2192, 0.0
          %v2243 = vmax.f32 %v2233, 0.0
          %v2244 = vmax.f32 %v2235, 0.0
          %v2245 = vpack.c.bf16 %v2241, %v2237
          %v2246 = vpack.c.bf16 %v2242, %v2238
          %v2247 = vpack.c.bf16 %v2243, %v2239
          %v2248 = vpack.c.bf16 %v2244, %v2240
          %s2249 = sshra.s32 %s2072, 3
          %s2250 = sand.u32 %s2072, 7
          %s2251 = smul.addr %s2249, 4
          %s2252 = scalar_lea.vmem %s820, %s2251
          %v2253 = vld [vmem:[%s2252] sm:$0xf]
          %v2254 = vld [vmem:[%s2252 + $0x4] sm:$0xf]
          %v2255 = vld [vmem:[%s2252 + $0x8] sm:$0xf]
          %v2256 = vld [vmem:[%s2252 + $0xc] sm:$0xf]
          %v2257 = vld [vmem:[%s2252 + $0x10] sm:$0xf]
          %v2258 = vld [vmem:[%s2252 + $0x14] sm:$0xf]
          %v2259 = vld [vmem:[%s2252 + $0x18] sm:$0xf]
          %v2260 = vld [vmem:[%s2252 + $0x1c] sm:$0xf]
          %v2261 = vld [vmem:[%s2252 + $0x20] sm:$0xf]
          %v2262 = vld [vmem:[%s2252 + $0x24] sm:$0xf]
          %v2263 = vld [vmem:[%s2252 + $0x28] sm:$0xf]
          %v2264 = vld [vmem:[%s2252 + $0x2c] sm:$0xf]
          %v2265 = vld [vmem:[%s2252 + $0x30] sm:$0xf]
          %v2266 = vld [vmem:[%s2252 + $0x34] sm:$0xf]
          %v2267 = vld [vmem:[%s2252 + $0x38] sm:$0xf]
          %v2268 = vld [vmem:[%s2252 + $0x3c] sm:$0xf]
          %v2269 = vld [vmem:[%s2252 + $0x40] sm:$0xf]
          %v2270 = vld [vmem:[%s2252 + $0x44] sm:$0xf]
          %v2271 = vld [vmem:[%s2252 + $0x48] sm:$0xf]
          %v2272 = vld [vmem:[%s2252 + $0x4c] sm:$0xf]
          %v2273 = vld [vmem:[%s2252 + $0x50] sm:$0xf]
          %v2274 = vld [vmem:[%s2252 + $0x54] sm:$0xf]
          %v2275 = vld [vmem:[%s2252 + $0x58] sm:$0xf]
          %v2276 = vld [vmem:[%s2252 + $0x5c] sm:$0xf]
          %v2277 = vld [vmem:[%s2252 + $0x60] sm:$0xf]
          %v2278 = vld [vmem:[%s2252 + $0x64] sm:$0xf]
          %v2279 = vld [vmem:[%s2252 + $0x68] sm:$0xf]
          %v2280 = vld [vmem:[%s2252 + $0x6c] sm:$0xf]
          %v2281 = vld [vmem:[%s2252 + $0x70] sm:$0xf]
          %v2282 = vld [vmem:[%s2252 + $0x74] sm:$0xf]
          %v2283 = vld [vmem:[%s2252 + $0x78] sm:$0xf]
          %v2284 = vld [vmem:[%s2252 + $0x7c] sm:$0xf]
          %v2285 = vld [vmem:[%s2252 + $0x80] sm:$0xf]
          %v2286 = vld [vmem:[%s2252 + $0x84] sm:$0xf]
          %v2287 = vld [vmem:[%s2252 + $0x88] sm:$0xf]
          %v2288 = vld [vmem:[%s2252 + $0x8c] sm:$0xf]
          %v2289 = vld [vmem:[%s2252 + $0x90] sm:$0xf]
          %v2290 = vld [vmem:[%s2252 + $0x94] sm:$0xf]
          %v2291 = vld [vmem:[%s2252 + $0x98] sm:$0xf]
          %v2292 = vld [vmem:[%s2252 + $0x9c] sm:$0xf]
          %v2293 = vld [vmem:[%s2252 + $0xa0] sm:$0xf]
          %v2294 = vld [vmem:[%s2252 + $0xa4] sm:$0xf]
          %v2295 = vld [vmem:[%s2252 + $0xa8] sm:$0xf]
          %v2296 = vld [vmem:[%s2252 + $0xac] sm:$0xf]
          %v2297 = vld [vmem:[%s2252 + $0xb0] sm:$0xf]
          %v2298 = vld [vmem:[%s2252 + $0xb4] sm:$0xf]
          %v2299 = vld [vmem:[%s2252 + $0xb8] sm:$0xf]
          %v2300 = vld [vmem:[%s2252 + $0xbc] sm:$0xf]
          %v2301 = vld [vmem:[%s2252 + $0xc0] sm:$0xf]
          %v2302 = vld [vmem:[%s2252 + $0xc4] sm:$0xf]
          %v2303 = vld [vmem:[%s2252 + $0xc8] sm:$0xf]
          %v2304 = vld [vmem:[%s2252 + $0xcc] sm:$0xf]
          %v2305 = vld [vmem:[%s2252 + $0xd0] sm:$0xf]
          %v2306 = vld [vmem:[%s2252 + $0xd4] sm:$0xf]
          %v2307 = vld [vmem:[%s2252 + $0xd8] sm:$0xf]
          %v2308 = vld [vmem:[%s2252 + $0xdc] sm:$0xf]
          %v2309 = vld [vmem:[%s2252 + $0xe0] sm:$0xf]
          %v2310 = vld [vmem:[%s2252 + $0xe4] sm:$0xf]
          %v2311 = vld [vmem:[%s2252 + $0xe8] sm:$0xf]
          %v2312 = vld [vmem:[%s2252 + $0xec] sm:$0xf]
          %v2313 = vld [vmem:[%s2252 + $0xf0] sm:$0xf]
          %v2314 = vld [vmem:[%s2252 + $0xf4] sm:$0xf]
          %v2315 = vld [vmem:[%s2252 + $0xf8] sm:$0xf]
          %v2316 = vld [vmem:[%s2252 + $0xfc] sm:$0xf]
          %v2381 = vunpack.c.l.b16 %v2253
          %v2382 = vunpack.c.l.b16 %v2254
          %v2383 = vunpack.c.l.b16 %v2255
          %v2384 = vunpack.c.l.b16 %v2256
          %v2385 = vunpack.c.l.b16 %v2257
          %v2386 = vunpack.c.l.b16 %v2258
          %v2387 = vunpack.c.l.b16 %v2259
          %v2388 = vunpack.c.l.b16 %v2260
          %v2389 = vunpack.c.l.b16 %v2261
          %v2390 = vunpack.c.l.b16 %v2262
          %v2391 = vunpack.c.l.b16 %v2263
          %v2392 = vunpack.c.l.b16 %v2264
          %v2393 = vunpack.c.l.b16 %v2265
          %v2394 = vunpack.c.l.b16 %v2266
          %v2395 = vunpack.c.l.b16 %v2267
          %v2396 = vunpack.c.l.b16 %v2268
          %v2397 = vunpack.c.l.b16 %v2269
          %v2398 = vunpack.c.l.b16 %v2270
          %v2399 = vunpack.c.l.b16 %v2271
          %v2400 = vunpack.c.l.b16 %v2272
          %v2401 = vunpack.c.l.b16 %v2273
          %v2402 = vunpack.c.l.b16 %v2274
          %v2403 = vunpack.c.l.b16 %v2275
          %v2404 = vunpack.c.l.b16 %v2276
          %v2405 = vunpack.c.l.b16 %v2277
          %v2406 = vunpack.c.l.b16 %v2278
          %v2407 = vunpack.c.l.b16 %v2279
          %v2408 = vunpack.c.l.b16 %v2280
          %v2409 = vunpack.c.l.b16 %v2281
          %v2410 = vunpack.c.l.b16 %v2282
          %v2411 = vunpack.c.l.b16 %v2283
          %v2412 = vunpack.c.l.b16 %v2284
          %v2413 = vunpack.c.l.b16 %v2285
          %v2414 = vunpack.c.l.b16 %v2286
          %v2415 = vunpack.c.l.b16 %v2287
          %v2416 = vunpack.c.l.b16 %v2288
          %v2417 = vunpack.c.l.b16 %v2289
          %v2418 = vunpack.c.l.b16 %v2290
          %v2419 = vunpack.c.l.b16 %v2291
          %v2420 = vunpack.c.l.b16 %v2292
          %v2421 = vunpack.c.l.b16 %v2293
          %v2422 = vunpack.c.l.b16 %v2294
          %v2423 = vunpack.c.l.b16 %v2295
          %v2424 = vunpack.c.l.b16 %v2296
          %v2425 = vunpack.c.l.b16 %v2297
          %v2426 = vunpack.c.l.b16 %v2298
          %v2427 = vunpack.c.l.b16 %v2299
          %v2428 = vunpack.c.l.b16 %v2300
          %v2429 = vunpack.c.l.b16 %v2301
          %v2430 = vunpack.c.l.b16 %v2302
          %v2431 = vunpack.c.l.b16 %v2303
          %v2432 = vunpack.c.l.b16 %v2304
          %v2433 = vunpack.c.l.b16 %v2305
          %v2434 = vunpack.c.l.b16 %v2306
          %v2435 = vunpack.c.l.b16 %v2307
          %v2436 = vunpack.c.l.b16 %v2308
          %v2437 = vunpack.c.l.b16 %v2309
          %v2438 = vunpack.c.l.b16 %v2310
          %v2439 = vunpack.c.l.b16 %v2311
          %v2440 = vunpack.c.l.b16 %v2312
          %v2441 = vunpack.c.l.b16 %v2313
          %v2442 = vunpack.c.l.b16 %v2314
          %v2443 = vunpack.c.l.b16 %v2315
          %v2444 = vunpack.c.l.b16 %v2316
          %v2445 = vpack.c.b16 %v2382, %v2381
          %v2446 = vpack.c.b16 %v2384, %v2383
          %v2447 = vpack.c.b16 %v2386, %v2385
          %v2448 = vpack.c.b16 %v2388, %v2387
          %v2449 = vpack.c.b16 %v2390, %v2389
          %v2450 = vpack.c.b16 %v2392, %v2391
          %v2451 = vpack.c.b16 %v2394, %v2393
          %v2452 = vpack.c.b16 %v2396, %v2395
          %v2453 = vpack.c.b16 %v2398, %v2397
          %v2454 = vpack.c.b16 %v2400, %v2399
          %v2455 = vpack.c.b16 %v2402, %v2401
          %v2456 = vpack.c.b16 %v2404, %v2403
          %v2457 = vpack.c.b16 %v2406, %v2405
          %v2458 = vpack.c.b16 %v2408, %v2407
          %v2459 = vpack.c.b16 %v2410, %v2409
          %v2460 = vpack.c.b16 %v2412, %v2411
          %v2461 = vpack.c.b16 %v2414, %v2413
          %v2462 = vpack.c.b16 %v2416, %v2415
          %v2463 = vpack.c.b16 %v2418, %v2417
          %v2464 = vpack.c.b16 %v2420, %v2419
          %v2465 = vpack.c.b16 %v2422, %v2421
          %v2466 = vpack.c.b16 %v2424, %v2423
          %v2467 = vpack.c.b16 %v2426, %v2425
          %v2468 = vpack.c.b16 %v2428, %v2427
          %v2469 = vpack.c.b16 %v2430, %v2429
          %v2470 = vpack.c.b16 %v2432, %v2431
          %v2471 = vpack.c.b16 %v2434, %v2433
          %v2472 = vpack.c.b16 %v2436, %v2435
          %v2473 = vpack.c.b16 %v2438, %v2437
          %v2474 = vpack.c.b16 %v2440, %v2439
          %v2475 = vpack.c.b16 %v2442, %v2441
          %v2476 = vpack.c.b16 %v2444, %v2443
          %2509 = vmatprep.subr.bf16.mxu0 0
          %2510 = vmatpush1.bf16.msra.mxu0 %v2445
          %2511 = vmatprep.subr.bf16.mxu0 0
          %2512 = vmatpush1.bf16.msra.mxu0 %v2446
          %2513 = vmatprep.subr.bf16.mxu0 0
          %2514 = vmatpush1.bf16.msra.mxu0 %v2447
          %2515 = vmatprep.subr.bf16.mxu0 0
          %2516 = vmatpush1.bf16.msra.mxu0 %v2448
          %2517 = vmatprep.subr.bf16.mxu0 0
          %2518 = vmatpush1.bf16.msra.mxu0 %v2449
          %2519 = vmatprep.subr.bf16.mxu0 0
          %2520 = vmatpush1.bf16.msra.mxu0 %v2450
          %2521 = vmatprep.subr.bf16.mxu0 0
          %2522 = vmatpush1.bf16.msra.mxu0 %v2451
          %2523 = vmatprep.subr.bf16.mxu0 0
          %2524 = vmatpush1.bf16.msra.mxu0 %v2452
          %2525 = vmatprep.subr.bf16.mxu0 0
          %2526 = vmatpush1.bf16.msra.mxu0 %v2453
          %2527 = vmatprep.subr.bf16.mxu0 0
          %2528 = vmatpush1.bf16.msra.mxu0 %v2454
          %2529 = vmatprep.subr.bf16.mxu0 0
          %2530 = vmatpush1.bf16.msra.mxu0 %v2455
          %2531 = vmatprep.subr.bf16.mxu0 0
          %2532 = vmatpush1.bf16.msra.mxu0 %v2456
          %2533 = vmatprep.subr.bf16.mxu0 0
          %2534 = vmatpush1.bf16.msra.mxu0 %v2457
          %2535 = vmatprep.subr.bf16.mxu0 0
          %2536 = vmatpush1.bf16.msra.mxu0 %v2458
          %2537 = vmatprep.subr.bf16.mxu0 0
          %2538 = vmatpush1.bf16.msra.mxu0 %v2459
          %2539 = vmatprep.subr.bf16.mxu0 0
          %2540 = vmatpush1.bf16.msra.mxu0 %v2460
          %2541 = vmatprep.mubr.bf16.mxu0 %v2246
          %2542 = vmatmul.mubr.bf16.gmra.mrb[0].mxu0 %v2245
          %v2543 = vpop.f32.mrb[0].mxu0
          %v2544 = vadd.f32 0.0, %v2543
          %v2545 = vpop.f32.mrb[0].mxu0
          %v2546 = vpop.f32.mrb[0].mxu0
          %v2547 = vadd.f32 0.0, %v2546
          %v2548 = vpop.f32.mrb[0].mxu0
          %2549 = vdwg.mxu0
          %2550 = vmatprep.subr.bf16.mxu0 0
          %2551 = vmatpush1.bf16.msra.mxu0 %v2461
          %2552 = vmatprep.subr.bf16.mxu0 0
          %2553 = vmatpush1.bf16.msra.mxu0 %v2462
          %2554 = vmatprep.subr.bf16.mxu0 0
          %2555 = vmatpush1.bf16.msra.mxu0 %v2463
          %2556 = vmatprep.subr.bf16.mxu0 0
          %2557 = vmatpush1.bf16.msra.mxu0 %v2464
          %2558 = vmatprep.subr.bf16.mxu0 0
          %2559 = vmatpush1.bf16.msra.mxu0 %v2465
          %2560 = vmatprep.subr.bf16.mxu0 0
          %2561 = vmatpush1.bf16.msra.mxu0 %v2466
          %2562 = vmatprep.subr.bf16.mxu0 0
          %2563 = vmatpush1.bf16.msra.mxu0 %v2467
          %2564 = vmatprep.subr.bf16.mxu0 0
          %2565 = vmatpush1.bf16.msra.mxu0 %v2468
          %2566 = vmatprep.subr.bf16.mxu0 0
          %2567 = vmatpush1.bf16.msra.mxu0 %v2469
          %2568 = vmatprep.subr.bf16.mxu0 0
          %2569 = vmatpush1.bf16.msra.mxu0 %v2470
          %2570 = vmatprep.subr.bf16.mxu0 0
          %2571 = vmatpush1.bf16.msra.mxu0 %v2471
          %2572 = vmatprep.subr.bf16.mxu0 0
          %2573 = vmatpush1.bf16.msra.mxu0 %v2472
          %2574 = vmatprep.subr.bf16.mxu0 0
          %2575 = vmatpush1.bf16.msra.mxu0 %v2473
          %2576 = vmatprep.subr.bf16.mxu0 0
          %2577 = vmatpush1.bf16.msra.mxu0 %v2474
          %2578 = vmatprep.subr.bf16.mxu0 0
          %2579 = vmatpush1.bf16.msra.mxu0 %v2475
          %2580 = vmatprep.subr.bf16.mxu0 0
          %2581 = vmatpush1.bf16.msra.mxu0 %v2476
          %2582 = vmatprep.mubr.bf16.mxu0 %v2248
          %2583 = vmatmul.mubr.bf16.gmra.mrb[0].mxu0 %v2247
          %v2584 = vpop.f32.mrb[0].mxu0
          %v2585 = vadd.f32 %v2544, %v2584
          %v2586 = vpop.f32.mrb[0].mxu0
          %v2587 = vpop.f32.mrb[0].mxu0
          %v2588 = vadd.f32 %v2547, %v2587
          %v2589 = vpop.f32.mrb[0].mxu0
          %2590 = vdwg.mxu0
          %v2591 = vadd.f32 %v2070, %v2585
          %v2592 = vadd.f32 %v2071, %v2588
        $region109: #{tpu_custom_call.1} parent=99 // loop_footer
          %s2069 = sadd.s32 1, %s2065
        $region110: #{tpu_custom_call.1} parent=99 // loop_footer_branch
          %2064 = sbr.rel target = $region106
        $region111: #{tpu_custom_call.1} parent=99 // loop_exit
          _
        %v2593 = vld [vmem:[%s823] sm:$0x1]
        %v2595 = vlaneseq
        %v2596 = vshrl.u32 %v2595, 7
        %v2597 = vsub.s32 0, %v2596
        %v2598 = vrot.slane %v2593, %v2597
        %v2600 = vadd.f32 %v2070, %v2598
        %v2601 = vadd.f32 %v2071, %v2598
        %v2602 = vadd.f32 %v2061, %v2600
        %v2603 = vadd.f32 %v2062, %v2601
        %v2604 = vld [vmem:[%s826] sm:$0x1]
        %v2605 = vld [vmem:[%s829] sm:$0x1]
        %v2606 = vsel %vm983, %v2602, 0.0
        %2607 = vadd.xlane.f32.xlu0 %v2606
        %v2608 = vpop.xlane.xlu0 %2607
        %v2609 = vsel %vm983, %v2603, 0.0
        %2610 = vadd.xlane.f32.xlu0 %v2609
        %v2611 = vpop.xlane.xlu0 %2610
        %v2612 = vmul.f32 %v2608, %v2026
        %v2613 = vmul.f32 %v2611, %v2026
        %v2614 = vsub.f32 %v2602, %v2612
        %v2615 = vsub.f32 %v2603, %v2613
        %v2616 = vmul.f32 %v2614, %v2614
        %v2617 = vmul.f32 %v2615, %v2615
        %v2618 = vsel %vm983, %v2616, 0.0
        %2619 = vadd.xlane.f32.xlu0 %v2618
        %v2620 = vpop.xlane.xlu0 %2619
        %v2621 = vsel %vm983, %v2617, 0.0
        %2622 = vadd.xlane.f32.xlu0 %v2621
        %v2623 = vpop.xlane.xlu0 %2622
        %v2624 = vmul.f32 %v2620, %v2026
        %v2625 = vmul.f32 %v2623, %v2026
        %v2626 = vadd.f32 %v2624, 1e-05
        %v2627 = vadd.f32 %v2625, 1e-05
        %v2628 = vrsqrt.pop %v2626
        %v2629 = vrsqrt.pop %v2627
        %v2630 = vmul.f32 %v2614, %v2628
        %v2631 = vmul.f32 %v2615, %v2629
        %v2633 = vlaneseq
        %v2634 = vshrl.u32 %v2633, 7
        %v2635 = vsub.s32 0, %v2634
        %v2636 = vrot.slane %v2604, %v2635
        %v2638 = vmul.f32 %v2630, %v2636
        %v2639 = vmul.f32 %v2631, %v2636
        %v2641 = vlaneseq
        %v2642 = vshrl.u32 %v2641, 7
        %v2643 = vsub.s32 0, %v2642
        %v2644 = vrot.slane %v2605, %v2643
        %v2646 = vadd.f32 %v2638, %v2644
        %v2647 = vadd.f32 %v2639, %v2644
        %2648 = vst.msk [vmem:[#allocation2] sm:$0xff] %vm983, %v2646
        %2649 = vst.msk [vmem:[#allocation2 + $0x8] sm:$0xff] %vm983, %v2647
        %p2650 = scmp.eq.s32.totalorder %s37, 1
        // Predicated region
        $region112: #{tpu_custom_call.1} parent=99 // pred_check
          %p2651 = pneg %p2650
        $region113: #{tpu_custom_call.1} parent=99 // pred_check_branch
          %2653 = sbr.rel (%p2651) target = $region115
        $region114: #{tpu_custom_call.1} parent=99 // pred_region
          %v2654 = vld [vmem:[%s16] sm:$0x1]
          %v2655 = vld [vmem:[%s17] sm:$0x1]
          %v2656 = vsel %vm983, %v2646, 0.0
          %2657 = vadd.xlane.f32.xlu0 %v2656
          %v2658 = vpop.xlane.xlu0 %2657
          %v2659 = vsel %vm983, %v2647, 0.0
          %2660 = vadd.xlane.f32.xlu0 %v2659
          %v2661 = vpop.xlane.xlu0 %2660
          %v2662 = vmul.f32 %v2658, %v2026
          %v2663 = vmul.f32 %v2661, %v2026
          %v2664 = vsub.f32 %v2646, %v2662
          %v2665 = vsub.f32 %v2647, %v2663
          %v2666 = vmul.f32 %v2664, %v2664
          %v2667 = vmul.f32 %v2665, %v2665
          %v2668 = vsel %vm983, %v2666, 0.0
          %2669 = vadd.xlane.f32.xlu0 %v2668
          %v2670 = vpop.xlane.xlu0 %2669
          %v2671 = vsel %vm983, %v2667, 0.0
          %2672 = vadd.xlane.f32.xlu0 %v2671
          %v2673 = vpop.xlane.xlu0 %2672
          %v2674 = vmul.f32 %v2670, %v2026
          %v2675 = vmul.f32 %v2673, %v2026
          %v2676 = vadd.f32 %v2674, 1e-05
          %v2677 = vadd.f32 %v2675, 1e-05
          %v2678 = vrsqrt.pop %v2676
          %v2679 = vrsqrt.pop %v2677
          %v2680 = vmul.f32 %v2664, %v2678
          %v2681 = vmul.f32 %v2665, %v2679
          %v2683 = vlaneseq
          %v2684 = vshrl.u32 %v2683, 7
          %v2685 = vsub.s32 0, %v2684
          %v2686 = vrot.slane %v2654, %v2685
          %v2688 = vmul.f32 %v2680, %v2686
          %v2689 = vmul.f32 %v2681, %v2686
          %v2691 = vlaneseq
          %v2692 = vshrl.u32 %v2691, 7
          %v2693 = vsub.s32 0, %v2692
          %v2694 = vrot.slane %v2655, %v2693
          %v2696 = vadd.f32 %v2688, %v2694
          %v2697 = vadd.f32 %v2689, %v2694
          %v2698 = vpack.c.bf16 %v2697, %v2696
          %v2699 = vld [vmem:[%s18] sm:$0xf]
          %v2700 = vld [vmem:[%s18 + $0x4] sm:$0xf]
          %v2701 = vld [vmem:[%s18 + $0x8] sm:$0xf]
          %v2702 = vld [vmem:[%s18 + $0xc] sm:$0xf]
          %v2703 = vld [vmem:[%s19] sm:$0x1]
          %v2705 = vlaneseq
          %v2706 = vshrl.u32 %v2705, 7
          %v2707 = vsub.s32 0, %v2706
          %v2708 = vrot.slane %v2703, %v2707
          %v2714 = vunpack.c.l.b16 %v2699
          %v2715 = vunpack.c.l.b16 %v2700
          %v2716 = vunpack.c.l.b16 %v2701
          %v2717 = vunpack.c.l.b16 %v2702
          %v2718 = vpack.c.b16 %v2715, %v2714
          %v2719 = vpack.c.b16 %v2717, %v2716
          %v2723 = vsel %vm983, %v2698, 0
          %2725 = vmatprep.subr.bf16.mxu0 0
          %2726 = vmatpush1.bf16.msra.mxu0 %v2718
          %2727 = vmatprep.subr.bf16.mxu0 0
          %2728 = vmatpush1.bf16.msra.mxu0 %v2719
          %2729 = vmatprep.subr.bf16.mxu0 0
          %2730 = vmatpush1.bf16.msra.mxu0 0
          %2731 = vmatprep.subr.bf16.mxu0 0
          %2732 = vmatpush1.bf16.msra.mxu0 0
          %2733 = vmatprep.subr.bf16.mxu0 0
          %2734 = vmatpush1.bf16.msra.mxu0 0
          %2735 = vmatprep.subr.bf16.mxu0 0
          %2736 = vmatpush1.bf16.msra.mxu0 0
          %2737 = vmatprep.subr.bf16.mxu0 0
          %2738 = vmatpush1.bf16.msra.mxu0 0
          %2739 = vmatprep.subr.bf16.mxu0 0
          %2740 = vmatpush1.bf16.msra.mxu0 0
          %2741 = vmatprep.subr.bf16.mxu0 0
          %2742 = vmatpush1.bf16.msra.mxu0 0
          %2743 = vmatprep.subr.bf16.mxu0 0
          %2744 = vmatpush1.bf16.msra.mxu0 0
          %2745 = vmatprep.subr.bf16.mxu0 0
          %2746 = vmatpush1.bf16.msra.mxu0 0
          %2747 = vmatprep.subr.bf16.mxu0 0
          %2748 = vmatpush1.bf16.msra.mxu0 0
          %2749 = vmatprep.subr.bf16.mxu0 0
          %2750 = vmatpush1.bf16.msra.mxu0 0
          %2751 = vmatprep.subr.bf16.mxu0 0
          %2752 = vmatpush1.bf16.msra.mxu0 0
          %2753 = vmatprep.subr.bf16.mxu0 0
          %2754 = vmatpush1.bf16.msra.mxu0 0
          %2755 = vmatprep.subr.bf16.mxu0 0
          %2756 = vmatpush1.bf16.msra.mxu0 0
          %2757 = vmatprep.mubr.bf16.mxu0 0
          %2758 = vmatmul.mubr.bf16.gmra.mrb[0].mxu0 %v2723
          %v2759 = vpop.f32.mrb[0].mxu0
          %v2760 = vadd.f32 %v2708, %v2759
          %v2761 = vpop.f32.mrb[0].mxu0
          %v2762 = vpop.f32.mrb[0].mxu0
          %v2763 = vadd.f32 %v2708, %v2762
          %v2764 = vpop.f32.mrb[0].mxu0
          %2765 = vdwg.mxu0
          %2766 = vst [vmem:[#allocation3] sm:$0xff] %v2760
          %2767 = vst [vmem:[#allocation3 + $0x8] sm:$0xff] %v2763
        $region115: #{tpu_custom_call.1} parent=99 // pred_fallthru
          _
        // Predicated region
        $region116: #{tpu_custom_call.1} parent=99 // pred_check
          %p2768 = pneg %p547
        $region117: #{tpu_custom_call.1} parent=99 // pred_check_branch
          %2770 = sbr.rel (%p2768) target = $region119
        $region118: #{tpu_custom_call.1} parent=99 // pred_region
          %s2771 = smul.u32 2, %s36
          %s2773 = ssub.s32 256, 256
          %2774 = vsyncadd [#allocation4], %s2773
          %s2775 = smul.addr %s2771, 128
          %s2776 = scalar_lea.hbm %s20, %s2775
          %s2777 = sshll.u32 [#allocation3], 4
          %s2778 = int_to_ptr.vmem [resolvable:$true] %s2777
          %2783 = dma.vmem_to_hbm [thread:$0]  %s2778, 256, %s2776, [#allocation4], 128, 128, 8
        $region119: #{tpu_custom_call.1} parent=99 // pred_fallthru
          _
        // Predicated region
        $region120: #{tpu_custom_call.1} parent=99 // pred_check
          %p2784 = pneg %p547
        $region121: #{tpu_custom_call.1} parent=99 // pred_check_branch
          %2786 = sbr.rel (%p2784) target = $region123
        $region122: #{tpu_custom_call.1} parent=99 // pred_region
          %2787 = dma.done [#allocation4], 256
        $region123: #{tpu_custom_call.1} parent=99 // pred_fallthru
          _
      $region100: #{tpu_custom_call.1} parent=5 // pred_fallthru
        _
      %p2788 = scmp.le.s32.totalorder 2, %s27
      // Predicated region
      $region124: #{tpu_custom_call.1} parent=5 // pred_check
        %p2789 = pneg %p2788
      $region125: #{tpu_custom_call.1} parent=5 // pred_check_branch
        %2791 = sbr.rel (%p2789) target = $region127
      $region126: #{tpu_custom_call.1} parent=5 // pred_region
        %s2792 = ssub.s32 %s27, 2
      $region127: #{tpu_custom_call.1} parent=5 // pred_fallthru
        _
    $region6: #{tpu_custom_call.1} parent=1 // loop_footer
      %s31 = sadd.s32 1, %s27
    $region7: #{tpu_custom_call.1} parent=1 // loop_footer_branch
      %26 = sbr.rel target = $region3
    $region8: #{tpu_custom_call.1} parent=1 // loop_exit
      _
    %2793 = vsyncpa [#allocation4], 1
    %s2794 = scalar_lea.sflag [#allocation4], 1
    %2795 = vsyncpa %s2794, 1

</llo_original>
